<compile_context>
chip_gen: v5e
topology: v5e:2x2
jax: 0.10.0
libtpu: 0.0.40
codegen_flags: <defaults>
</compile_context>

<pallas_src>
import functools

import jax
import jax.numpy as jnp
from jax.experimental import pallas as pl
from jax.experimental.pallas import tpu as pltpu

H = 512                       # hidden width of every branch
IN_C, IN_V, IN_T = 809, 4, 12


def _round_up(x, m):
    return (x + m - 1) // m * m


def first_layer_kernel(
    c_ref, v_ref, t_ref,
    w1c_ref, w2c_ref, w1v_ref, w2v_ref, w1t_ref, w2t_ref,
    bias_ref,
    out_ref,
):
    bf16 = jnp.bfloat16
    f32 = jnp.float32

    # Packed biases: rows 0..5 = b1c, b2c, b1v, b2v, b1t, b2t (rows 6,7 are zero pad).
    b = bias_ref[...]
    b1c, b2c = b[0:1, :], b[1:2, :]
    b1v, b2v = b[2:3, :], b[3:4, :]
    b1t, b2t = b[4:5, :], b[5:6, :]

    def branch(x_ref, w1_ref, b1, w2_ref, b2):
        # relu(relu(x @ W1 + b1) @ W2 + b2); bf16 operands, f32 MXU accumulation.
        h = jnp.dot(x_ref[...].astype(bf16), w1_ref[...],
                    preferred_element_type=f32) + b1
        h = jnp.maximum(h, 0.0)
        o = jnp.dot(h.astype(bf16), w2_ref[...],
                    preferred_element_type=f32) + b2
        return jnp.maximum(o, 0.0).astype(out_ref.dtype)

    # Branch c -> columns [0, 512)
    out_ref[:, 0:H] = branch(c_ref, w1c_ref, b1c, w2c_ref, b2c)
    # Branch v -> columns [512, 1024)
    out_ref[:, H:2 * H] = branch(v_ref, w1v_ref, b1v, w2v_ref, b2v)
    # Branch t -> columns [1024, 1536)
    out_ref[:, 2 * H:3 * H] = branch(t_ref, w1t_ref, b1t, w2t_ref, b2t)


def prepare_params(params):
    """One-time conversion: bf16 weights (natural shapes), biases packed into (8, 512) f32."""
    bias = jnp.zeros((8, H), jnp.float32)
    bias = bias.at[0].set(params["b1c"].reshape(H).astype(jnp.float32))
    bias = bias.at[1].set(params["b2c"].reshape(H).astype(jnp.float32))
    bias = bias.at[2].set(params["b1v"].reshape(H).astype(jnp.float32))
    bias = bias.at[3].set(params["b2v"].reshape(H).astype(jnp.float32))
    bias = bias.at[4].set(params["b1t"].reshape(H).astype(jnp.float32))
    bias = bias.at[5].set(params["b2t"].reshape(H).astype(jnp.float32))
    return {
        "w1c": params["w1c"].astype(jnp.bfloat16),
        "w2c": params["w2c"].astype(jnp.bfloat16),
        "w1v": params["w1v"].astype(jnp.bfloat16),
        "w2v": params["w2v"].astype(jnp.bfloat16),
        "w1t": params["w1t"].astype(jnp.bfloat16),
        "w2t": params["w2t"].astype(jnp.bfloat16),
        "bias": bias,
    }


@functools.partial(jax.jit, static_argnames=("block_m", "out_dtype"))
def first_layer(c, v, t, prep, *, block_m=512, out_dtype=jnp.float32):
    B = c.shape[0]
    # Batch tile: big to amortize per-step overhead; shrunk (to a multiple of 16, for
    # bf16 sublane packing of the in-kernel cast) for tiny batches.
    BM = min(block_m, _round_up(B, 16))
    n_blocks = pl.cdiv(B, BM)

    row_map = lambda i: (i, 0)      # batch-tiled operands
    const_map = lambda i: (0, 0)    # weights/biases: same block every step -> resident

    in_specs = [
        pl.BlockSpec((BM, IN_C), row_map),
        pl.BlockSpec((BM, IN_V), row_map),
        pl.BlockSpec((BM, IN_T), row_map),
        pl.BlockSpec((IN_C, H), const_map),   # w1c
        pl.BlockSpec((H, H), const_map),      # w2c
        pl.BlockSpec((IN_V, H), const_map),   # w1v
        pl.BlockSpec((H, H), const_map),      # w2v
        pl.BlockSpec((IN_T, H), const_map),   # w1t
        pl.BlockSpec((H, H), const_map),      # w2t
        pl.BlockSpec((8, H), const_map),      # packed biases
    ]
    out_spec = pl.BlockSpec((BM, 3 * H), row_map)

    weight_elems = (IN_C + IN_V + IN_T) * H + 3 * H * H
    flops = 2 * B * weight_elems
    bytes_accessed = (
        2 * weight_elems                                   # bf16 weights
        + 4 * 8 * H                                        # packed f32 biases
        + 4 * B * (IN_C + IN_V + IN_T)                     # f32 activations in
        + jnp.dtype(out_dtype).itemsize * B * 3 * H        # output
    )
    cost = pl.CostEstimate(flops=flops, transcendentals=0,
                           bytes_accessed=bytes_accessed)

    return pl.pallas_call(
        first_layer_kernel,
        out_shape=jax.ShapeDtypeStruct((B, 3 * H), out_dtype),
        grid=(n_blocks,),
        in_specs=in_specs,
        out_specs=out_spec,
        compiler_params=pltpu.CompilerParams(
            dimension_semantics=("parallel",),
            vmem_limit_bytes=48 << 20,
        ),
        cost_estimate=cost,
    )(
        c, v, t,
        prep["w1c"], prep["w2c"], prep["w1v"], prep["w2v"],
        prep["w1t"], prep["w2t"], prep["bias"],
    )


def init_params(key):
    """Deterministic init mirroring nn.Linear default (uniform +/- 1/sqrt(fan_in)).

    Weights are stored transposed: (in_features, out_features), float32."""
    def linear(k, fan_in, fan_out):
        kw, kb = jax.random.split(k)
        bound = 1.0 / (fan_in ** 0.5)
        w = jax.random.uniform(kw, (fan_in, fan_out), jnp.float32, -bound, bound)
        b = jax.random.uniform(kb, (1, fan_out), jnp.float32, -bound, bound)
        return w, b

    keys = jax.random.split(key, 6)
    p = {}
    p["w1c"], p["b1c"] = linear(keys[0], IN_C, H)
    p["w2c"], p["b2c"] = linear(keys[1], H, H)
    p["w1v"], p["b1v"] = linear(keys[2], IN_V, H)
    p["w2v"], p["b2v"] = linear(keys[3], H, H)
    p["w1t"], p["b1t"] = linear(keys[4], IN_T, H)
    p["w2t"], p["b2t"] = linear(keys[5], H, H)
    return p


def reference_f32(c, v, t, params):
    """Exact float32 semantics of the PyTorch module."""
    def br(x, w1, b1, w2, b2):
        h = jnp.maximum(x @ w1 + b1, 0.0)
        return jnp.maximum(h @ w2 + b2, 0.0)
    return jnp.concatenate(
        [
            br(c, params["w1c"], params["b1c"], params["w2c"], params["b2c"]),
            br(v, params["w1v"], params["b1v"], params["w2v"], params["b2v"]),
            br(t, params["w1t"], params["b1t"], params["w2t"], params["b2t"]),
        ],
        axis=1,
    )


def reference_bf16(c, v, t, params):
    """Mirrors the kernel's numerics: bf16 operands, f32 MXU accumulation."""
    def br(x, w1, b1, w2, b2):
        xb, w1b, w2b = (a.astype(jnp.bfloat16) for a in (x, w1, w2))
        h = jnp.maximum(
            jnp.dot(xb, w1b, preferred_element_type=jnp.float32) + b1, 0.0)
        return jnp.maximum(
            jnp.dot(h.astype(jnp.bfloat16), w2b,
                    preferred_element_type=jnp.float32) + b2, 0.0)
    return jnp.concatenate(
        [
            br(c, params["w1c"], params["b1c"], params["w2c"], params["b2c"]),
            br(v, params["w1v"], params["b1v"], params["w2v"], params["b2v"]),
            br(t, params["w1t"], params["b1t"], params["w2t"], params["b2t"]),
        ],
        axis=1,
    )


if __name__ == "__main__":
    key = jax.random.PRNGKey(0)
    kp, kc, kv, kt = jax.random.split(key, 4)

    params = init_params(kp)
    prep = prepare_params(params)

    # --- Small batch: single (partial) M block, default tiling ---
    B = 8
    c = jax.random.normal(kc, (B, IN_C), jnp.float32)
    v = jax.random.normal(kv, (B, IN_V), jnp.float32)
    t = jax.random.normal(kt, (B, IN_T), jnp.float32)

    out = jax.block_until_ready(first_layer(c, v, t, prep))
    assert out.shape == (B, 3 * H), out.shape

    # Tight check vs a reference that uses the same bf16 numerics as the kernel.
    ref_bf = reference_bf16(c, v, t, params)
    assert jnp.allclose(out, ref_bf, atol=1e-3, rtol=1e-3), "mismatch vs bf16 reference"
    # Loose check vs the exact float32 PyTorch-equivalent semantics.
    ref_f32 = reference_f32(c, v, t, params)
    assert jnp.allclose(out, ref_f32, atol=5e-2, rtol=5e-2), "mismatch vs f32 reference"

    # --- Ragged multi-block path: grid > 1 with a partial last block ---
    B2 = 37
    c2 = jax.random.normal(kc, (B2, IN_C), jnp.float32)
    v2 = jax.random.normal(kv, (B2, IN_V), jnp.float32)
    t2 = jax.random.normal(kt, (B2, IN_T), jnp.float32)
    out2 = jax.block_until_ready(first_layer(c2, v2, t2, prep, block_m=16))
    assert out2.shape == (B2, 3 * H), out2.shape
    assert jnp.allclose(out2, reference_bf16(c2, v2, t2, params),
                        atol=1e-3, rtol=1e-3), "ragged-batch mismatch"

    # --- Optional bf16 output (halves the dominant HBM stream on v6e/v7x) ---
    out_bf = jax.block_until_ready(
        first_layer(c, v, t, prep, out_dtype=jnp.bfloat16))
    assert out_bf.dtype == jnp.bfloat16
    assert jnp.allclose(out_bf.astype(jnp.float32), ref_bf,
                        atol=2e-2, rtol=2e-2), "bf16-output mismatch"

    print("KERNEL_OK")
</pallas_src>

<mosaic_0001>
module attributes {stable_mosaic.version = 11 : i64} {
  func.func @first_layer_kernel(%arg0: i32, %arg1: memref<16x809xf32, #tpu.memory_space<vmem>>, %arg2: memref<16x4xf32, #tpu.memory_space<vmem>>, %arg3: memref<16x12xf32, #tpu.memory_space<vmem>>, %arg4: memref<809x512xbf16, #tpu.memory_space<vmem>>, %arg5: memref<512x512xbf16, #tpu.memory_space<vmem>>, %arg6: memref<4x512xbf16, #tpu.memory_space<vmem>>, %arg7: memref<512x512xbf16, #tpu.memory_space<vmem>>, %arg8: memref<12x512xbf16, #tpu.memory_space<vmem>>, %arg9: memref<512x512xbf16, #tpu.memory_space<vmem>>, %arg10: memref<8x512xf32, #tpu.memory_space<vmem>>, %arg11: memref<16x1536xf32, #tpu.memory_space<vmem>>) attributes {dimension_semantics = [#tpu.dimension_semantics<parallel>], iteration_bounds = array<i64: 1>, scalar_prefetch = 0 : i64, scratch_operands = 0 : i64, tpu.core_type = #tpu.core_type<tc>, window_params = [{transform_indices = @transform_0, window_bounds = array<i64: 16, 809>}, {transform_indices = @transform_1, window_bounds = array<i64: 16, 4>}, {transform_indices = @transform_2, window_bounds = array<i64: 16, 12>}, {pipeline_mode = #tpu.pipeline_mode<synchronous>, transform_indices = @transform_3, window_bounds = array<i64: 809, 512>}, {pipeline_mode = #tpu.pipeline_mode<synchronous>, transform_indices = @transform_4, window_bounds = array<i64: 512, 512>}, {pipeline_mode = #tpu.pipeline_mode<synchronous>, transform_indices = @transform_5, window_bounds = array<i64: 4, 512>}, {pipeline_mode = #tpu.pipeline_mode<synchronous>, transform_indices = @transform_6, window_bounds = array<i64: 512, 512>}, {pipeline_mode = #tpu.pipeline_mode<synchronous>, transform_indices = @transform_7, window_bounds = array<i64: 12, 512>}, {pipeline_mode = #tpu.pipeline_mode<synchronous>, transform_indices = @transform_8, window_bounds = array<i64: 512, 512>}, {pipeline_mode = #tpu.pipeline_mode<synchronous>, transform_indices = @transform_9, window_bounds = array<i64: 8, 512>}, {transform_indices = @transform_10, window_bounds = array<i64: 16, 1536>}]} {
    %c0 = arith.constant 0 : index
    %c0_0 = arith.constant 0 : index
    %0 = vector.load %arg10[%c0, %c0_0] : memref<8x512xf32, #tpu.memory_space<vmem>>, vector<8x512xf32>
    %1 = vector.extract_strided_slice %0 {offsets = [0, 0], sizes = [1, 512], strides = [1, 1]} : vector<8x512xf32> to vector<1x512xf32>
    %2 = vector.extract_strided_slice %0 {offsets = [1, 0], sizes = [1, 512], strides = [1, 1]} : vector<8x512xf32> to vector<1x512xf32>
    %3 = vector.extract_strided_slice %0 {offsets = [2, 0], sizes = [1, 512], strides = [1, 1]} : vector<8x512xf32> to vector<1x512xf32>
    %4 = vector.extract_strided_slice %0 {offsets = [3, 0], sizes = [1, 512], strides = [1, 1]} : vector<8x512xf32> to vector<1x512xf32>
    %5 = vector.extract_strided_slice %0 {offsets = [4, 0], sizes = [1, 512], strides = [1, 1]} : vector<8x512xf32> to vector<1x512xf32>
    %6 = vector.extract_strided_slice %0 {offsets = [5, 0], sizes = [1, 512], strides = [1, 1]} : vector<8x512xf32> to vector<1x512xf32>
    %c0_1 = arith.constant 0 : index
    %c0_2 = arith.constant 0 : index
    %7 = vector.load %arg1[%c0_1, %c0_2] : memref<16x809xf32, #tpu.memory_space<vmem>>, vector<16x809xf32>
    %8 = arith.truncf %7 : vector<16x809xf32> to vector<16x809xbf16>
    %c0_3 = arith.constant 0 : index
    %c0_4 = arith.constant 0 : index
    %9 = vector.load %arg4[%c0_3, %c0_4] : memref<809x512xbf16, #tpu.memory_space<vmem>>, vector<809x512xbf16>
    %cst = arith.constant dense<0.000000e+00> : vector<16x512xf32>
    %10 = tpu.matmul %8, %9, %cst {dimension_numbers = #tpu.dot_dimension_numbers<[1], [0], [0], [1], [0, 0, 1, 1], [], []>} : vector<16x809xbf16>, vector<809x512xbf16>, vector<16x512xf32> -> vector<16x512xf32>
    %11 = vector.broadcast %1 : vector<1x512xf32> to vector<16x512xf32>
    %12 = arith.addf %10, %11 : vector<16x512xf32>
    %cst_5 = arith.constant 0.000000e+00 : f32
    %13 = vector.broadcast %cst_5 : f32 to vector<16x512xf32>
    %14 = arith.maximumf %12, %13 : vector<16x512xf32>
    %15 = arith.truncf %14 : vector<16x512xf32> to vector<16x512xbf16>
    %c0_6 = arith.constant 0 : index
    %c0_7 = arith.constant 0 : index
    %16 = vector.load %arg5[%c0_6, %c0_7] : memref<512x512xbf16, #tpu.memory_space<vmem>>, vector<512x512xbf16>
    %cst_8 = arith.constant dense<0.000000e+00> : vector<16x512xf32>
    %17 = tpu.matmul %15, %16, %cst_8 {dimension_numbers = #tpu.dot_dimension_numbers<[1], [0], [0], [1], [0, 0, 1, 1], [], []>} : vector<16x512xbf16>, vector<512x512xbf16>, vector<16x512xf32> -> vector<16x512xf32>
    %18 = vector.broadcast %2 : vector<1x512xf32> to vector<16x512xf32>
    %19 = arith.addf %17, %18 : vector<16x512xf32>
    %cst_9 = arith.constant 0.000000e+00 : f32
    %20 = vector.broadcast %cst_9 : f32 to vector<16x512xf32>
    %21 = arith.maximumf %19, %20 : vector<16x512xf32>
    %c0_10 = arith.constant 0 : index
    %c0_11 = arith.constant 0 : index
    %22 = vector.load %arg11[%c0_10, %c0_11] : memref<16x1536xf32, #tpu.memory_space<vmem>>, vector<16x512xf32>
    tpu.vector_store %arg11[%c0_10, %c0_11], %21 {strides = array<i32>} : memref<16x1536xf32, #tpu.memory_space<vmem>>, vector<16x512xf32>,
    %c0_12 = arith.constant 0 : index
    %c0_13 = arith.constant 0 : index
    %23 = vector.load %arg2[%c0_12, %c0_13] : memref<16x4xf32, #tpu.memory_space<vmem>>, vector<16x4xf32>
    %24 = arith.truncf %23 : vector<16x4xf32> to vector<16x4xbf16>
    %c0_14 = arith.constant 0 : index
    %c0_15 = arith.constant 0 : index
    %25 = vector.load %arg6[%c0_14, %c0_15] : memref<4x512xbf16, #tpu.memory_space<vmem>>, vector<4x512xbf16>
    %cst_16 = arith.constant dense<0.000000e+00> : vector<16x512xf32>
    %26 = tpu.matmul %24, %25, %cst_16 {dimension_numbers = #tpu.dot_dimension_numbers<[1], [0], [0], [1], [0, 0, 1, 1], [], []>} : vector<16x4xbf16>, vector<4x512xbf16>, vector<16x512xf32> -> vector<16x512xf32>
    %27 = vector.broadcast %3 : vector<1x512xf32> to vector<16x512xf32>
    %28 = arith.addf %26, %27 : vector<16x512xf32>
    %cst_17 = arith.constant 0.000000e+00 : f32
    %29 = vector.broadcast %cst_17 : f32 to vector<16x512xf32>
    %30 = arith.maximumf %28, %29 : vector<16x512xf32>
    %31 = arith.truncf %30 : vector<16x512xf32> to vector<16x512xbf16>
    %c0_18 = arith.constant 0 : index
    %c0_19 = arith.constant 0 : index
    %32 = vector.load %arg7[%c0_18, %c0_19] : memref<512x512xbf16, #tpu.memory_space<vmem>>, vector<512x512xbf16>
    %cst_20 = arith.constant dense<0.000000e+00> : vector<16x512xf32>
    %33 = tpu.matmul %31, %32, %cst_20 {dimension_numbers = #tpu.dot_dimension_numbers<[1], [0], [0], [1], [0, 0, 1, 1], [], []>} : vector<16x512xbf16>, vector<512x512xbf16>, vector<16x512xf32> -> vector<16x512xf32>
    %34 = vector.broadcast %4 : vector<1x512xf32> to vector<16x512xf32>
    %35 = arith.addf %33, %34 : vector<16x512xf32>
    %cst_21 = arith.constant 0.000000e+00 : f32
    %36 = vector.broadcast %cst_21 : f32 to vector<16x512xf32>
    %37 = arith.maximumf %35, %36 : vector<16x512xf32>
    %c0_22 = arith.constant 0 : index
    %c512 = arith.constant 512 : index
    %38 = vector.load %arg11[%c0_22, %c512] : memref<16x1536xf32, #tpu.memory_space<vmem>>, vector<16x512xf32>
    tpu.vector_store %arg11[%c0_22, %c512], %37 {strides = array<i32>} : memref<16x1536xf32, #tpu.memory_space<vmem>>, vector<16x512xf32>,
    %c0_23 = arith.constant 0 : index
    %c0_24 = arith.constant 0 : index
    %39 = vector.load %arg3[%c0_23, %c0_24] : memref<16x12xf32, #tpu.memory_space<vmem>>, vector<16x12xf32>
    %40 = arith.truncf %39 : vector<16x12xf32> to vector<16x12xbf16>
    %c0_25 = arith.constant 0 : index
    %c0_26 = arith.constant 0 : index
    %41 = vector.load %arg8[%c0_25, %c0_26] : memref<12x512xbf16, #tpu.memory_space<vmem>>, vector<12x512xbf16>
    %cst_27 = arith.constant dense<0.000000e+00> : vector<16x512xf32>
    %42 = tpu.matmul %40, %41, %cst_27 {dimension_numbers = #tpu.dot_dimension_numbers<[1], [0], [0], [1], [0, 0, 1, 1], [], []>} : vector<16x12xbf16>, vector<12x512xbf16>, vector<16x512xf32> -> vector<16x512xf32>
    %43 = vector.broadcast %5 : vector<1x512xf32> to vector<16x512xf32>
    %44 = arith.addf %42, %43 : vector<16x512xf32>
    %cst_28 = arith.constant 0.000000e+00 : f32
    %45 = vector.broadcast %cst_28 : f32 to vector<16x512xf32>
    %46 = arith.maximumf %44, %45 : vector<16x512xf32>
    %47 = arith.truncf %46 : vector<16x512xf32> to vector<16x512xbf16>
    %c0_29 = arith.constant 0 : index
    %c0_30 = arith.constant 0 : index
    %48 = vector.load %arg9[%c0_29, %c0_30] : memref<512x512xbf16, #tpu.memory_space<vmem>>, vector<512x512xbf16>
    %cst_31 = arith.constant dense<0.000000e+00> : vector<16x512xf32>
    %49 = tpu.matmul %47, %48, %cst_31 {dimension_numbers = #tpu.dot_dimension_numbers<[1], [0], [0], [1], [0, 0, 1, 1], [], []>} : vector<16x512xbf16>, vector<512x512xbf16>, vector<16x512xf32> -> vector<16x512xf32>
    %50 = vector.broadcast %6 : vector<1x512xf32> to vector<16x512xf32>
    %51 = arith.addf %49, %50 : vector<16x512xf32>
    %cst_32 = arith.constant 0.000000e+00 : f32
    %52 = vector.broadcast %cst_32 : f32 to vector<16x512xf32>
    %53 = arith.maximumf %51, %52 : vector<16x512xf32>
    %c0_33 = arith.constant 0 : index
    %c1024 = arith.constant 1024 : index
    %54 = vector.load %arg11[%c0_33, %c1024] : memref<16x1536xf32, #tpu.memory_space<vmem>>, vector<16x512xf32>
    tpu.vector_store %arg11[%c0_33, %c1024], %53 {strides = array<i32>} : memref<16x1536xf32, #tpu.memory_space<vmem>>, vector<16x512xf32>,
    return
  }
  func.func @transform_0(%arg0: i32) -> (i32, i32) {
    %c0_i32 = arith.constant 0 : i32
    %c0_i32_0 = arith.constant 0 : i32
    return %arg0, %c0_i32 : i32, i32
  }
  func.func @transform_1(%arg0: i32) -> (i32, i32) {
    %c0_i32 = arith.constant 0 : i32
    %c0_i32_0 = arith.constant 0 : i32
    return %arg0, %c0_i32 : i32, i32
  }
  func.func @transform_2(%arg0: i32) -> (i32, i32) {
    %c0_i32 = arith.constant 0 : i32
    %c0_i32_0 = arith.constant 0 : i32
    return %arg0, %c0_i32 : i32, i32
  }
  func.func @transform_3(%arg0: i32) -> (i32, i32) {
    %c0_i32 = arith.constant 0 : i32
    %c0_i32_0 = arith.constant 0 : i32
    %c0_i32_1 = arith.constant 0 : i32
    return %c0_i32, %c0_i32_0 : i32, i32
  }
  func.func @transform_4(%arg0: i32) -> (i32, i32) {
    %c0_i32 = arith.constant 0 : i32
    %c0_i32_0 = arith.constant 0 : i32
    %c0_i32_1 = arith.constant 0 : i32
    return %c0_i32, %c0_i32_0 : i32, i32
  }
  func.func @transform_5(%arg0: i32) -> (i32, i32) {
    %c0_i32 = arith.constant 0 : i32
    %c0_i32_0 = arith.constant 0 : i32
    %c0_i32_1 = arith.constant 0 : i32
    return %c0_i32, %c0_i32_0 : i32, i32
  }
  func.func @transform_6(%arg0: i32) -> (i32, i32) {
    %c0_i32 = arith.constant 0 : i32
    %c0_i32_0 = arith.constant 0 : i32
    %c0_i32_1 = arith.constant 0 : i32
    return %c0_i32, %c0_i32_0 : i32, i32
  }
  func.func @transform_7(%arg0: i32) -> (i32, i32) {
    %c0_i32 = arith.constant 0 : i32
    %c0_i32_0 = arith.constant 0 : i32
    %c0_i32_1 = arith.constant 0 : i32
    return %c0_i32, %c0_i32_0 : i32, i32
  }
  func.func @transform_8(%arg0: i32) -> (i32, i32) {
    %c0_i32 = arith.constant 0 : i32
    %c0_i32_0 = arith.constant 0 : i32
    %c0_i32_1 = arith.constant 0 : i32
    return %c0_i32, %c0_i32_0 : i32, i32
  }
  func.func @transform_9(%arg0: i32) -> (i32, i32) {
    %c0_i32 = arith.constant 0 : i32
    %c0_i32_0 = arith.constant 0 : i32
    %c0_i32_1 = arith.constant 0 : i32
    return %c0_i32, %c0_i32_0 : i32, i32
  }
  func.func @transform_10(%arg0: i32) -> (i32, i32) {
    %c0_i32 = arith.constant 0 : i32
    %c0_i32_0 = arith.constant 0 : i32
    return %arg0, %c0_i32 : i32, i32
  }
}

</mosaic_0001>

<llo_original>
// kernel: first_layer.1
$region0: #{first_layer.1}
  #allocation0 [shape = 'u32[]', space=smem, size = 0x4, offset = 0x4, fixed_abs, tag = 'smem constant byte address 0x4 - core index']
  #allocation1 [shape = 'u32[72,128]{1,0:T(1,128)}', space=vmem, size = 0x9000, scoped, tag = 'internal scratch']
  %s0 = inlined_call_operand.hbm [shape: f32[8,809], index: 0, kind: input, shape index: {}]
  %s1 = inlined_call_operand.vmem [shape: f32[8,4], index: 1, kind: input, shape index: {}]
  %s2 = inlined_call_operand.vmem [shape: f32[8,12], index: 2, kind: input, shape index: {}]
  %s3 = inlined_call_operand.hbm [shape: bf16[809,512], index: 3, kind: input, shape index: {}]
  %s4 = inlined_call_operand.hbm [shape: bf16[512,512], index: 4, kind: input, shape index: {}]
  %s5 = inlined_call_operand.vmem [shape: bf16[4,512], index: 5, kind: input, shape index: {}]
  %s6 = inlined_call_operand.hbm [shape: bf16[512,512], index: 6, kind: input, shape index: {}]
  %s7 = inlined_call_operand.hbm [shape: bf16[12,512], index: 7, kind: input, shape index: {}]
  %s8 = inlined_call_operand.hbm [shape: bf16[512,512], index: 8, kind: input, shape index: {}]
  %s9 = inlined_call_operand.hbm [shape: f32[8,512], index: 9, kind: input, shape index: {}]
  %s10 = inlined_call_operand.hbm [shape: f32[8,1536], index: 10, kind: output, shape index: {}]
  %s11 = sld [smem:[#allocation0]]
  $region78: #{first_layer.1} parent=0
    _
  %s13 = ssub.s32 1, %s11
  %s14 = scalar_select 0, %s13, %s11
  $region1: #{first_layer.1} parent=0
    #allocation2 [shape = 'u8[57344]{0}', space=vmem, size = 0xe000, scoped, tag = 'input window, operand 0, single buffered']
    #allocation3 [shape = 's32[1]{0}', space=sflag, size = 0x4, scoped, tag = 'scoped memory for first_layer.1']
    #allocation4 [shape = 's32[1]{0}', space=sflag, size = 0x4, scoped, tag = 'scoped memory for first_layer.1']
    #allocation5 [shape = 'u8[835584]{0}', space=vmem, size = 0xcc000, scoped, tag = 'input window, operand 3, single buffered']
    #allocation6 [shape = 's32[1]{0}', space=sflag, size = 0x4, scoped, tag = 'scoped memory for first_layer.1']
    #allocation7 [shape = 'u8[524288]{0}', space=vmem, size = 0x80000, scoped, tag = 'input window, operand 4, single buffered']
    #allocation8 [shape = 'u8[524288]{0}', space=vmem, size = 0x80000, scoped, tag = 'input window, operand 6, single buffered']
    #allocation9 [shape = 's32[1]{0}', space=sflag, size = 0x4, scoped, tag = 'scoped memory for first_layer.1']
    #allocation10 [shape = 'u8[16384]{0}', space=vmem, size = 0x4000, scoped, tag = 'input window, operand 7, single buffered']
    #allocation11 [shape = 'u8[524288]{0}', space=vmem, size = 0x80000, scoped, tag = 'input window, operand 8, single buffered']
    #allocation12 [shape = 's32[1]{0}', space=sflag, size = 0x4, scoped, tag = 'scoped memory for first_layer.1']
    #allocation13 [shape = 'u8[16384]{0}', space=vmem, size = 0x4000, scoped, tag = 'input window, operand 9, single buffered']
    #allocation14 [shape = 'u8[98304]{0}', space=vmem, size = 0x18000, scoped, tag = 'output window, operand 0, single buffered']
    %15 = vsyncpa [#allocation3], 0
    %16 = vsyncpa [#allocation6], 0
    %17 = vsyncpa [#allocation9], 0
    %18 = vsyncpa [#allocation12], 0
    %19 = vsyncpa [#allocation4], 0
    // Predicated region
    $region2: #{first_layer.1} parent=1 // pred_check
      _
    $region3: #{first_layer.1} parent=1 // pred_check_branch
      %21 = sbr.rel (0) target = $region5
    $region4: #{first_layer.1} parent=1 // pred_region
      %23 = vsyncadd [#allocation3], 896
      %s24 = sshll.u32 %s0, 4
      %s25 = int_to_ptr.hbm [resolvable:$true] %s24
      %s26 = sshll.u32 [#allocation2], 4
      %s27 = int_to_ptr.vmem [resolvable:$true] %s26
      %32 = dma.hbm_to_vmem [thread:$0]  %s25, 896, %s27, [#allocation3], 896, 896, 56
    $region5: #{first_layer.1} parent=1 // pred_fallthru
      _
    // Predicated region
    $region6: #{first_layer.1} parent=1 // pred_check
      _
    $region7: #{first_layer.1} parent=1 // pred_check_branch
      %34 = sbr.rel (0) target = $region9
    $region8: #{first_layer.1} parent=1 // pred_region
      _
    $region9: #{first_layer.1} parent=1 // pred_fallthru
      _
    // Predicated region
    $region10: #{first_layer.1} parent=1 // pred_check
      _
    $region11: #{first_layer.1} parent=1 // pred_check_branch
      %36 = sbr.rel (0) target = $region13
    $region12: #{first_layer.1} parent=1 // pred_region
      _
    $region13: #{first_layer.1} parent=1 // pred_fallthru
      _
    // Predicated region
    $region14: #{first_layer.1} parent=1 // pred_check
      _
    $region15: #{first_layer.1} parent=1 // pred_check_branch
      %38 = sbr.rel (0) target = $region17
    $region16: #{first_layer.1} parent=1 // pred_region
      %40 = vsyncadd [#allocation6], 0
      %s41 = sshll.u32 %s3, 4
      %s42 = int_to_ptr.hbm [resolvable:$true] %s41
      %s43 = sshll.u32 [#allocation5], 4
      %s44 = int_to_ptr.vmem [resolvable:$true] %s43
      %49 = dma.hbm_to_vmem [thread:$0]  %s42, 26112, %s44, [#allocation6], 256, 256, 16
    $region17: #{first_layer.1} parent=1 // pred_fallthru
      _
    // Predicated region
    $region18: #{first_layer.1} parent=1 // pred_check
      _
    $region19: #{first_layer.1} parent=1 // pred_check_branch
      %51 = sbr.rel (0) target = $region21
    $region20: #{first_layer.1} parent=1 // pred_region
      %53 = vsyncadd [#allocation6], 0
      %s54 = sshll.u32 %s4, 4
      %s55 = int_to_ptr.hbm [resolvable:$true] %s54
      %s56 = sshll.u32 [#allocation7], 4
      %s57 = int_to_ptr.vmem [resolvable:$true] %s56
      %62 = dma.hbm_to_vmem [thread:$0]  %s55, 16384, %s57, [#allocation6], 256, 256, 16
    $region21: #{first_layer.1} parent=1 // pred_fallthru
      _
    // Predicated region
    $region22: #{first_layer.1} parent=1 // pred_check
      _
    $region23: #{first_layer.1} parent=1 // pred_check_branch
      %64 = sbr.rel (0) target = $region25
    $region24: #{first_layer.1} parent=1 // pred_region
      _
    $region25: #{first_layer.1} parent=1 // pred_fallthru
      _
    // Predicated region
    $region26: #{first_layer.1} parent=1 // pred_check
      _
    $region27: #{first_layer.1} parent=1 // pred_check_branch
      %66 = sbr.rel (0) target = $region29
    $region28: #{first_layer.1} parent=1 // pred_region
      %68 = vsyncadd [#allocation9], 0
      %s69 = sshll.u32 %s6, 4
      %s70 = int_to_ptr.hbm [resolvable:$true] %s69
      %s71 = sshll.u32 [#allocation8], 4
      %s72 = int_to_ptr.vmem [resolvable:$true] %s71
      %77 = dma.hbm_to_vmem [thread:$0]  %s70, 16384, %s72, [#allocation9], 256, 256, 16
    $region29: #{first_layer.1} parent=1 // pred_fallthru
      _
    // Predicated region
    $region30: #{first_layer.1} parent=1 // pred_check
      _
    $region31: #{first_layer.1} parent=1 // pred_check_branch
      %79 = sbr.rel (0) target = $region33
    $region32: #{first_layer.1} parent=1 // pred_region
      %81 = vsyncadd [#allocation9], 0
      %s82 = sshll.u32 %s7, 4
      %s83 = int_to_ptr.hbm [resolvable:$true] %s82
      %s84 = sshll.u32 [#allocation10], 4
      %s85 = int_to_ptr.vmem [resolvable:$true] %s84
      %90 = dma.hbm_to_vmem [thread:$0]  %s83, 512, %s85, [#allocation9], 256, 256, 16
    $region33: #{first_layer.1} parent=1 // pred_fallthru
      _
    // Predicated region
    $region34: #{first_layer.1} parent=1 // pred_check
      _
    $region35: #{first_layer.1} parent=1 // pred_check_branch
      %92 = sbr.rel (0) target = $region37
    $region36: #{first_layer.1} parent=1 // pred_region
      %94 = vsyncadd [#allocation12], 0
      %s95 = sshll.u32 %s8, 4
      %s96 = int_to_ptr.hbm [resolvable:$true] %s95
      %s97 = sshll.u32 [#allocation11], 4
      %s98 = int_to_ptr.vmem [resolvable:$true] %s97
      %103 = dma.hbm_to_vmem [thread:$0]  %s96, 16384, %s98, [#allocation12], 256, 256, 16
    $region37: #{first_layer.1} parent=1 // pred_fallthru
      _
    // Predicated region
    $region38: #{first_layer.1} parent=1 // pred_check
      _
    $region39: #{first_layer.1} parent=1 // pred_check_branch
      %105 = sbr.rel (0) target = $region41
    $region40: #{first_layer.1} parent=1 // pred_region
      %107 = vsyncadd [#allocation12], 0
      %s109 = sshll.u32 %s9, 4
      %s110 = int_to_ptr.hbm [resolvable:$true] %s109
      %s111 = sshll.u32 [#allocation13], 4
      %s112 = int_to_ptr.vmem [resolvable:$true] %s111
      %114 = dma.hbm_to_vmem [thread:$0]  %s110, 512, %s112, [#allocation12]
    $region41: #{first_layer.1} parent=1 // pred_fallthru
      _
    // Predicated region
    $region42: #{first_layer.1} parent=1 // pred_check
      _
    $region43: #{first_layer.1} parent=1 // pred_check_branch
      %116 = sbr.rel (0) target = $region45
    $region44: #{first_layer.1} parent=1 // pred_region
      %118 = dma.done [#allocation3], 1792
    $region45: #{first_layer.1} parent=1 // pred_fallthru
      _
    // Predicated region
    $region46: #{first_layer.1} parent=1 // pred_check
      _
    $region47: #{first_layer.1} parent=1 // pred_check_branch
      %120 = sbr.rel (0) target = $region49
    $region48: #{first_layer.1} parent=1 // pred_region
      %122 = dma.done [#allocation6], 26112
    $region49: #{first_layer.1} parent=1 // pred_fallthru
      _
    // Predicated region
    $region50: #{first_layer.1} parent=1 // pred_check
      _
    $region51: #{first_layer.1} parent=1 // pred_check_branch
      %124 = sbr.rel (0) target = $region53
    $region52: #{first_layer.1} parent=1 // pred_region
      %126 = dma.done [#allocation6], 16384
    $region53: #{first_layer.1} parent=1 // pred_fallthru
      _
    // Predicated region
    $region54: #{first_layer.1} parent=1 // pred_check
      _
    $region55: #{first_layer.1} parent=1 // pred_check_branch
      %128 = sbr.rel (0) target = $region57
    $region56: #{first_layer.1} parent=1 // pred_region
      %130 = dma.done [#allocation9], 16384
    $region57: #{first_layer.1} parent=1 // pred_fallthru
      _
    // Predicated region
    $region58: #{first_layer.1} parent=1 // pred_check
      _
    $region59: #{first_layer.1} parent=1 // pred_check_branch
      %132 = sbr.rel (0) target = $region61
    $region60: #{first_layer.1} parent=1 // pred_region
      %134 = dma.done [#allocation9], 512
    $region61: #{first_layer.1} parent=1 // pred_fallthru
      _
    // Predicated region
    $region62: #{first_layer.1} parent=1 // pred_check
      _
    $region63: #{first_layer.1} parent=1 // pred_check_branch
      %136 = sbr.rel (0) target = $region65
    $region64: #{first_layer.1} parent=1 // pred_region
      %138 = dma.done [#allocation12], 16384
    $region65: #{first_layer.1} parent=1 // pred_fallthru
      _
    // Predicated region
    $region66: #{first_layer.1} parent=1 // pred_check
      _
    $region67: #{first_layer.1} parent=1 // pred_check_branch
      %140 = sbr.rel (0) target = $region69
    $region68: #{first_layer.1} parent=1 // pred_region
      %142 = dma.done [#allocation12], 512
    $region69: #{first_layer.1} parent=1 // pred_fallthru
      _
    %v144 = vld [vmem:[#allocation13] sm:$0xff]
    %v145 = vld [vmem:[#allocation13 + $0x8] sm:$0xff]
    %v146 = vld [vmem:[#allocation13 + $0x10] sm:$0xff]
    %v147 = vld [vmem:[#allocation13 + $0x18] sm:$0xff]
    %v148 = vld [vmem:[#allocation2] sm:$0xff]
    %v149 = vld [vmem:[#allocation2 + $0x8] sm:$0xff]
    %v150 = vld [vmem:[#allocation2 + $0x10] sm:$0xff]
    %v151 = vld [vmem:[#allocation2 + $0x18] sm:$0xff]
    %v152 = vld [vmem:[#allocation2 + $0x20] sm:$0xff]
    %v153 = vld [vmem:[#allocation2 + $0x28] sm:$0xff]
    %v154 = vld [vmem:[#allocation2 + $0x30] sm:$0xff]
    %v155 = vld [vmem:[#allocation2 + $0x38] sm:$0xff]
    %v156 = vld [vmem:[#allocation2 + $0x40] sm:$0xff]
    %v157 = vld [vmem:[#allocation2 + $0x48] sm:$0xff]
    %v158 = vld [vmem:[#allocation2 + $0x50] sm:$0xff]
    %v159 = vld [vmem:[#allocation2 + $0x58] sm:$0xff]
    %v160 = vld [vmem:[#allocation2 + $0x60] sm:$0xff]
    %v161 = vld [vmem:[#allocation2 + $0x68] sm:$0xff]
    %v162 = vpack.c.bf16 %v155, %v148
    %v163 = vpack.c.bf16 %v156, %v149
    %v164 = vpack.c.bf16 %v157, %v150
    %v165 = vpack.c.bf16 %v158, %v151
    %v166 = vpack.c.bf16 %v159, %v152
    %v167 = vpack.c.bf16 %v160, %v153
    %v168 = vpack.c.bf16 %v161, %v154
    %v169 = vld [vmem:[#allocation5] sm:$0xff]
    %v170 = vld [vmem:[#allocation5 + $0x8] sm:$0xff]
    %v171 = vld [vmem:[#allocation5 + $0x10] sm:$0xff]
    %v172 = vld [vmem:[#allocation5 + $0x18] sm:$0xff]
    %v173 = vld [vmem:[#allocation5 + $0x20] sm:$0xff]
    %v174 = vld [vmem:[#allocation5 + $0x28] sm:$0xff]
    %v175 = vld [vmem:[#allocation5 + $0x30] sm:$0xff]
    %v176 = vld [vmem:[#allocation5 + $0x38] sm:$0xff]
    %v177 = vld [vmem:[#allocation5 + $0x40] sm:$0xff]
    %v178 = vld [vmem:[#allocation5 + $0x48] sm:$0xff]
    %v179 = vld [vmem:[#allocation5 + $0x50] sm:$0xff]
    %v180 = vld [vmem:[#allocation5 + $0x58] sm:$0xff]
    %v181 = vld [vmem:[#allocation5 + $0x60] sm:$0xff]
    %v182 = vld [vmem:[#allocation5 + $0x68] sm:$0xff]
    %v183 = vld [vmem:[#allocation5 + $0x70] sm:$0xff]
    %v184 = vld [vmem:[#allocation5 + $0x78] sm:$0xff]
    %v185 = vld [vmem:[#allocation5 + $0x80] sm:$0xff]
    %v186 = vld [vmem:[#allocation5 + $0x88] sm:$0xff]
    %v187 = vld [vmem:[#allocation5 + $0x90] sm:$0xff]
    %v188 = vld [vmem:[#allocation5 + $0x98] sm:$0xff]
    %v189 = vld [vmem:[#allocation5 + $0xa0] sm:$0xff]
    %v190 = vld [vmem:[#allocation5 + $0xa8] sm:$0xff]
    %v191 = vld [vmem:[#allocation5 + $0xb0] sm:$0xff]
    %v192 = vld [vmem:[#allocation5 + $0xb8] sm:$0xff]
    %v193 = vld [vmem:[#allocation5 + $0xc0] sm:$0xff]
    %v194 = vld [vmem:[#allocation5 + $0xc8] sm:$0xff]
    %v195 = vld [vmem:[#allocation5 + $0xd0] sm:$0xff]
    %v196 = vld [vmem:[#allocation5 + $0xd8] sm:$0xff]
    %v197 = vld [vmem:[#allocation5 + $0xe0] sm:$0xff]
    %v198 = vld [vmem:[#allocation5 + $0xe8] sm:$0xff]
    %v199 = vld [vmem:[#allocation5 + $0xf0] sm:$0xff]
    %v200 = vld [vmem:[#allocation5 + $0xf8] sm:$0xff]
    %v201 = vld [vmem:[#allocation5 + $0x100] sm:$0xff]
    %v202 = vld [vmem:[#allocation5 + $0x108] sm:$0xff]
    %v203 = vld [vmem:[#allocation5 + $0x110] sm:$0xff]
    %v204 = vld [vmem:[#allocation5 + $0x118] sm:$0xff]
    %v205 = vld [vmem:[#allocation5 + $0x120] sm:$0xff]
    %v206 = vld [vmem:[#allocation5 + $0x128] sm:$0xff]
    %v207 = vld [vmem:[#allocation5 + $0x130] sm:$0xff]
    %v208 = vld [vmem:[#allocation5 + $0x138] sm:$0xff]
    %v209 = vld [vmem:[#allocation5 + $0x140] sm:$0xff]
    %v210 = vld [vmem:[#allocation5 + $0x148] sm:$0xff]
    %v211 = vld [vmem:[#allocation5 + $0x150] sm:$0xff]
    %v212 = vld [vmem:[#allocation5 + $0x158] sm:$0xff]
    %v213 = vld [vmem:[#allocation5 + $0x160] sm:$0xff]
    %v214 = vld [vmem:[#allocation5 + $0x168] sm:$0xff]
    %v215 = vld [vmem:[#allocation5 + $0x170] sm:$0xff]
    %v216 = vld [vmem:[#allocation5 + $0x178] sm:$0xff]
    %v217 = vld [vmem:[#allocation5 + $0x180] sm:$0xff]
    %v218 = vld [vmem:[#allocation5 + $0x188] sm:$0xff]
    %v219 = vld [vmem:[#allocation5 + $0x190] sm:$0xff]
    %v220 = vld [vmem:[#allocation5 + $0x198] sm:$0xff]
    %v221 = vld [vmem:[#allocation5 + $0x1a0] sm:$0xff]
    %v222 = vld [vmem:[#allocation5 + $0x1a8] sm:$0xff]
    %v223 = vld [vmem:[#allocation5 + $0x1b0] sm:$0xff]
    %v224 = vld [vmem:[#allocation5 + $0x1b8] sm:$0xff]
    %v225 = vld [vmem:[#allocation5 + $0x1c0] sm:$0xff]
    %v226 = vld [vmem:[#allocation5 + $0x1c8] sm:$0xff]
    %v227 = vld [vmem:[#allocation5 + $0x1d0] sm:$0xff]
    %v228 = vld [vmem:[#allocation5 + $0x1d8] sm:$0xff]
    %v229 = vld [vmem:[#allocation5 + $0x1e0] sm:$0xff]
    %v230 = vld [vmem:[#allocation5 + $0x1e8] sm:$0xff]
    %v231 = vld [vmem:[#allocation5 + $0x1f0] sm:$0xff]
    %v232 = vld [vmem:[#allocation5 + $0x1f8] sm:$0xff]
    %v233 = vld [vmem:[#allocation5 + $0x200] sm:$0xff]
    %v234 = vld [vmem:[#allocation5 + $0x208] sm:$0xff]
    %v235 = vld [vmem:[#allocation5 + $0x210] sm:$0xff]
    %v236 = vld [vmem:[#allocation5 + $0x218] sm:$0xff]
    %v237 = vld [vmem:[#allocation5 + $0x220] sm:$0xff]
    %v238 = vld [vmem:[#allocation5 + $0x228] sm:$0xff]
    %v239 = vld [vmem:[#allocation5 + $0x230] sm:$0xff]
    %v240 = vld [vmem:[#allocation5 + $0x238] sm:$0xff]
    %v241 = vld [vmem:[#allocation5 + $0x240] sm:$0xff]
    %v242 = vld [vmem:[#allocation5 + $0x248] sm:$0xff]
    %v243 = vld [vmem:[#allocation5 + $0x250] sm:$0xff]
    %v244 = vld [vmem:[#allocation5 + $0x258] sm:$0xff]
    %v245 = vld [vmem:[#allocation5 + $0x260] sm:$0xff]
    %v246 = vld [vmem:[#allocation5 + $0x268] sm:$0xff]
    %v247 = vld [vmem:[#allocation5 + $0x270] sm:$0xff]
    %v248 = vld [vmem:[#allocation5 + $0x278] sm:$0xff]
    %v249 = vld [vmem:[#allocation5 + $0x280] sm:$0xff]
    %v250 = vld [vmem:[#allocation5 + $0x288] sm:$0xff]
    %v251 = vld [vmem:[#allocation5 + $0x290] sm:$0xff]
    %v252 = vld [vmem:[#allocation5 + $0x298] sm:$0xff]
    %v253 = vld [vmem:[#allocation5 + $0x2a0] sm:$0xff]
    %v254 = vld [vmem:[#allocation5 + $0x2a8] sm:$0xff]
    %v255 = vld [vmem:[#allocation5 + $0x2b0] sm:$0xff]
    %v256 = vld [vmem:[#allocation5 + $0x2b8] sm:$0xff]
    %v257 = vld [vmem:[#allocation5 + $0x2c0] sm:$0xff]
    %v258 = vld [vmem:[#allocation5 + $0x2c8] sm:$0xff]
    %v259 = vld [vmem:[#allocation5 + $0x2d0] sm:$0xff]
    %v260 = vld [vmem:[#allocation5 + $0x2d8] sm:$0xff]
    %v261 = vld [vmem:[#allocation5 + $0x2e0] sm:$0xff]
    %v262 = vld [vmem:[#allocation5 + $0x2e8] sm:$0xff]
    %v263 = vld [vmem:[#allocation5 + $0x2f0] sm:$0xff]
    %v264 = vld [vmem:[#allocation5 + $0x2f8] sm:$0xff]
    %v265 = vld [vmem:[#allocation5 + $0x300] sm:$0xff]
    %v266 = vld [vmem:[#allocation5 + $0x308] sm:$0xff]
    %v267 = vld [vmem:[#allocation5 + $0x310] sm:$0xff]
    %v268 = vld [vmem:[#allocation5 + $0x318] sm:$0xff]
    %v269 = vld [vmem:[#allocation5 + $0x320] sm:$0xff]
    %v270 = vld [vmem:[#allocation5 + $0x328] sm:$0xff]
    %v271 = vld [vmem:[#allocation5 + $0x330] sm:$0xff]
    %v272 = vld [vmem:[#allocation5 + $0x338] sm:$0xff]
    %v273 = vld [vmem:[#allocation5 + $0x340] sm:$0xff]
    %v274 = vld [vmem:[#allocation5 + $0x348] sm:$0xff]
    %v275 = vld [vmem:[#allocation5 + $0x350] sm:$0xff]
    %v276 = vld [vmem:[#allocation5 + $0x358] sm:$0xff]
    %v277 = vld [vmem:[#allocation5 + $0x360] sm:$0xff]
    %v278 = vld [vmem:[#allocation5 + $0x368] sm:$0xff]
    %v279 = vld [vmem:[#allocation5 + $0x370] sm:$0xff]
    %v280 = vld [vmem:[#allocation5 + $0x378] sm:$0xff]
    %v281 = vld [vmem:[#allocation5 + $0x380] sm:$0xff]
    %v282 = vld [vmem:[#allocation5 + $0x388] sm:$0xff]
    %v283 = vld [vmem:[#allocation5 + $0x390] sm:$0xff]
    %v284 = vld [vmem:[#allocation5 + $0x398] sm:$0xff]
    %v285 = vld [vmem:[#allocation5 + $0x3a0] sm:$0xff]
    %v286 = vld [vmem:[#allocation5 + $0x3a8] sm:$0xff]
    %v287 = vld [vmem:[#allocation5 + $0x3b0] sm:$0xff]
    %v288 = vld [vmem:[#allocation5 + $0x3b8] sm:$0xff]
    %v289 = vld [vmem:[#allocation5 + $0x3c0] sm:$0xff]
    %v290 = vld [vmem:[#allocation5 + $0x3c8] sm:$0xff]
    %v291 = vld [vmem:[#allocation5 + $0x3d0] sm:$0xff]
    %v292 = vld [vmem:[#allocation5 + $0x3d8] sm:$0xff]
    %v293 = vld [vmem:[#allocation5 + $0x3e0] sm:$0xff]
    %v294 = vld [vmem:[#allocation5 + $0x3e8] sm:$0xff]
    %v295 = vld [vmem:[#allocation5 + $0x3f0] sm:$0xff]
    %v296 = vld [vmem:[#allocation5 + $0x3f8] sm:$0xff]
    %v297 = vld [vmem:[#allocation5 + $0x400] sm:$0xff]
    %v298 = vld [vmem:[#allocation5 + $0x408] sm:$0xff]
    %v299 = vld [vmem:[#allocation5 + $0x410] sm:$0xff]
    %v300 = vld [vmem:[#allocation5 + $0x418] sm:$0xff]
    %v301 = vld [vmem:[#allocation5 + $0x420] sm:$0xff]
    %v302 = vld [vmem:[#allocation5 + $0x428] sm:$0xff]
    %v303 = vld [vmem:[#allocation5 + $0x430] sm:$0xff]
    %v304 = vld [vmem:[#allocation5 + $0x438] sm:$0xff]
    %v305 = vld [vmem:[#allocation5 + $0x440] sm:$0xff]
    %v306 = vld [vmem:[#allocation5 + $0x448] sm:$0xff]
    %v307 = vld [vmem:[#allocation5 + $0x450] sm:$0xff]
    %v308 = vld [vmem:[#allocation5 + $0x458] sm:$0xff]
    %v309 = vld [vmem:[#allocation5 + $0x460] sm:$0xff]
    %v310 = vld [vmem:[#allocation5 + $0x468] sm:$0xff]
    %v311 = vld [vmem:[#allocation5 + $0x470] sm:$0xff]
    %v312 = vld [vmem:[#allocation5 + $0x478] sm:$0xff]
    %v313 = vld [vmem:[#allocation5 + $0x480] sm:$0xff]
    %v314 = vld [vmem:[#allocation5 + $0x488] sm:$0xff]
    %v315 = vld [vmem:[#allocation5 + $0x490] sm:$0xff]
    %v316 = vld [vmem:[#allocation5 + $0x498] sm:$0xff]
    %v317 = vld [vmem:[#allocation5 + $0x4a0] sm:$0xff]
    %v318 = vld [vmem:[#allocation5 + $0x4a8] sm:$0xff]
    %v319 = vld [vmem:[#allocation5 + $0x4b0] sm:$0xff]
    %v320 = vld [vmem:[#allocation5 + $0x4b8] sm:$0xff]
    %v321 = vld [vmem:[#allocation5 + $0x4c0] sm:$0xff]
    %v322 = vld [vmem:[#allocation5 + $0x4c8] sm:$0xff]
    %v323 = vld [vmem:[#allocation5 + $0x4d0] sm:$0xff]
    %v324 = vld [vmem:[#allocation5 + $0x4d8] sm:$0xff]
    %v325 = vld [vmem:[#allocation5 + $0x4e0] sm:$0xff]
    %v326 = vld [vmem:[#allocation5 + $0x4e8] sm:$0xff]
    %v327 = vld [vmem:[#allocation5 + $0x4f0] sm:$0xff]
    %v328 = vld [vmem:[#allocation5 + $0x4f8] sm:$0xff]
    %v329 = vld [vmem:[#allocation5 + $0x500] sm:$0xff]
    %v330 = vld [vmem:[#allocation5 + $0x508] sm:$0xff]
    %v331 = vld [vmem:[#allocation5 + $0x510] sm:$0xff]
    %v332 = vld [vmem:[#allocation5 + $0x518] sm:$0xff]
    %v333 = vld [vmem:[#allocation5 + $0x520] sm:$0xff]
    %v334 = vld [vmem:[#allocation5 + $0x528] sm:$0xff]
    %v335 = vld [vmem:[#allocation5 + $0x530] sm:$0xff]
    %v336 = vld [vmem:[#allocation5 + $0x538] sm:$0xff]
    %v337 = vld [vmem:[#allocation5 + $0x540] sm:$0xff]
    %v338 = vld [vmem:[#allocation5 + $0x548] sm:$0xff]
    %v339 = vld [vmem:[#allocation5 + $0x550] sm:$0xff]
    %v340 = vld [vmem:[#allocation5 + $0x558] sm:$0xff]
    %v341 = vld [vmem:[#allocation5 + $0x560] sm:$0xff]
    %v342 = vld [vmem:[#allocation5 + $0x568] sm:$0xff]
    %v343 = vld [vmem:[#allocation5 + $0x570] sm:$0xff]
    %v344 = vld [vmem:[#allocation5 + $0x578] sm:$0xff]
    %v345 = vld [vmem:[#allocation5 + $0x580] sm:$0xff]
    %v346 = vld [vmem:[#allocation5 + $0x588] sm:$0xff]
    %v347 = vld [vmem:[#allocation5 + $0x590] sm:$0xff]
    %v348 = vld [vmem:[#allocation5 + $0x598] sm:$0xff]
    %v349 = vld [vmem:[#allocation5 + $0x5a0] sm:$0xff]
    %v350 = vld [vmem:[#allocation5 + $0x5a8] sm:$0xff]
    %v351 = vld [vmem:[#allocation5 + $0x5b0] sm:$0xff]
    %v352 = vld [vmem:[#allocation5 + $0x5b8] sm:$0xff]
    %v353 = vld [vmem:[#allocation5 + $0x5c0] sm:$0xff]
    %v354 = vld [vmem:[#allocation5 + $0x5c8] sm:$0xff]
    %v355 = vld [vmem:[#allocation5 + $0x5d0] sm:$0xff]
    %v356 = vld [vmem:[#allocation5 + $0x5d8] sm:$0xff]
    %v357 = vld [vmem:[#allocation5 + $0x5e0] sm:$0xff]
    %v358 = vld [vmem:[#allocation5 + $0x5e8] sm:$0xff]
    %v359 = vld [vmem:[#allocation5 + $0x5f0] sm:$0xff]
    %v360 = vld [vmem:[#allocation5 + $0x5f8] sm:$0xff]
    %v361 = vld [vmem:[#allocation5 + $0x600] sm:$0xff]
    %v362 = vld [vmem:[#allocation5 + $0x608] sm:$0xff]
    %v363 = vld [vmem:[#allocation5 + $0x610] sm:$0xff]
    %v364 = vld [vmem:[#allocation5 + $0x618] sm:$0xff]
    %v365 = vld [vmem:[#allocation5 + $0x620] sm:$0xff]
    %v366 = vld [vmem:[#allocation5 + $0x628] sm:$0xff]
    %v367 = vld [vmem:[#allocation5 + $0x630] sm:$0xff]
    %v368 = vld [vmem:[#allocation5 + $0x638] sm:$0xff]
    %v369 = vld [vmem:[#allocation5 + $0x640] sm:$0xff]
    %v370 = vld [vmem:[#allocation5 + $0x648] sm:$0xff]
    %v371 = vld [vmem:[#allocation5 + $0x650] sm:$0x11]
    %v372 = vld [vmem:[#allocation5 + $0x658] sm:$0x11]
    %v373 = vperm.slane %v144, 0
    %v374 = vperm.slane %v145, 0
    %v375 = vperm.slane %v146, 0
    %v376 = vperm.slane %v147, 0
    %v581 = vunpack.c.l.b16 %v169
    %v582 = vunpack.c.h.b16 %v169
    %v583 = vunpack.c.l.b16 %v170
    %v584 = vunpack.c.h.b16 %v170
    %v585 = vunpack.c.l.b16 %v171
    %v586 = vunpack.c.h.b16 %v171
    %v587 = vunpack.c.l.b16 %v172
    %v588 = vunpack.c.h.b16 %v172
    %v589 = vunpack.c.l.b16 %v173
    %v590 = vunpack.c.h.b16 %v173
    %v591 = vunpack.c.l.b16 %v174
    %v592 = vunpack.c.h.b16 %v174
    %v593 = vunpack.c.l.b16 %v175
    %v594 = vunpack.c.h.b16 %v175
    %v595 = vunpack.c.l.b16 %v176
    %v596 = vunpack.c.h.b16 %v176
    %v597 = vunpack.c.l.b16 %v177
    %v598 = vunpack.c.h.b16 %v177
    %v599 = vunpack.c.l.b16 %v178
    %v600 = vunpack.c.h.b16 %v178
    %v601 = vunpack.c.l.b16 %v179
    %v602 = vunpack.c.h.b16 %v179
    %v603 = vunpack.c.l.b16 %v180
    %v604 = vunpack.c.h.b16 %v180
    %v605 = vunpack.c.l.b16 %v181
    %v606 = vunpack.c.h.b16 %v181
    %v607 = vunpack.c.l.b16 %v182
    %v608 = vunpack.c.h.b16 %v182
    %v609 = vunpack.c.l.b16 %v183
    %v610 = vunpack.c.h.b16 %v183
    %v611 = vunpack.c.l.b16 %v184
    %v612 = vunpack.c.h.b16 %v184
    %v613 = vunpack.c.l.b16 %v185
    %v614 = vunpack.c.h.b16 %v185
    %v615 = vunpack.c.l.b16 %v186
    %v616 = vunpack.c.h.b16 %v186
    %v617 = vunpack.c.l.b16 %v187
    %v618 = vunpack.c.h.b16 %v187
    %v619 = vunpack.c.l.b16 %v188
    %v620 = vunpack.c.h.b16 %v188
    %v621 = vunpack.c.l.b16 %v189
    %v622 = vunpack.c.h.b16 %v189
    %v623 = vunpack.c.l.b16 %v190
    %v624 = vunpack.c.h.b16 %v190
    %v625 = vunpack.c.l.b16 %v191
    %v626 = vunpack.c.h.b16 %v191
    %v627 = vunpack.c.l.b16 %v192
    %v628 = vunpack.c.h.b16 %v192
    %v629 = vunpack.c.l.b16 %v193
    %v630 = vunpack.c.h.b16 %v193
    %v631 = vunpack.c.l.b16 %v194
    %v632 = vunpack.c.h.b16 %v194
    %v633 = vunpack.c.l.b16 %v195
    %v634 = vunpack.c.h.b16 %v195
    %v635 = vunpack.c.l.b16 %v196
    %v636 = vunpack.c.h.b16 %v196
    %v637 = vunpack.c.l.b16 %v197
    %v638 = vunpack.c.h.b16 %v197
    %v639 = vunpack.c.l.b16 %v198
    %v640 = vunpack.c.h.b16 %v198
    %v641 = vunpack.c.l.b16 %v199
    %v642 = vunpack.c.h.b16 %v199
    %v643 = vunpack.c.l.b16 %v200
    %v644 = vunpack.c.h.b16 %v200
    %v645 = vunpack.c.l.b16 %v201
    %v646 = vunpack.c.h.b16 %v201
    %v647 = vunpack.c.l.b16 %v202
    %v648 = vunpack.c.h.b16 %v202
    %v649 = vunpack.c.l.b16 %v203
    %v650 = vunpack.c.h.b16 %v203
    %v651 = vunpack.c.l.b16 %v204
    %v652 = vunpack.c.h.b16 %v204
    %v653 = vunpack.c.l.b16 %v205
    %v654 = vunpack.c.h.b16 %v205
    %v655 = vunpack.c.l.b16 %v206
    %v656 = vunpack.c.h.b16 %v206
    %v657 = vunpack.c.l.b16 %v207
    %v658 = vunpack.c.h.b16 %v207
    %v659 = vunpack.c.l.b16 %v208
    %v660 = vunpack.c.h.b16 %v208
    %v661 = vunpack.c.l.b16 %v209
    %v662 = vunpack.c.h.b16 %v209
    %v663 = vunpack.c.l.b16 %v210
    %v664 = vunpack.c.h.b16 %v210
    %v665 = vunpack.c.l.b16 %v211
    %v666 = vunpack.c.h.b16 %v211
    %v667 = vunpack.c.l.b16 %v212
    %v668 = vunpack.c.h.b16 %v212
    %v669 = vunpack.c.l.b16 %v213
    %v670 = vunpack.c.h.b16 %v213
    %v671 = vunpack.c.l.b16 %v214
    %v672 = vunpack.c.h.b16 %v214
    %v673 = vunpack.c.l.b16 %v215
    %v674 = vunpack.c.h.b16 %v215
    %v675 = vunpack.c.l.b16 %v216
    %v676 = vunpack.c.h.b16 %v216
    %v677 = vunpack.c.l.b16 %v217
    %v678 = vunpack.c.h.b16 %v217
    %v679 = vunpack.c.l.b16 %v218
    %v680 = vunpack.c.h.b16 %v218
    %v681 = vunpack.c.l.b16 %v219
    %v682 = vunpack.c.h.b16 %v219
    %v683 = vunpack.c.l.b16 %v220
    %v684 = vunpack.c.h.b16 %v220
    %v685 = vunpack.c.l.b16 %v221
    %v686 = vunpack.c.h.b16 %v221
    %v687 = vunpack.c.l.b16 %v222
    %v688 = vunpack.c.h.b16 %v222
    %v689 = vunpack.c.l.b16 %v223
    %v690 = vunpack.c.h.b16 %v223
    %v691 = vunpack.c.l.b16 %v224
    %v692 = vunpack.c.h.b16 %v224
    %v693 = vunpack.c.l.b16 %v225
    %v694 = vunpack.c.h.b16 %v225
    %v695 = vunpack.c.l.b16 %v226
    %v696 = vunpack.c.h.b16 %v226
    %v697 = vunpack.c.l.b16 %v227
    %v698 = vunpack.c.h.b16 %v227
    %v699 = vunpack.c.l.b16 %v228
    %v700 = vunpack.c.h.b16 %v228
    %v701 = vunpack.c.l.b16 %v229
    %v702 = vunpack.c.h.b16 %v229
    %v703 = vunpack.c.l.b16 %v230
    %v704 = vunpack.c.h.b16 %v230
    %v705 = vunpack.c.l.b16 %v231
    %v706 = vunpack.c.h.b16 %v231
    %v707 = vunpack.c.l.b16 %v232
    %v708 = vunpack.c.h.b16 %v232
    %v709 = vunpack.c.l.b16 %v233
    %v710 = vunpack.c.h.b16 %v233
    %v711 = vunpack.c.l.b16 %v234
    %v712 = vunpack.c.h.b16 %v234
    %v713 = vunpack.c.l.b16 %v235
    %v714 = vunpack.c.h.b16 %v235
    %v715 = vunpack.c.l.b16 %v236
    %v716 = vunpack.c.h.b16 %v236
    %v717 = vunpack.c.l.b16 %v237
    %v718 = vunpack.c.h.b16 %v237
    %v719 = vunpack.c.l.b16 %v238
    %v720 = vunpack.c.h.b16 %v238
    %v721 = vunpack.c.l.b16 %v239
    %v722 = vunpack.c.h.b16 %v239
    %v723 = vunpack.c.l.b16 %v240
    %v724 = vunpack.c.h.b16 %v240
    %v725 = vunpack.c.l.b16 %v241
    %v726 = vunpack.c.h.b16 %v241
    %v727 = vunpack.c.l.b16 %v242
    %v728 = vunpack.c.h.b16 %v242
    %v729 = vunpack.c.l.b16 %v243
    %v730 = vunpack.c.h.b16 %v243
    %v731 = vunpack.c.l.b16 %v244
    %v732 = vunpack.c.h.b16 %v244
    %v733 = vunpack.c.l.b16 %v245
    %v734 = vunpack.c.h.b16 %v245
    %v735 = vunpack.c.l.b16 %v246
    %v736 = vunpack.c.h.b16 %v246
    %v737 = vunpack.c.l.b16 %v247
    %v738 = vunpack.c.h.b16 %v247
    %v739 = vunpack.c.l.b16 %v248
    %v740 = vunpack.c.h.b16 %v248
    %v741 = vunpack.c.l.b16 %v249
    %v742 = vunpack.c.h.b16 %v249
    %v743 = vunpack.c.l.b16 %v250
    %v744 = vunpack.c.h.b16 %v250
    %v745 = vunpack.c.l.b16 %v251
    %v746 = vunpack.c.h.b16 %v251
    %v747 = vunpack.c.l.b16 %v252
    %v748 = vunpack.c.h.b16 %v252
    %v749 = vunpack.c.l.b16 %v253
    %v750 = vunpack.c.h.b16 %v253
    %v751 = vunpack.c.l.b16 %v254
    %v752 = vunpack.c.h.b16 %v254
    %v753 = vunpack.c.l.b16 %v255
    %v754 = vunpack.c.h.b16 %v255
    %v755 = vunpack.c.l.b16 %v256
    %v756 = vunpack.c.h.b16 %v256
    %v757 = vunpack.c.l.b16 %v257
    %v758 = vunpack.c.h.b16 %v257
    %v759 = vunpack.c.l.b16 %v258
    %v760 = vunpack.c.h.b16 %v258
    %v761 = vunpack.c.l.b16 %v259
    %v762 = vunpack.c.h.b16 %v259
    %v763 = vunpack.c.l.b16 %v260
    %v764 = vunpack.c.h.b16 %v260
    %v765 = vunpack.c.l.b16 %v261
    %v766 = vunpack.c.h.b16 %v261
    %v767 = vunpack.c.l.b16 %v262
    %v768 = vunpack.c.h.b16 %v262
    %v769 = vunpack.c.l.b16 %v263
    %v770 = vunpack.c.h.b16 %v263
    %v771 = vunpack.c.l.b16 %v264
    %v772 = vunpack.c.h.b16 %v264
    %v773 = vunpack.c.l.b16 %v265
    %v774 = vunpack.c.h.b16 %v265
    %v775 = vunpack.c.l.b16 %v266
    %v776 = vunpack.c.h.b16 %v266
    %v777 = vunpack.c.l.b16 %v267
    %v778 = vunpack.c.h.b16 %v267
    %v779 = vunpack.c.l.b16 %v268
    %v780 = vunpack.c.h.b16 %v268
    %v781 = vunpack.c.l.b16 %v269
    %v782 = vunpack.c.h.b16 %v269
    %v783 = vunpack.c.l.b16 %v270
    %v784 = vunpack.c.h.b16 %v270
    %v785 = vunpack.c.l.b16 %v271
    %v786 = vunpack.c.h.b16 %v271
    %v787 = vunpack.c.l.b16 %v272
    %v788 = vunpack.c.h.b16 %v272
    %v789 = vunpack.c.l.b16 %v273
    %v790 = vunpack.c.h.b16 %v273
    %v791 = vunpack.c.l.b16 %v274
    %v792 = vunpack.c.h.b16 %v274
    %v793 = vunpack.c.l.b16 %v275
    %v794 = vunpack.c.h.b16 %v275
    %v795 = vunpack.c.l.b16 %v276
    %v796 = vunpack.c.h.b16 %v276
    %v797 = vunpack.c.l.b16 %v277
    %v798 = vunpack.c.h.b16 %v277
    %v799 = vunpack.c.l.b16 %v278
    %v800 = vunpack.c.h.b16 %v278
    %v801 = vunpack.c.l.b16 %v279
    %v802 = vunpack.c.h.b16 %v279
    %v803 = vunpack.c.l.b16 %v280
    %v804 = vunpack.c.h.b16 %v280
    %v805 = vunpack.c.l.b16 %v281
    %v806 = vunpack.c.h.b16 %v281
    %v807 = vunpack.c.l.b16 %v282
    %v808 = vunpack.c.h.b16 %v282
    %v809 = vunpack.c.l.b16 %v283
    %v810 = vunpack.c.h.b16 %v283
    %v811 = vunpack.c.l.b16 %v284
    %v812 = vunpack.c.h.b16 %v284
    %v813 = vunpack.c.l.b16 %v285
    %v814 = vunpack.c.h.b16 %v285
    %v815 = vunpack.c.l.b16 %v286
    %v816 = vunpack.c.h.b16 %v286
    %v817 = vunpack.c.l.b16 %v287
    %v818 = vunpack.c.h.b16 %v287
    %v819 = vunpack.c.l.b16 %v288
    %v820 = vunpack.c.h.b16 %v288
    %v821 = vunpack.c.l.b16 %v289
    %v822 = vunpack.c.h.b16 %v289
    %v823 = vunpack.c.l.b16 %v290
    %v824 = vunpack.c.h.b16 %v290
    %v825 = vunpack.c.l.b16 %v291
    %v826 = vunpack.c.h.b16 %v291
    %v827 = vunpack.c.l.b16 %v292
    %v828 = vunpack.c.h.b16 %v292
    %v829 = vunpack.c.l.b16 %v293
    %v830 = vunpack.c.h.b16 %v293
    %v831 = vunpack.c.l.b16 %v294
    %v832 = vunpack.c.h.b16 %v294
    %v833 = vunpack.c.l.b16 %v295
    %v834 = vunpack.c.h.b16 %v295
    %v835 = vunpack.c.l.b16 %v296
    %v836 = vunpack.c.h.b16 %v296
    %v837 = vunpack.c.l.b16 %v297
    %v838 = vunpack.c.h.b16 %v297
    %v839 = vunpack.c.l.b16 %v298
    %v840 = vunpack.c.h.b16 %v298
    %v841 = vunpack.c.l.b16 %v299
    %v842 = vunpack.c.h.b16 %v299
    %v843 = vunpack.c.l.b16 %v300
    %v844 = vunpack.c.h.b16 %v300
    %v845 = vunpack.c.l.b16 %v301
    %v846 = vunpack.c.h.b16 %v301
    %v847 = vunpack.c.l.b16 %v302
    %v848 = vunpack.c.h.b16 %v302
    %v849 = vunpack.c.l.b16 %v303
    %v850 = vunpack.c.h.b16 %v303
    %v851 = vunpack.c.l.b16 %v304
    %v852 = vunpack.c.h.b16 %v304
    %v853 = vunpack.c.l.b16 %v305
    %v854 = vunpack.c.h.b16 %v305
    %v855 = vunpack.c.l.b16 %v306
    %v856 = vunpack.c.h.b16 %v306
    %v857 = vunpack.c.l.b16 %v307
    %v858 = vunpack.c.h.b16 %v307
    %v859 = vunpack.c.l.b16 %v308
    %v860 = vunpack.c.h.b16 %v308
    %v861 = vunpack.c.l.b16 %v309
    %v862 = vunpack.c.h.b16 %v309
    %v863 = vunpack.c.l.b16 %v310
    %v864 = vunpack.c.h.b16 %v310
    %v865 = vunpack.c.l.b16 %v311
    %v866 = vunpack.c.h.b16 %v311
    %v867 = vunpack.c.l.b16 %v312
    %v868 = vunpack.c.h.b16 %v312
    %v869 = vunpack.c.l.b16 %v313
    %v870 = vunpack.c.h.b16 %v313
    %v871 = vunpack.c.l.b16 %v314
    %v872 = vunpack.c.h.b16 %v314
    %v873 = vunpack.c.l.b16 %v315
    %v874 = vunpack.c.h.b16 %v315
    %v875 = vunpack.c.l.b16 %v316
    %v876 = vunpack.c.h.b16 %v316
    %v877 = vunpack.c.l.b16 %v317
    %v878 = vunpack.c.h.b16 %v317
    %v879 = vunpack.c.l.b16 %v318
    %v880 = vunpack.c.h.b16 %v318
    %v881 = vunpack.c.l.b16 %v319
    %v882 = vunpack.c.h.b16 %v319
    %v883 = vunpack.c.l.b16 %v320
    %v884 = vunpack.c.h.b16 %v320
    %v885 = vunpack.c.l.b16 %v321
    %v886 = vunpack.c.h.b16 %v321
    %v887 = vunpack.c.l.b16 %v322
    %v888 = vunpack.c.h.b16 %v322
    %v889 = vunpack.c.l.b16 %v323
    %v890 = vunpack.c.h.b16 %v323
    %v891 = vunpack.c.l.b16 %v324
    %v892 = vunpack.c.h.b16 %v324
    %v893 = vunpack.c.l.b16 %v325
    %v894 = vunpack.c.h.b16 %v325
    %v895 = vunpack.c.l.b16 %v326
    %v896 = vunpack.c.h.b16 %v326
    %v897 = vunpack.c.l.b16 %v327
    %v898 = vunpack.c.h.b16 %v327
    %v899 = vunpack.c.l.b16 %v328
    %v900 = vunpack.c.h.b16 %v328
    %v901 = vunpack.c.l.b16 %v329
    %v902 = vunpack.c.h.b16 %v329
    %v903 = vunpack.c.l.b16 %v330
    %v904 = vunpack.c.h.b16 %v330
    %v905 = vunpack.c.l.b16 %v331
    %v906 = vunpack.c.h.b16 %v331
    %v907 = vunpack.c.l.b16 %v332
    %v908 = vunpack.c.h.b16 %v332
    %v909 = vunpack.c.l.b16 %v333
    %v910 = vunpack.c.h.b16 %v333
    %v911 = vunpack.c.l.b16 %v334
    %v912 = vunpack.c.h.b16 %v334
    %v913 = vunpack.c.l.b16 %v335
    %v914 = vunpack.c.h.b16 %v335
    %v915 = vunpack.c.l.b16 %v336
    %v916 = vunpack.c.h.b16 %v336
    %v917 = vunpack.c.l.b16 %v337
    %v918 = vunpack.c.h.b16 %v337
    %v919 = vunpack.c.l.b16 %v338
    %v920 = vunpack.c.h.b16 %v338
    %v921 = vunpack.c.l.b16 %v339
    %v922 = vunpack.c.h.b16 %v339
    %v923 = vunpack.c.l.b16 %v340
    %v924 = vunpack.c.h.b16 %v340
    %v925 = vunpack.c.l.b16 %v341
    %v926 = vunpack.c.h.b16 %v341
    %v927 = vunpack.c.l.b16 %v342
    %v928 = vunpack.c.h.b16 %v342
    %v929 = vunpack.c.l.b16 %v343
    %v930 = vunpack.c.h.b16 %v343
    %v931 = vunpack.c.l.b16 %v344
    %v932 = vunpack.c.h.b16 %v344
    %v933 = vunpack.c.l.b16 %v345
    %v934 = vunpack.c.h.b16 %v345
    %v935 = vunpack.c.l.b16 %v346
    %v936 = vunpack.c.h.b16 %v346
    %v937 = vunpack.c.l.b16 %v347
    %v938 = vunpack.c.h.b16 %v347
    %v939 = vunpack.c.l.b16 %v348
    %v940 = vunpack.c.h.b16 %v348
    %v941 = vunpack.c.l.b16 %v349
    %v942 = vunpack.c.h.b16 %v349
    %v943 = vunpack.c.l.b16 %v350
    %v944 = vunpack.c.h.b16 %v350
    %v945 = vunpack.c.l.b16 %v351
    %v946 = vunpack.c.h.b16 %v351
    %v947 = vunpack.c.l.b16 %v352
    %v948 = vunpack.c.h.b16 %v352
    %v949 = vunpack.c.l.b16 %v353
    %v950 = vunpack.c.h.b16 %v353
    %v951 = vunpack.c.l.b16 %v354
    %v952 = vunpack.c.h.b16 %v354
    %v953 = vunpack.c.l.b16 %v355
    %v954 = vunpack.c.h.b16 %v355
    %v955 = vunpack.c.l.b16 %v356
    %v956 = vunpack.c.h.b16 %v356
    %v957 = vunpack.c.l.b16 %v357
    %v958 = vunpack.c.h.b16 %v357
    %v959 = vunpack.c.l.b16 %v358
    %v960 = vunpack.c.h.b16 %v358
    %v961 = vunpack.c.l.b16 %v359
    %v962 = vunpack.c.h.b16 %v359
    %v963 = vunpack.c.l.b16 %v360
    %v964 = vunpack.c.h.b16 %v360
    %v965 = vunpack.c.l.b16 %v361
    %v966 = vunpack.c.h.b16 %v361
    %v967 = vunpack.c.l.b16 %v362
    %v968 = vunpack.c.h.b16 %v362
    %v969 = vunpack.c.l.b16 %v363
    %v970 = vunpack.c.h.b16 %v363
    %v971 = vunpack.c.l.b16 %v364
    %v972 = vunpack.c.h.b16 %v364
    %v973 = vunpack.c.l.b16 %v365
    %v974 = vunpack.c.h.b16 %v365
    %v975 = vunpack.c.l.b16 %v366
    %v976 = vunpack.c.h.b16 %v366
    %v977 = vunpack.c.l.b16 %v367
    %v978 = vunpack.c.h.b16 %v367
    %v979 = vunpack.c.l.b16 %v368
    %v980 = vunpack.c.h.b16 %v368
    %v981 = vunpack.c.l.b16 %v369
    %v982 = vunpack.c.h.b16 %v369
    %v983 = vunpack.c.l.b16 %v370
    %v984 = vunpack.c.h.b16 %v370
    %v985 = vunpack.c.l.b16 %v371
    %v986 = vunpack.c.h.b16 %v371
    %v987 = vunpack.c.l.b16 %v372
    %v988 = vunpack.c.h.b16 %v372
    %v989 = vpack.c.b16 %v585, %v581
    %v990 = vpack.c.b16 %v586, %v582
    %v991 = vpack.c.b16 %v587, %v583
    %v992 = vpack.c.b16 %v588, %v584
    %v993 = vpack.c.b16 %v593, %v589
    %v994 = vpack.c.b16 %v594, %v590
    %v995 = vpack.c.b16 %v595, %v591
    %v996 = vpack.c.b16 %v596, %v592
    %v997 = vpack.c.b16 %v601, %v597
    %v998 = vpack.c.b16 %v602, %v598
    %v999 = vpack.c.b16 %v603, %v599
    %v1000 = vpack.c.b16 %v604, %v600
    %v1001 = vpack.c.b16 %v609, %v605
    %v1002 = vpack.c.b16 %v610, %v606
    %v1003 = vpack.c.b16 %v611, %v607
    %v1004 = vpack.c.b16 %v612, %v608
    %v1005 = vpack.c.b16 %v617, %v613
    %v1006 = vpack.c.b16 %v618, %v614
    %v1007 = vpack.c.b16 %v619, %v615
    %v1008 = vpack.c.b16 %v620, %v616
    %v1009 = vpack.c.b16 %v625, %v621
    %v1010 = vpack.c.b16 %v626, %v622
    %v1011 = vpack.c.b16 %v627, %v623
    %v1012 = vpack.c.b16 %v628, %v624
    %v1013 = vpack.c.b16 %v633, %v629
    %v1014 = vpack.c.b16 %v634, %v630
    %v1015 = vpack.c.b16 %v635, %v631
    %v1016 = vpack.c.b16 %v636, %v632
    %v1017 = vpack.c.b16 %v641, %v637
    %v1018 = vpack.c.b16 %v642, %v638
    %v1019 = vpack.c.b16 %v643, %v639
    %v1020 = vpack.c.b16 %v644, %v640
    %v1021 = vpack.c.b16 %v649, %v645
    %v1022 = vpack.c.b16 %v650, %v646
    %v1023 = vpack.c.b16 %v651, %v647
    %v1024 = vpack.c.b16 %v652, %v648
    %v1025 = vpack.c.b16 %v657, %v653
    %v1026 = vpack.c.b16 %v658, %v654
    %v1027 = vpack.c.b16 %v659, %v655
    %v1028 = vpack.c.b16 %v660, %v656
    %v1029 = vpack.c.b16 %v665, %v661
    %v1030 = vpack.c.b16 %v666, %v662
    %v1031 = vpack.c.b16 %v667, %v663
    %v1032 = vpack.c.b16 %v668, %v664
    %v1033 = vpack.c.b16 %v673, %v669
    %v1034 = vpack.c.b16 %v674, %v670
    %v1035 = vpack.c.b16 %v675, %v671
    %v1036 = vpack.c.b16 %v676, %v672
    %v1037 = vpack.c.b16 %v681, %v677
    %v1038 = vpack.c.b16 %v682, %v678
    %v1039 = vpack.c.b16 %v683, %v679
    %v1040 = vpack.c.b16 %v684, %v680
    %v1041 = vpack.c.b16 %v689, %v685
    %v1042 = vpack.c.b16 %v690, %v686
    %v1043 = vpack.c.b16 %v691, %v687
    %v1044 = vpack.c.b16 %v692, %v688
    %v1045 = vpack.c.b16 %v697, %v693
    %v1046 = vpack.c.b16 %v698, %v694
    %v1047 = vpack.c.b16 %v699, %v695
    %v1048 = vpack.c.b16 %v700, %v696
    %v1049 = vpack.c.b16 %v705, %v701
    %v1050 = vpack.c.b16 %v706, %v702
    %v1051 = vpack.c.b16 %v707, %v703
    %v1052 = vpack.c.b16 %v708, %v704
    %v1053 = vpack.c.b16 %v713, %v709
    %v1054 = vpack.c.b16 %v714, %v710
    %v1055 = vpack.c.b16 %v715, %v711
    %v1056 = vpack.c.b16 %v716, %v712
    %v1057 = vpack.c.b16 %v721, %v717
    %v1058 = vpack.c.b16 %v722, %v718
    %v1059 = vpack.c.b16 %v723, %v719
    %v1060 = vpack.c.b16 %v724, %v720
    %v1061 = vpack.c.b16 %v729, %v725
    %v1062 = vpack.c.b16 %v730, %v726
    %v1063 = vpack.c.b16 %v731, %v727
    %v1064 = vpack.c.b16 %v732, %v728
    %v1065 = vpack.c.b16 %v737, %v733
    %v1066 = vpack.c.b16 %v738, %v734
    %v1067 = vpack.c.b16 %v739, %v735
    %v1068 = vpack.c.b16 %v740, %v736
    %v1069 = vpack.c.b16 %v745, %v741
    %v1070 = vpack.c.b16 %v746, %v742
    %v1071 = vpack.c.b16 %v747, %v743
    %v1072 = vpack.c.b16 %v748, %v744
    %v1073 = vpack.c.b16 %v753, %v749
    %v1074 = vpack.c.b16 %v754, %v750
    %v1075 = vpack.c.b16 %v755, %v751
    %v1076 = vpack.c.b16 %v756, %v752
    %v1077 = vpack.c.b16 %v761, %v757
    %v1078 = vpack.c.b16 %v762, %v758
    %v1079 = vpack.c.b16 %v763, %v759
    %v1080 = vpack.c.b16 %v764, %v760
    %v1081 = vpack.c.b16 %v769, %v765
    %v1082 = vpack.c.b16 %v770, %v766
    %v1083 = vpack.c.b16 %v771, %v767
    %v1084 = vpack.c.b16 %v772, %v768
    %v1085 = vpack.c.b16 %v777, %v773
    %v1086 = vpack.c.b16 %v778, %v774
    %v1087 = vpack.c.b16 %v779, %v775
    %v1088 = vpack.c.b16 %v780, %v776
    %v1089 = vpack.c.b16 %v785, %v781
    %v1090 = vpack.c.b16 %v786, %v782
    %v1091 = vpack.c.b16 %v787, %v783
    %v1092 = vpack.c.b16 %v788, %v784
    %v1093 = vpack.c.b16 %v793, %v789
    %v1094 = vpack.c.b16 %v794, %v790
    %v1095 = vpack.c.b16 %v795, %v791
    %v1096 = vpack.c.b16 %v796, %v792
    %v1097 = vpack.c.b16 %v801, %v797
    %v1098 = vpack.c.b16 %v802, %v798
    %v1099 = vpack.c.b16 %v803, %v799
    %v1100 = vpack.c.b16 %v804, %v800
    %v1101 = vpack.c.b16 %v809, %v805
    %v1102 = vpack.c.b16 %v810, %v806
    %v1103 = vpack.c.b16 %v811, %v807
    %v1104 = vpack.c.b16 %v812, %v808
    %v1105 = vpack.c.b16 %v817, %v813
    %v1106 = vpack.c.b16 %v818, %v814
    %v1107 = vpack.c.b16 %v819, %v815
    %v1108 = vpack.c.b16 %v820, %v816
    %v1109 = vpack.c.b16 %v825, %v821
    %v1110 = vpack.c.b16 %v826, %v822
    %v1111 = vpack.c.b16 %v827, %v823
    %v1112 = vpack.c.b16 %v828, %v824
    %v1113 = vpack.c.b16 %v833, %v829
    %v1114 = vpack.c.b16 %v834, %v830
    %v1115 = vpack.c.b16 %v835, %v831
    %v1116 = vpack.c.b16 %v836, %v832
    %v1117 = vpack.c.b16 %v841, %v837
    %v1118 = vpack.c.b16 %v842, %v838
    %v1119 = vpack.c.b16 %v843, %v839
    %v1120 = vpack.c.b16 %v844, %v840
    %v1121 = vpack.c.b16 %v849, %v845
    %v1122 = vpack.c.b16 %v850, %v846
    %v1123 = vpack.c.b16 %v851, %v847
    %v1124 = vpack.c.b16 %v852, %v848
    %v1125 = vpack.c.b16 %v857, %v853
    %v1126 = vpack.c.b16 %v858, %v854
    %v1127 = vpack.c.b16 %v859, %v855
    %v1128 = vpack.c.b16 %v860, %v856
    %v1129 = vpack.c.b16 %v865, %v861
    %v1130 = vpack.c.b16 %v866, %v862
    %v1131 = vpack.c.b16 %v867, %v863
    %v1132 = vpack.c.b16 %v868, %v864
    %v1133 = vpack.c.b16 %v873, %v869
    %v1134 = vpack.c.b16 %v874, %v870
    %v1135 = vpack.c.b16 %v875, %v871
    %v1136 = vpack.c.b16 %v876, %v872
    %v1137 = vpack.c.b16 %v881, %v877
    %v1138 = vpack.c.b16 %v882, %v878
    %v1139 = vpack.c.b16 %v883, %v879
    %v1140 = vpack.c.b16 %v884, %v880
    %v1141 = vpack.c.b16 %v889, %v885
    %v1142 = vpack.c.b16 %v890, %v886
    %v1143 = vpack.c.b16 %v891, %v887
    %v1144 = vpack.c.b16 %v892, %v888
    %v1145 = vpack.c.b16 %v897, %v893
    %v1146 = vpack.c.b16 %v898, %v894
    %v1147 = vpack.c.b16 %v899, %v895
    %v1148 = vpack.c.b16 %v900, %v896
    %v1149 = vpack.c.b16 %v905, %v901
    %v1150 = vpack.c.b16 %v906, %v902
    %v1151 = vpack.c.b16 %v907, %v903
    %v1152 = vpack.c.b16 %v908, %v904
    %v1153 = vpack.c.b16 %v913, %v909
    %v1154 = vpack.c.b16 %v914, %v910
    %v1155 = vpack.c.b16 %v915, %v911
    %v1156 = vpack.c.b16 %v916, %v912
    %v1157 = vpack.c.b16 %v921, %v917
    %v1158 = vpack.c.b16 %v922, %v918
    %v1159 = vpack.c.b16 %v923, %v919
    %v1160 = vpack.c.b16 %v924, %v920
    %v1161 = vpack.c.b16 %v929, %v925
    %v1162 = vpack.c.b16 %v930, %v926
    %v1163 = vpack.c.b16 %v931, %v927
    %v1164 = vpack.c.b16 %v932, %v928
    %v1165 = vpack.c.b16 %v937, %v933
    %v1166 = vpack.c.b16 %v938, %v934
    %v1167 = vpack.c.b16 %v939, %v935
    %v1168 = vpack.c.b16 %v940, %v936
    %v1169 = vpack.c.b16 %v945, %v941
    %v1170 = vpack.c.b16 %v946, %v942
    %v1171 = vpack.c.b16 %v947, %v943
    %v1172 = vpack.c.b16 %v948, %v944
    %v1173 = vpack.c.b16 %v953, %v949
    %v1174 = vpack.c.b16 %v954, %v950
    %v1175 = vpack.c.b16 %v955, %v951
    %v1176 = vpack.c.b16 %v956, %v952
    %v1177 = vpack.c.b16 %v961, %v957
    %v1178 = vpack.c.b16 %v962, %v958
    %v1179 = vpack.c.b16 %v963, %v959
    %v1180 = vpack.c.b16 %v964, %v960
    %v1181 = vpack.c.b16 %v969, %v965
    %v1182 = vpack.c.b16 %v970, %v966
    %v1183 = vpack.c.b16 %v971, %v967
    %v1184 = vpack.c.b16 %v972, %v968
    %v1185 = vpack.c.b16 %v977, %v973
    %v1186 = vpack.c.b16 %v978, %v974
    %v1187 = vpack.c.b16 %v979, %v975
    %v1188 = vpack.c.b16 %v980, %v976
    %v1189 = vpack.c.b16 %v985, %v981
    %v1190 = vpack.c.b16 %v986, %v982
    %v1191 = vpack.c.b16 %v987, %v983
    %v1192 = vpack.c.b16 %v988, %v984
    %vm1393 = vcmask 334848
    %v1395 = vsel %vm1393, %v168, 0
    %vm1397 = vcmask 1043456
    %vm1398 = vcmask 1044480
    %v1399 = vsel %vm1397, 4294967295, 65535
    %v1400 = vsel %vm1398, %v1399, 0
    %v1402 = vand.u32 %v1189, %v1400
    %v1405 = vand.u32 %v1190, %v1400
    %v1408 = vand.u32 %v1191, %v1400
    %v1411 = vand.u32 %v1192, %v1400
    %1413 = vmatpush.bf16.msra.mxu0 %v1017
    %1414 = vmatpush.bf16.msra.mxu0 %v1013
    %1415 = vmatpush.bf16.msra.mxu0 %v1009
    %1416 = vmatpush.bf16.msra.mxu0 %v1005
    %1417 = vmatpush.bf16.msra.mxu0 %v1001
    %1418 = vmatpush.bf16.msra.mxu0 %v997
    %1419 = vmatpush.bf16.msra.mxu0 %v993
    %1420 = vmatpush.bf16.msra.mxu0 %v989
    %1421 = vmatmul.bf16.gmra.mxu0 %v162
    %v1422 = vpop.f32.mrf.mxu0
    %v1423 = vadd.f32 %v373, %v1422
    %v1424 = vpop.f32.mrf.mxu0
    %v1425 = vadd.f32 %v373, %v1424
    %1426 = vdwg.mxu0
    %1427 = vmatpush.bf16.msra.mxu0 %v1049
    %1428 = vmatpush.bf16.msra.mxu0 %v1045
    %1429 = vmatpush.bf16.msra.mxu0 %v1041
    %1430 = vmatpush.bf16.msra.mxu0 %v1037
    %1431 = vmatpush.bf16.msra.mxu0 %v1033
    %1432 = vmatpush.bf16.msra.mxu0 %v1029
    %1433 = vmatpush.bf16.msra.mxu0 %v1025
    %1434 = vmatpush.bf16.msra.mxu0 %v1021
    %1435 = vmatmul.bf16.gmra.mxu0 %v163
    %v1436 = vpop.f32.mrf.mxu0
    %v1437 = vadd.f32 %v1423, %v1436
    %v1438 = vpop.f32.mrf.mxu0
    %v1439 = vadd.f32 %v1425, %v1438
    %1440 = vdwg.mxu0
    %1441 = vmatpush.bf16.msra.mxu0 %v1081
    %1442 = vmatpush.bf16.msra.mxu0 %v1077
    %1443 = vmatpush.bf16.msra.mxu0 %v1073
    %1444 = vmatpush.bf16.msra.mxu0 %v1069
    %1445 = vmatpush.bf16.msra.mxu0 %v1065
    %1446 = vmatpush.bf16.msra.mxu0 %v1061
    %1447 = vmatpush.bf16.msra.mxu0 %v1057
    %1448 = vmatpush.bf16.msra.mxu0 %v1053
    %1449 = vmatmul.bf16.gmra.mxu0 %v164
    %v1450 = vpop.f32.mrf.mxu0
    %v1451 = vadd.f32 %v1437, %v1450
    %v1452 = vpop.f32.mrf.mxu0
    %v1453 = vadd.f32 %v1439, %v1452
    %1454 = vdwg.mxu0
    %1455 = vmatpush.bf16.msra.mxu0 %v1113
    %1456 = vmatpush.bf16.msra.mxu0 %v1109
    %1457 = vmatpush.bf16.msra.mxu0 %v1105
    %1458 = vmatpush.bf16.msra.mxu0 %v1101
    %1459 = vmatpush.bf16.msra.mxu0 %v1097
    %1460 = vmatpush.bf16.msra.mxu0 %v1093
    %1461 = vmatpush.bf16.msra.mxu0 %v1089
    %1462 = vmatpush.bf16.msra.mxu0 %v1085
    %1463 = vmatmul.bf16.gmra.mxu0 %v165
    %v1464 = vpop.f32.mrf.mxu0
    %v1465 = vadd.f32 %v1451, %v1464
    %v1466 = vpop.f32.mrf.mxu0
    %v1467 = vadd.f32 %v1453, %v1466
    %1468 = vdwg.mxu0
    %1469 = vmatpush.bf16.msra.mxu0 %v1145
    %1470 = vmatpush.bf16.msra.mxu0 %v1141
    %1471 = vmatpush.bf16.msra.mxu0 %v1137
    %1472 = vmatpush.bf16.msra.mxu0 %v1133
    %1473 = vmatpush.bf16.msra.mxu0 %v1129
    %1474 = vmatpush.bf16.msra.mxu0 %v1125
    %1475 = vmatpush.bf16.msra.mxu0 %v1121
    %1476 = vmatpush.bf16.msra.mxu0 %v1117
    %1477 = vmatmul.bf16.gmra.mxu0 %v166
    %v1478 = vpop.f32.mrf.mxu0
    %v1479 = vadd.f32 %v1465, %v1478
    %v1480 = vpop.f32.mrf.mxu0
    %v1481 = vadd.f32 %v1467, %v1480
    %1482 = vdwg.mxu0
    %1483 = vmatpush.bf16.msra.mxu0 %v1177
    %1484 = vmatpush.bf16.msra.mxu0 %v1173
    %1485 = vmatpush.bf16.msra.mxu0 %v1169
    %1486 = vmatpush.bf16.msra.mxu0 %v1165
    %1487 = vmatpush.bf16.msra.mxu0 %v1161
    %1488 = vmatpush.bf16.msra.mxu0 %v1157
    %1489 = vmatpush.bf16.msra.mxu0 %v1153
    %1490 = vmatpush.bf16.msra.mxu0 %v1149
    %1491 = vmatmul.bf16.gmra.mxu0 %v167
    %v1492 = vpop.f32.mrf.mxu0
    %v1493 = vadd.f32 %v1479, %v1492
    %v1494 = vpop.f32.mrf.mxu0
    %v1495 = vadd.f32 %v1481, %v1494
    %1496 = vdwg.mxu0
    %1497 = vmatpush.bf16.msra.mxu0 0
    %1498 = vmatpush.bf16.msra.mxu0 0
    %1499 = vmatpush.bf16.msra.mxu0 0
    %1500 = vmatpush.bf16.msra.mxu0 0
    %1501 = vmatpush.bf16.msra.mxu0 0
    %1502 = vmatpush.bf16.msra.mxu0 %v1402
    %1503 = vmatpush.bf16.msra.mxu0 %v1185
    %1504 = vmatpush.bf16.msra.mxu0 %v1181
    %1505 = vmatmul.bf16.gmra.mxu0 %v1395
    %v1506 = vpop.f32.mrf.mxu0
    %v1507 = vadd.f32 %v1493, %v1506
    %v1508 = vpop.f32.mrf.mxu0
    %v1509 = vadd.f32 %v1495, %v1508
    %1510 = vdwg.mxu0
    %1511 = vmatpush.bf16.msra.mxu0 %v1018
    %1512 = vmatpush.bf16.msra.mxu0 %v1014
    %1513 = vmatpush.bf16.msra.mxu0 %v1010
    %1514 = vmatpush.bf16.msra.mxu0 %v1006
    %1515 = vmatpush.bf16.msra.mxu0 %v1002
    %1516 = vmatpush.bf16.msra.mxu0 %v998
    %1517 = vmatpush.bf16.msra.mxu0 %v994
    %1518 = vmatpush.bf16.msra.mxu0 %v990
    %1519 = vmatmul.bf16.gmra.mxu0 %v162
    %v1520 = vpop.f32.mrf.mxu0
    %v1521 = vadd.f32 %v374, %v1520
    %v1522 = vpop.f32.mrf.mxu0
    %v1523 = vadd.f32 %v374, %v1522
    %1524 = vdwg.mxu0
    %1525 = vmatpush.bf16.msra.mxu0 %v1050
    %1526 = vmatpush.bf16.msra.mxu0 %v1046
    %1527 = vmatpush.bf16.msra.mxu0 %v1042
    %1528 = vmatpush.bf16.msra.mxu0 %v1038
    %1529 = vmatpush.bf16.msra.mxu0 %v1034
    %1530 = vmatpush.bf16.msra.mxu0 %v1030
    %1531 = vmatpush.bf16.msra.mxu0 %v1026
    %1532 = vmatpush.bf16.msra.mxu0 %v1022
    %1533 = vmatmul.bf16.gmra.mxu0 %v163
    %v1534 = vpop.f32.mrf.mxu0
    %v1535 = vadd.f32 %v1521, %v1534
    %v1536 = vpop.f32.mrf.mxu0
    %v1537 = vadd.f32 %v1523, %v1536
    %1538 = vdwg.mxu0
    %1539 = vmatpush.bf16.msra.mxu0 %v1082
    %1540 = vmatpush.bf16.msra.mxu0 %v1078
    %1541 = vmatpush.bf16.msra.mxu0 %v1074
    %1542 = vmatpush.bf16.msra.mxu0 %v1070
    %1543 = vmatpush.bf16.msra.mxu0 %v1066
    %1544 = vmatpush.bf16.msra.mxu0 %v1062
    %1545 = vmatpush.bf16.msra.mxu0 %v1058
    %1546 = vmatpush.bf16.msra.mxu0 %v1054
    %1547 = vmatmul.bf16.gmra.mxu0 %v164
    %v1548 = vpop.f32.mrf.mxu0
    %v1549 = vadd.f32 %v1535, %v1548
    %v1550 = vpop.f32.mrf.mxu0
    %v1551 = vadd.f32 %v1537, %v1550
    %1552 = vdwg.mxu0
    %1553 = vmatpush.bf16.msra.mxu0 %v1114
    %1554 = vmatpush.bf16.msra.mxu0 %v1110
    %1555 = vmatpush.bf16.msra.mxu0 %v1106
    %1556 = vmatpush.bf16.msra.mxu0 %v1102
    %1557 = vmatpush.bf16.msra.mxu0 %v1098
    %1558 = vmatpush.bf16.msra.mxu0 %v1094
    %1559 = vmatpush.bf16.msra.mxu0 %v1090
    %1560 = vmatpush.bf16.msra.mxu0 %v1086
    %1561 = vmatmul.bf16.gmra.mxu0 %v165
    %v1562 = vpop.f32.mrf.mxu0
    %v1563 = vadd.f32 %v1549, %v1562
    %v1564 = vpop.f32.mrf.mxu0
    %v1565 = vadd.f32 %v1551, %v1564
    %1566 = vdwg.mxu0
    %1567 = vmatpush.bf16.msra.mxu0 %v1146
    %1568 = vmatpush.bf16.msra.mxu0 %v1142
    %1569 = vmatpush.bf16.msra.mxu0 %v1138
    %1570 = vmatpush.bf16.msra.mxu0 %v1134
    %1571 = vmatpush.bf16.msra.mxu0 %v1130
    %1572 = vmatpush.bf16.msra.mxu0 %v1126
    %1573 = vmatpush.bf16.msra.mxu0 %v1122
    %1574 = vmatpush.bf16.msra.mxu0 %v1118
    %1575 = vmatmul.bf16.gmra.mxu0 %v166
    %v1576 = vpop.f32.mrf.mxu0
    %v1577 = vadd.f32 %v1563, %v1576
    %v1578 = vpop.f32.mrf.mxu0
    %v1579 = vadd.f32 %v1565, %v1578
    %1580 = vdwg.mxu0
    %1581 = vmatpush.bf16.msra.mxu0 %v1178
    %1582 = vmatpush.bf16.msra.mxu0 %v1174
    %1583 = vmatpush.bf16.msra.mxu0 %v1170
    %1584 = vmatpush.bf16.msra.mxu0 %v1166
    %1585 = vmatpush.bf16.msra.mxu0 %v1162
    %1586 = vmatpush.bf16.msra.mxu0 %v1158
    %1587 = vmatpush.bf16.msra.mxu0 %v1154
    %1588 = vmatpush.bf16.msra.mxu0 %v1150
    %1589 = vmatmul.bf16.gmra.mxu0 %v167
    %v1590 = vpop.f32.mrf.mxu0
    %v1591 = vadd.f32 %v1577, %v1590
    %v1592 = vpop.f32.mrf.mxu0
    %v1593 = vadd.f32 %v1579, %v1592
    %1594 = vdwg.mxu0
    %1595 = vmatpush.bf16.msra.mxu0 0
    %1596 = vmatpush.bf16.msra.mxu0 0
    %1597 = vmatpush.bf16.msra.mxu0 0
    %1598 = vmatpush.bf16.msra.mxu0 0
    %1599 = vmatpush.bf16.msra.mxu0 0
    %1600 = vmatpush.bf16.msra.mxu0 %v1405
    %1601 = vmatpush.bf16.msra.mxu0 %v1186
    %1602 = vmatpush.bf16.msra.mxu0 %v1182
    %1603 = vmatmul.bf16.gmra.mxu0 %v1395
    %v1604 = vpop.f32.mrf.mxu0
    %v1605 = vadd.f32 %v1591, %v1604
    %v1606 = vpop.f32.mrf.mxu0
    %v1607 = vadd.f32 %v1593, %v1606
    %1608 = vdwg.mxu0
    %1609 = vmatpush.bf16.msra.mxu0 %v1019
    %1610 = vmatpush.bf16.msra.mxu0 %v1015
    %1611 = vmatpush.bf16.msra.mxu0 %v1011
    %1612 = vmatpush.bf16.msra.mxu0 %v1007
    %1613 = vmatpush.bf16.msra.mxu0 %v1003
    %1614 = vmatpush.bf16.msra.mxu0 %v999
    %1615 = vmatpush.bf16.msra.mxu0 %v995
    %1616 = vmatpush.bf16.msra.mxu0 %v991
    %1617 = vmatmul.bf16.gmra.mxu0 %v162
    %v1618 = vpop.f32.mrf.mxu0
    %v1619 = vadd.f32 %v375, %v1618
    %v1620 = vpop.f32.mrf.mxu0
    %v1621 = vadd.f32 %v375, %v1620
    %1622 = vdwg.mxu0
    %1623 = vmatpush.bf16.msra.mxu0 %v1051
    %1624 = vmatpush.bf16.msra.mxu0 %v1047
    %1625 = vmatpush.bf16.msra.mxu0 %v1043
    %1626 = vmatpush.bf16.msra.mxu0 %v1039
    %1627 = vmatpush.bf16.msra.mxu0 %v1035
    %1628 = vmatpush.bf16.msra.mxu0 %v1031
    %1629 = vmatpush.bf16.msra.mxu0 %v1027
    %1630 = vmatpush.bf16.msra.mxu0 %v1023
    %1631 = vmatmul.bf16.gmra.mxu0 %v163
    %v1632 = vpop.f32.mrf.mxu0
    %v1633 = vadd.f32 %v1619, %v1632
    %v1634 = vpop.f32.mrf.mxu0
    %v1635 = vadd.f32 %v1621, %v1634
    %1636 = vdwg.mxu0
    %1637 = vmatpush.bf16.msra.mxu0 %v1083
    %1638 = vmatpush.bf16.msra.mxu0 %v1079
    %1639 = vmatpush.bf16.msra.mxu0 %v1075
    %1640 = vmatpush.bf16.msra.mxu0 %v1071
    %1641 = vmatpush.bf16.msra.mxu0 %v1067
    %1642 = vmatpush.bf16.msra.mxu0 %v1063
    %1643 = vmatpush.bf16.msra.mxu0 %v1059
    %1644 = vmatpush.bf16.msra.mxu0 %v1055
    %1645 = vmatmul.bf16.gmra.mxu0 %v164
    %v1646 = vpop.f32.mrf.mxu0
    %v1647 = vadd.f32 %v1633, %v1646
    %v1648 = vpop.f32.mrf.mxu0
    %v1649 = vadd.f32 %v1635, %v1648
    %1650 = vdwg.mxu0
    %1651 = vmatpush.bf16.msra.mxu0 %v1115
    %1652 = vmatpush.bf16.msra.mxu0 %v1111
    %1653 = vmatpush.bf16.msra.mxu0 %v1107
    %1654 = vmatpush.bf16.msra.mxu0 %v1103
    %1655 = vmatpush.bf16.msra.mxu0 %v1099
    %1656 = vmatpush.bf16.msra.mxu0 %v1095
    %1657 = vmatpush.bf16.msra.mxu0 %v1091
    %1658 = vmatpush.bf16.msra.mxu0 %v1087
    %1659 = vmatmul.bf16.gmra.mxu0 %v165
    %v1660 = vpop.f32.mrf.mxu0
    %v1661 = vadd.f32 %v1647, %v1660
    %v1662 = vpop.f32.mrf.mxu0
    %v1663 = vadd.f32 %v1649, %v1662
    %1664 = vdwg.mxu0
    %1665 = vmatpush.bf16.msra.mxu0 %v1147
    %1666 = vmatpush.bf16.msra.mxu0 %v1143
    %1667 = vmatpush.bf16.msra.mxu0 %v1139
    %1668 = vmatpush.bf16.msra.mxu0 %v1135
    %1669 = vmatpush.bf16.msra.mxu0 %v1131
    %1670 = vmatpush.bf16.msra.mxu0 %v1127
    %1671 = vmatpush.bf16.msra.mxu0 %v1123
    %1672 = vmatpush.bf16.msra.mxu0 %v1119
    %1673 = vmatmul.bf16.gmra.mxu0 %v166
    %v1674 = vpop.f32.mrf.mxu0
    %v1675 = vadd.f32 %v1661, %v1674
    %v1676 = vpop.f32.mrf.mxu0
    %v1677 = vadd.f32 %v1663, %v1676
    %1678 = vdwg.mxu0
    %1679 = vmatpush.bf16.msra.mxu0 %v1179
    %1680 = vmatpush.bf16.msra.mxu0 %v1175
    %1681 = vmatpush.bf16.msra.mxu0 %v1171
    %1682 = vmatpush.bf16.msra.mxu0 %v1167
    %1683 = vmatpush.bf16.msra.mxu0 %v1163
    %1684 = vmatpush.bf16.msra.mxu0 %v1159
    %1685 = vmatpush.bf16.msra.mxu0 %v1155
    %1686 = vmatpush.bf16.msra.mxu0 %v1151
    %1687 = vmatmul.bf16.gmra.mxu0 %v167
    %v1688 = vpop.f32.mrf.mxu0
    %v1689 = vadd.f32 %v1675, %v1688
    %v1690 = vpop.f32.mrf.mxu0
    %v1691 = vadd.f32 %v1677, %v1690
    %1692 = vdwg.mxu0
    %1693 = vmatpush.bf16.msra.mxu0 0
    %1694 = vmatpush.bf16.msra.mxu0 0
    %1695 = vmatpush.bf16.msra.mxu0 0
    %1696 = vmatpush.bf16.msra.mxu0 0
    %1697 = vmatpush.bf16.msra.mxu0 0
    %1698 = vmatpush.bf16.msra.mxu0 %v1408
    %1699 = vmatpush.bf16.msra.mxu0 %v1187
    %1700 = vmatpush.bf16.msra.mxu0 %v1183
    %1701 = vmatmul.bf16.gmra.mxu0 %v1395
    %v1702 = vpop.f32.mrf.mxu0
    %v1703 = vadd.f32 %v1689, %v1702
    %v1704 = vpop.f32.mrf.mxu0
    %v1705 = vadd.f32 %v1691, %v1704
    %1706 = vdwg.mxu0
    %1707 = vmatpush.bf16.msra.mxu0 %v1020
    %1708 = vmatpush.bf16.msra.mxu0 %v1016
    %1709 = vmatpush.bf16.msra.mxu0 %v1012
    %1710 = vmatpush.bf16.msra.mxu0 %v1008
    %1711 = vmatpush.bf16.msra.mxu0 %v1004
    %1712 = vmatpush.bf16.msra.mxu0 %v1000
    %1713 = vmatpush.bf16.msra.mxu0 %v996
    %1714 = vmatpush.bf16.msra.mxu0 %v992
    %1715 = vmatmul.bf16.gmra.mxu0 %v162
    %v1716 = vpop.f32.mrf.mxu0
    %v1717 = vadd.f32 %v376, %v1716
    %v1718 = vpop.f32.mrf.mxu0
    %v1719 = vadd.f32 %v376, %v1718
    %1720 = vdwg.mxu0
    %1721 = vmatpush.bf16.msra.mxu0 %v1052
    %1722 = vmatpush.bf16.msra.mxu0 %v1048
    %1723 = vmatpush.bf16.msra.mxu0 %v1044
    %1724 = vmatpush.bf16.msra.mxu0 %v1040
    %1725 = vmatpush.bf16.msra.mxu0 %v1036
    %1726 = vmatpush.bf16.msra.mxu0 %v1032
    %1727 = vmatpush.bf16.msra.mxu0 %v1028
    %1728 = vmatpush.bf16.msra.mxu0 %v1024
    %1729 = vmatmul.bf16.gmra.mxu0 %v163
    %v1730 = vpop.f32.mrf.mxu0
    %v1731 = vadd.f32 %v1717, %v1730
    %v1732 = vpop.f32.mrf.mxu0
    %v1733 = vadd.f32 %v1719, %v1732
    %1734 = vdwg.mxu0
    %1735 = vmatpush.bf16.msra.mxu0 %v1084
    %1736 = vmatpush.bf16.msra.mxu0 %v1080
    %1737 = vmatpush.bf16.msra.mxu0 %v1076
    %1738 = vmatpush.bf16.msra.mxu0 %v1072
    %1739 = vmatpush.bf16.msra.mxu0 %v1068
    %1740 = vmatpush.bf16.msra.mxu0 %v1064
    %1741 = vmatpush.bf16.msra.mxu0 %v1060
    %1742 = vmatpush.bf16.msra.mxu0 %v1056
    %1743 = vmatmul.bf16.gmra.mxu0 %v164
    %v1744 = vpop.f32.mrf.mxu0
    %v1745 = vadd.f32 %v1731, %v1744
    %v1746 = vpop.f32.mrf.mxu0
    %v1747 = vadd.f32 %v1733, %v1746
    %1748 = vdwg.mxu0
    %1749 = vmatpush.bf16.msra.mxu0 %v1116
    %1750 = vmatpush.bf16.msra.mxu0 %v1112
    %1751 = vmatpush.bf16.msra.mxu0 %v1108
    %1752 = vmatpush.bf16.msra.mxu0 %v1104
    %1753 = vmatpush.bf16.msra.mxu0 %v1100
    %1754 = vmatpush.bf16.msra.mxu0 %v1096
    %1755 = vmatpush.bf16.msra.mxu0 %v1092
    %1756 = vmatpush.bf16.msra.mxu0 %v1088
    %1757 = vmatmul.bf16.gmra.mxu0 %v165
    %v1758 = vpop.f32.mrf.mxu0
    %v1759 = vadd.f32 %v1745, %v1758
    %v1760 = vpop.f32.mrf.mxu0
    %v1761 = vadd.f32 %v1747, %v1760
    %1762 = vdwg.mxu0
    %1763 = vmatpush.bf16.msra.mxu0 %v1148
    %1764 = vmatpush.bf16.msra.mxu0 %v1144
    %1765 = vmatpush.bf16.msra.mxu0 %v1140
    %1766 = vmatpush.bf16.msra.mxu0 %v1136
    %1767 = vmatpush.bf16.msra.mxu0 %v1132
    %1768 = vmatpush.bf16.msra.mxu0 %v1128
    %1769 = vmatpush.bf16.msra.mxu0 %v1124
    %1770 = vmatpush.bf16.msra.mxu0 %v1120
    %1771 = vmatmul.bf16.gmra.mxu0 %v166
    %v1772 = vpop.f32.mrf.mxu0
    %v1773 = vadd.f32 %v1759, %v1772
    %v1774 = vpop.f32.mrf.mxu0
    %v1775 = vadd.f32 %v1761, %v1774
    %1776 = vdwg.mxu0
    %1777 = vmatpush.bf16.msra.mxu0 %v1180
    %1778 = vmatpush.bf16.msra.mxu0 %v1176
    %1779 = vmatpush.bf16.msra.mxu0 %v1172
    %1780 = vmatpush.bf16.msra.mxu0 %v1168
    %1781 = vmatpush.bf16.msra.mxu0 %v1164
    %1782 = vmatpush.bf16.msra.mxu0 %v1160
    %1783 = vmatpush.bf16.msra.mxu0 %v1156
    %1784 = vmatpush.bf16.msra.mxu0 %v1152
    %1785 = vmatmul.bf16.gmra.mxu0 %v167
    %v1786 = vpop.f32.mrf.mxu0
    %v1787 = vadd.f32 %v1773, %v1786
    %v1788 = vpop.f32.mrf.mxu0
    %v1789 = vadd.f32 %v1775, %v1788
    %1790 = vdwg.mxu0
    %1791 = vmatpush.bf16.msra.mxu0 0
    %1792 = vmatpush.bf16.msra.mxu0 0
    %1793 = vmatpush.bf16.msra.mxu0 0
    %1794 = vmatpush.bf16.msra.mxu0 0
    %1795 = vmatpush.bf16.msra.mxu0 0
    %1796 = vmatpush.bf16.msra.mxu0 %v1411
    %1797 = vmatpush.bf16.msra.mxu0 %v1188
    %1798 = vmatpush.bf16.msra.mxu0 %v1184
    %1799 = vmatmul.bf16.gmra.mxu0 %v1395
    %v1800 = vpop.f32.mrf.mxu0
    %v1801 = vadd.f32 %v1787, %v1800
    %v1802 = vpop.f32.mrf.mxu0
    %v1803 = vadd.f32 %v1789, %v1802
    %1804 = vdwg.mxu0
    %v1805 = vmax.f32 %v1507, 0.0
    %v1806 = vmax.f32 %v1605, 0.0
    %v1807 = vmax.f32 %v1703, 0.0
    %v1808 = vmax.f32 %v1801, 0.0
    %v1809 = vmax.f32 %v1509, 0.0
    %v1810 = vmax.f32 %v1607, 0.0
    %v1811 = vmax.f32 %v1705, 0.0
    %v1812 = vmax.f32 %v1803, 0.0
    %v1813 = vpack.c.bf16 %v1809, %v1805
    %v1814 = vpack.c.bf16 %v1810, %v1806
    %v1815 = vpack.c.bf16 %v1811, %v1807
    %v1816 = vpack.c.bf16 %v1812, %v1808
    %v1817 = vld [vmem:[#allocation7] sm:$0xff]
    %v1818 = vld [vmem:[#allocation7 + $0x8] sm:$0xff]
    %v1819 = vld [vmem:[#allocation7 + $0x10] sm:$0xff]
    %v1820 = vld [vmem:[#allocation7 + $0x18] sm:$0xff]
    %v1821 = vld [vmem:[#allocation7 + $0x20] sm:$0xff]
    %v1822 = vld [vmem:[#allocation7 + $0x28] sm:$0xff]
    %v1823 = vld [vmem:[#allocation7 + $0x30] sm:$0xff]
    %v1824 = vld [vmem:[#allocation7 + $0x38] sm:$0xff]
    %v1825 = vld [vmem:[#allocation7 + $0x40] sm:$0xff]
    %v1826 = vld [vmem:[#allocation7 + $0x48] sm:$0xff]
    %v1827 = vld [vmem:[#allocation7 + $0x50] sm:$0xff]
    %v1828 = vld [vmem:[#allocation7 + $0x58] sm:$0xff]
    %v1829 = vld [vmem:[#allocation7 + $0x60] sm:$0xff]
    %v1830 = vld [vmem:[#allocation7 + $0x68] sm:$0xff]
    %v1831 = vld [vmem:[#allocation7 + $0x70] sm:$0xff]
    %v1832 = vld [vmem:[#allocation7 + $0x78] sm:$0xff]
    %v1833 = vld [vmem:[#allocation7 + $0x80] sm:$0xff]
    %v1834 = vld [vmem:[#allocation7 + $0x88] sm:$0xff]
    %v1835 = vld [vmem:[#allocation7 + $0x90] sm:$0xff]
    %v1836 = vld [vmem:[#allocation7 + $0x98] sm:$0xff]
    %v1837 = vld [vmem:[#allocation7 + $0xa0] sm:$0xff]
    %v1838 = vld [vmem:[#allocation7 + $0xa8] sm:$0xff]
    %v1839 = vld [vmem:[#allocation7 + $0xb0] sm:$0xff]
    %v1840 = vld [vmem:[#allocation7 + $0xb8] sm:$0xff]
    %v1841 = vld [vmem:[#allocation7 + $0xc0] sm:$0xff]
    %v1842 = vld [vmem:[#allocation7 + $0xc8] sm:$0xff]
    %v1843 = vld [vmem:[#allocation7 + $0xd0] sm:$0xff]
    %v1844 = vld [vmem:[#allocation7 + $0xd8] sm:$0xff]
    %v1845 = vld [vmem:[#allocation7 + $0xe0] sm:$0xff]
    %v1846 = vld [vmem:[#allocation7 + $0xe8] sm:$0xff]
    %v1847 = vld [vmem:[#allocation7 + $0xf0] sm:$0xff]
    %v1848 = vld [vmem:[#allocation7 + $0xf8] sm:$0xff]
    %v1849 = vld [vmem:[#allocation7 + $0x100] sm:$0xff]
    %v1850 = vld [vmem:[#allocation7 + $0x108] sm:$0xff]
    %v1851 = vld [vmem:[#allocation7 + $0x110] sm:$0xff]
    %v1852 = vld [vmem:[#allocation7 + $0x118] sm:$0xff]
    %v1853 = vld [vmem:[#allocation7 + $0x120] sm:$0xff]
    %v1854 = vld [vmem:[#allocation7 + $0x128] sm:$0xff]
    %v1855 = vld [vmem:[#allocation7 + $0x130] sm:$0xff]
    %v1856 = vld [vmem:[#allocation7 + $0x138] sm:$0xff]
    %v1857 = vld [vmem:[#allocation7 + $0x140] sm:$0xff]
    %v1858 = vld [vmem:[#allocation7 + $0x148] sm:$0xff]
    %v1859 = vld [vmem:[#allocation7 + $0x150] sm:$0xff]
    %v1860 = vld [vmem:[#allocation7 + $0x158] sm:$0xff]
    %v1861 = vld [vmem:[#allocation7 + $0x160] sm:$0xff]
    %v1862 = vld [vmem:[#allocation7 + $0x168] sm:$0xff]
    %v1863 = vld [vmem:[#allocation7 + $0x170] sm:$0xff]
    %v1864 = vld [vmem:[#allocation7 + $0x178] sm:$0xff]
    %v1865 = vld [vmem:[#allocation7 + $0x180] sm:$0xff]
    %v1866 = vld [vmem:[#allocation7 + $0x188] sm:$0xff]
    %v1867 = vld [vmem:[#allocation7 + $0x190] sm:$0xff]
    %v1868 = vld [vmem:[#allocation7 + $0x198] sm:$0xff]
    %v1869 = vld [vmem:[#allocation7 + $0x1a0] sm:$0xff]
    %v1870 = vld [vmem:[#allocation7 + $0x1a8] sm:$0xff]
    %v1871 = vld [vmem:[#allocation7 + $0x1b0] sm:$0xff]
    %v1872 = vld [vmem:[#allocation7 + $0x1b8] sm:$0xff]
    %v1873 = vld [vmem:[#allocation7 + $0x1c0] sm:$0xff]
    %v1874 = vld [vmem:[#allocation7 + $0x1c8] sm:$0xff]
    %v1875 = vld [vmem:[#allocation7 + $0x1d0] sm:$0xff]
    %v1876 = vld [vmem:[#allocation7 + $0x1d8] sm:$0xff]
    %v1877 = vld [vmem:[#allocation7 + $0x1e0] sm:$0xff]
    %v1878 = vld [vmem:[#allocation7 + $0x1e8] sm:$0xff]
    %v1879 = vld [vmem:[#allocation7 + $0x1f0] sm:$0xff]
    %v1880 = vld [vmem:[#allocation7 + $0x1f8] sm:$0xff]
    %v1881 = vld [vmem:[#allocation7 + $0x200] sm:$0xff]
    %v1882 = vld [vmem:[#allocation7 + $0x208] sm:$0xff]
    %v1883 = vld [vmem:[#allocation7 + $0x210] sm:$0xff]
    %v1884 = vld [vmem:[#allocation7 + $0x218] sm:$0xff]
    %v1885 = vld [vmem:[#allocation7 + $0x220] sm:$0xff]
    %v1886 = vld [vmem:[#allocation7 + $0x228] sm:$0xff]
    %v1887 = vld [vmem:[#allocation7 + $0x230] sm:$0xff]
    %v1888 = vld [vmem:[#allocation7 + $0x238] sm:$0xff]
    %v1889 = vld [vmem:[#allocation7 + $0x240] sm:$0xff]
    %v1890 = vld [vmem:[#allocation7 + $0x248] sm:$0xff]
    %v1891 = vld [vmem:[#allocation7 + $0x250] sm:$0xff]
    %v1892 = vld [vmem:[#allocation7 + $0x258] sm:$0xff]
    %v1893 = vld [vmem:[#allocation7 + $0x260] sm:$0xff]
    %v1894 = vld [vmem:[#allocation7 + $0x268] sm:$0xff]
    %v1895 = vld [vmem:[#allocation7 + $0x270] sm:$0xff]
    %v1896 = vld [vmem:[#allocation7 + $0x278] sm:$0xff]
    %v1897 = vld [vmem:[#allocation7 + $0x280] sm:$0xff]
    %v1898 = vld [vmem:[#allocation7 + $0x288] sm:$0xff]
    %v1899 = vld [vmem:[#allocation7 + $0x290] sm:$0xff]
    %v1900 = vld [vmem:[#allocation7 + $0x298] sm:$0xff]
    %v1901 = vld [vmem:[#allocation7 + $0x2a0] sm:$0xff]
    %v1902 = vld [vmem:[#allocation7 + $0x2a8] sm:$0xff]
    %v1903 = vld [vmem:[#allocation7 + $0x2b0] sm:$0xff]
    %v1904 = vld [vmem:[#allocation7 + $0x2b8] sm:$0xff]
    %v1905 = vld [vmem:[#allocation7 + $0x2c0] sm:$0xff]
    %v1906 = vld [vmem:[#allocation7 + $0x2c8] sm:$0xff]
    %v1907 = vld [vmem:[#allocation7 + $0x2d0] sm:$0xff]
    %v1908 = vld [vmem:[#allocation7 + $0x2d8] sm:$0xff]
    %v1909 = vld [vmem:[#allocation7 + $0x2e0] sm:$0xff]
    %v1910 = vld [vmem:[#allocation7 + $0x2e8] sm:$0xff]
    %v1911 = vld [vmem:[#allocation7 + $0x2f0] sm:$0xff]
    %v1912 = vld [vmem:[#allocation7 + $0x2f8] sm:$0xff]
    %v1913 = vld [vmem:[#allocation7 + $0x300] sm:$0xff]
    %v1914 = vld [vmem:[#allocation7 + $0x308] sm:$0xff]
    %v1915 = vld [vmem:[#allocation7 + $0x310] sm:$0xff]
    %v1916 = vld [vmem:[#allocation7 + $0x318] sm:$0xff]
    %v1917 = vld [vmem:[#allocation7 + $0x320] sm:$0xff]
    %v1918 = vld [vmem:[#allocation7 + $0x328] sm:$0xff]
    %v1919 = vld [vmem:[#allocation7 + $0x330] sm:$0xff]
    %v1920 = vld [vmem:[#allocation7 + $0x338] sm:$0xff]
    %v1921 = vld [vmem:[#allocation7 + $0x340] sm:$0xff]
    %v1922 = vld [vmem:[#allocation7 + $0x348] sm:$0xff]
    %v1923 = vld [vmem:[#allocation7 + $0x350] sm:$0xff]
    %v1924 = vld [vmem:[#allocation7 + $0x358] sm:$0xff]
    %v1925 = vld [vmem:[#allocation7 + $0x360] sm:$0xff]
    %v1926 = vld [vmem:[#allocation7 + $0x368] sm:$0xff]
    %v1927 = vld [vmem:[#allocation7 + $0x370] sm:$0xff]
    %v1928 = vld [vmem:[#allocation7 + $0x378] sm:$0xff]
    %v1929 = vld [vmem:[#allocation7 + $0x380] sm:$0xff]
    %v1930 = vld [vmem:[#allocation7 + $0x388] sm:$0xff]
    %v1931 = vld [vmem:[#allocation7 + $0x390] sm:$0xff]
    %v1932 = vld [vmem:[#allocation7 + $0x398] sm:$0xff]
    %v1933 = vld [vmem:[#allocation7 + $0x3a0] sm:$0xff]
    %v1934 = vld [vmem:[#allocation7 + $0x3a8] sm:$0xff]
    %v1935 = vld [vmem:[#allocation7 + $0x3b0] sm:$0xff]
    %v1936 = vld [vmem:[#allocation7 + $0x3b8] sm:$0xff]
    %v1937 = vld [vmem:[#allocation7 + $0x3c0] sm:$0xff]
    %v1938 = vld [vmem:[#allocation7 + $0x3c8] sm:$0xff]
    %v1939 = vld [vmem:[#allocation7 + $0x3d0] sm:$0xff]
    %v1940 = vld [vmem:[#allocation7 + $0x3d8] sm:$0xff]
    %v1941 = vld [vmem:[#allocation7 + $0x3e0] sm:$0xff]
    %v1942 = vld [vmem:[#allocation7 + $0x3e8] sm:$0xff]
    %v1943 = vld [vmem:[#allocation7 + $0x3f0] sm:$0xff]
    %v1944 = vld [vmem:[#allocation7 + $0x3f8] sm:$0xff]
    %v1945 = vperm.slane %v144, 1
    %v1946 = vperm.slane %v145, 1
    %v1947 = vperm.slane %v146, 1
    %v1948 = vperm.slane %v147, 1
    %v2077 = vunpack.c.l.b16 %v1817
    %v2078 = vunpack.c.h.b16 %v1817
    %v2079 = vunpack.c.l.b16 %v1818
    %v2080 = vunpack.c.h.b16 %v1818
    %v2081 = vunpack.c.l.b16 %v1819
    %v2082 = vunpack.c.h.b16 %v1819
    %v2083 = vunpack.c.l.b16 %v1820
    %v2084 = vunpack.c.h.b16 %v1820
    %v2085 = vunpack.c.l.b16 %v1821
    %v2086 = vunpack.c.h.b16 %v1821
    %v2087 = vunpack.c.l.b16 %v1822
    %v2088 = vunpack.c.h.b16 %v1822
    %v2089 = vunpack.c.l.b16 %v1823
    %v2090 = vunpack.c.h.b16 %v1823
    %v2091 = vunpack.c.l.b16 %v1824
    %v2092 = vunpack.c.h.b16 %v1824
    %v2093 = vunpack.c.l.b16 %v1825
    %v2094 = vunpack.c.h.b16 %v1825
    %v2095 = vunpack.c.l.b16 %v1826
    %v2096 = vunpack.c.h.b16 %v1826
    %v2097 = vunpack.c.l.b16 %v1827
    %v2098 = vunpack.c.h.b16 %v1827
    %v2099 = vunpack.c.l.b16 %v1828
    %v2100 = vunpack.c.h.b16 %v1828
    %v2101 = vunpack.c.l.b16 %v1829
    %v2102 = vunpack.c.h.b16 %v1829
    %v2103 = vunpack.c.l.b16 %v1830
    %v2104 = vunpack.c.h.b16 %v1830
    %v2105 = vunpack.c.l.b16 %v1831
    %v2106 = vunpack.c.h.b16 %v1831
    %v2107 = vunpack.c.l.b16 %v1832
    %v2108 = vunpack.c.h.b16 %v1832
    %v2109 = vunpack.c.l.b16 %v1833
    %v2110 = vunpack.c.h.b16 %v1833
    %v2111 = vunpack.c.l.b16 %v1834
    %v2112 = vunpack.c.h.b16 %v1834
    %v2113 = vunpack.c.l.b16 %v1835
    %v2114 = vunpack.c.h.b16 %v1835
    %v2115 = vunpack.c.l.b16 %v1836
    %v2116 = vunpack.c.h.b16 %v1836
    %v2117 = vunpack.c.l.b16 %v1837
    %v2118 = vunpack.c.h.b16 %v1837
    %v2119 = vunpack.c.l.b16 %v1838
    %v2120 = vunpack.c.h.b16 %v1838
    %v2121 = vunpack.c.l.b16 %v1839
    %v2122 = vunpack.c.h.b16 %v1839
    %v2123 = vunpack.c.l.b16 %v1840
    %v2124 = vunpack.c.h.b16 %v1840
    %v2125 = vunpack.c.l.b16 %v1841
    %v2126 = vunpack.c.h.b16 %v1841
    %v2127 = vunpack.c.l.b16 %v1842
    %v2128 = vunpack.c.h.b16 %v1842
    %v2129 = vunpack.c.l.b16 %v1843
    %v2130 = vunpack.c.h.b16 %v1843
    %v2131 = vunpack.c.l.b16 %v1844
    %v2132 = vunpack.c.h.b16 %v1844
    %v2133 = vunpack.c.l.b16 %v1845
    %v2134 = vunpack.c.h.b16 %v1845
    %v2135 = vunpack.c.l.b16 %v1846
    %v2136 = vunpack.c.h.b16 %v1846
    %v2137 = vunpack.c.l.b16 %v1847
    %v2138 = vunpack.c.h.b16 %v1847
    %v2139 = vunpack.c.l.b16 %v1848
    %v2140 = vunpack.c.h.b16 %v1848
    %v2141 = vunpack.c.l.b16 %v1849
    %v2142 = vunpack.c.h.b16 %v1849
    %v2143 = vunpack.c.l.b16 %v1850
    %v2144 = vunpack.c.h.b16 %v1850
    %v2145 = vunpack.c.l.b16 %v1851
    %v2146 = vunpack.c.h.b16 %v1851
    %v2147 = vunpack.c.l.b16 %v1852
    %v2148 = vunpack.c.h.b16 %v1852
    %v2149 = vunpack.c.l.b16 %v1853
    %v2150 = vunpack.c.h.b16 %v1853
    %v2151 = vunpack.c.l.b16 %v1854
    %v2152 = vunpack.c.h.b16 %v1854
    %v2153 = vunpack.c.l.b16 %v1855
    %v2154 = vunpack.c.h.b16 %v1855
    %v2155 = vunpack.c.l.b16 %v1856
    %v2156 = vunpack.c.h.b16 %v1856
    %v2157 = vunpack.c.l.b16 %v1857
    %v2158 = vunpack.c.h.b16 %v1857
    %v2159 = vunpack.c.l.b16 %v1858
    %v2160 = vunpack.c.h.b16 %v1858
    %v2161 = vunpack.c.l.b16 %v1859
    %v2162 = vunpack.c.h.b16 %v1859
    %v2163 = vunpack.c.l.b16 %v1860
    %v2164 = vunpack.c.h.b16 %v1860
    %v2165 = vunpack.c.l.b16 %v1861
    %v2166 = vunpack.c.h.b16 %v1861
    %v2167 = vunpack.c.l.b16 %v1862
    %v2168 = vunpack.c.h.b16 %v1862
    %v2169 = vunpack.c.l.b16 %v1863
    %v2170 = vunpack.c.h.b16 %v1863
    %v2171 = vunpack.c.l.b16 %v1864
    %v2172 = vunpack.c.h.b16 %v1864
    %v2173 = vunpack.c.l.b16 %v1865
    %v2174 = vunpack.c.h.b16 %v1865
    %v2175 = vunpack.c.l.b16 %v1866
    %v2176 = vunpack.c.h.b16 %v1866
    %v2177 = vunpack.c.l.b16 %v1867
    %v2178 = vunpack.c.h.b16 %v1867
    %v2179 = vunpack.c.l.b16 %v1868
    %v2180 = vunpack.c.h.b16 %v1868
    %v2181 = vunpack.c.l.b16 %v1869
    %v2182 = vunpack.c.h.b16 %v1869
    %v2183 = vunpack.c.l.b16 %v1870
    %v2184 = vunpack.c.h.b16 %v1870
    %v2185 = vunpack.c.l.b16 %v1871
    %v2186 = vunpack.c.h.b16 %v1871
    %v2187 = vunpack.c.l.b16 %v1872
    %v2188 = vunpack.c.h.b16 %v1872
    %v2189 = vunpack.c.l.b16 %v1873
    %v2190 = vunpack.c.h.b16 %v1873
    %v2191 = vunpack.c.l.b16 %v1874
    %v2192 = vunpack.c.h.b16 %v1874
    %v2193 = vunpack.c.l.b16 %v1875
    %v2194 = vunpack.c.h.b16 %v1875
    %v2195 = vunpack.c.l.b16 %v1876
    %v2196 = vunpack.c.h.b16 %v1876
    %v2197 = vunpack.c.l.b16 %v1877
    %v2198 = vunpack.c.h.b16 %v1877
    %v2199 = vunpack.c.l.b16 %v1878
    %v2200 = vunpack.c.h.b16 %v1878
    %v2201 = vunpack.c.l.b16 %v1879
    %v2202 = vunpack.c.h.b16 %v1879
    %v2203 = vunpack.c.l.b16 %v1880
    %v2204 = vunpack.c.h.b16 %v1880
    %v2205 = vunpack.c.l.b16 %v1881
    %v2206 = vunpack.c.h.b16 %v1881
    %v2207 = vunpack.c.l.b16 %v1882
    %v2208 = vunpack.c.h.b16 %v1882
    %v2209 = vunpack.c.l.b16 %v1883
    %v2210 = vunpack.c.h.b16 %v1883
    %v2211 = vunpack.c.l.b16 %v1884
    %v2212 = vunpack.c.h.b16 %v1884
    %v2213 = vunpack.c.l.b16 %v1885
    %v2214 = vunpack.c.h.b16 %v1885
    %v2215 = vunpack.c.l.b16 %v1886
    %v2216 = vunpack.c.h.b16 %v1886
    %v2217 = vunpack.c.l.b16 %v1887
    %v2218 = vunpack.c.h.b16 %v1887
    %v2219 = vunpack.c.l.b16 %v1888
    %v2220 = vunpack.c.h.b16 %v1888
    %v2221 = vunpack.c.l.b16 %v1889
    %v2222 = vunpack.c.h.b16 %v1889
    %v2223 = vunpack.c.l.b16 %v1890
    %v2224 = vunpack.c.h.b16 %v1890
    %v2225 = vunpack.c.l.b16 %v1891
    %v2226 = vunpack.c.h.b16 %v1891
    %v2227 = vunpack.c.l.b16 %v1892
    %v2228 = vunpack.c.h.b16 %v1892
    %v2229 = vunpack.c.l.b16 %v1893
    %v2230 = vunpack.c.h.b16 %v1893
    %v2231 = vunpack.c.l.b16 %v1894
    %v2232 = vunpack.c.h.b16 %v1894
    %v2233 = vunpack.c.l.b16 %v1895
    %v2234 = vunpack.c.h.b16 %v1895
    %v2235 = vunpack.c.l.b16 %v1896
    %v2236 = vunpack.c.h.b16 %v1896
    %v2237 = vunpack.c.l.b16 %v1897
    %v2238 = vunpack.c.h.b16 %v1897
    %v2239 = vunpack.c.l.b16 %v1898
    %v2240 = vunpack.c.h.b16 %v1898
    %v2241 = vunpack.c.l.b16 %v1899
    %v2242 = vunpack.c.h.b16 %v1899
    %v2243 = vunpack.c.l.b16 %v1900
    %v2244 = vunpack.c.h.b16 %v1900
    %v2245 = vunpack.c.l.b16 %v1901
    %v2246 = vunpack.c.h.b16 %v1901
    %v2247 = vunpack.c.l.b16 %v1902
    %v2248 = vunpack.c.h.b16 %v1902
    %v2249 = vunpack.c.l.b16 %v1903
    %v2250 = vunpack.c.h.b16 %v1903
    %v2251 = vunpack.c.l.b16 %v1904
    %v2252 = vunpack.c.h.b16 %v1904
    %v2253 = vunpack.c.l.b16 %v1905
    %v2254 = vunpack.c.h.b16 %v1905
    %v2255 = vunpack.c.l.b16 %v1906
    %v2256 = vunpack.c.h.b16 %v1906
    %v2257 = vunpack.c.l.b16 %v1907
    %v2258 = vunpack.c.h.b16 %v1907
    %v2259 = vunpack.c.l.b16 %v1908
    %v2260 = vunpack.c.h.b16 %v1908
    %v2261 = vunpack.c.l.b16 %v1909
    %v2262 = vunpack.c.h.b16 %v1909
    %v2263 = vunpack.c.l.b16 %v1910
    %v2264 = vunpack.c.h.b16 %v1910
    %v2265 = vunpack.c.l.b16 %v1911
    %v2266 = vunpack.c.h.b16 %v1911
    %v2267 = vunpack.c.l.b16 %v1912
    %v2268 = vunpack.c.h.b16 %v1912
    %v2269 = vunpack.c.l.b16 %v1913
    %v2270 = vunpack.c.h.b16 %v1913
    %v2271 = vunpack.c.l.b16 %v1914
    %v2272 = vunpack.c.h.b16 %v1914
    %v2273 = vunpack.c.l.b16 %v1915
    %v2274 = vunpack.c.h.b16 %v1915
    %v2275 = vunpack.c.l.b16 %v1916
    %v2276 = vunpack.c.h.b16 %v1916
    %v2277 = vunpack.c.l.b16 %v1917
    %v2278 = vunpack.c.h.b16 %v1917
    %v2279 = vunpack.c.l.b16 %v1918
    %v2280 = vunpack.c.h.b16 %v1918
    %v2281 = vunpack.c.l.b16 %v1919
    %v2282 = vunpack.c.h.b16 %v1919
    %v2283 = vunpack.c.l.b16 %v1920
    %v2284 = vunpack.c.h.b16 %v1920
    %v2285 = vunpack.c.l.b16 %v1921
    %v2286 = vunpack.c.h.b16 %v1921
    %v2287 = vunpack.c.l.b16 %v1922
    %v2288 = vunpack.c.h.b16 %v1922
    %v2289 = vunpack.c.l.b16 %v1923
    %v2290 = vunpack.c.h.b16 %v1923
    %v2291 = vunpack.c.l.b16 %v1924
    %v2292 = vunpack.c.h.b16 %v1924
    %v2293 = vunpack.c.l.b16 %v1925
    %v2294 = vunpack.c.h.b16 %v1925
    %v2295 = vunpack.c.l.b16 %v1926
    %v2296 = vunpack.c.h.b16 %v1926
    %v2297 = vunpack.c.l.b16 %v1927
    %v2298 = vunpack.c.h.b16 %v1927
    %v2299 = vunpack.c.l.b16 %v1928
    %v2300 = vunpack.c.h.b16 %v1928
    %v2301 = vunpack.c.l.b16 %v1929
    %v2302 = vunpack.c.h.b16 %v1929
    %v2303 = vunpack.c.l.b16 %v1930
    %v2304 = vunpack.c.h.b16 %v1930
    %v2305 = vunpack.c.l.b16 %v1931
    %v2306 = vunpack.c.h.b16 %v1931
    %v2307 = vunpack.c.l.b16 %v1932
    %v2308 = vunpack.c.h.b16 %v1932
    %v2309 = vunpack.c.l.b16 %v1933
    %v2310 = vunpack.c.h.b16 %v1933
    %v2311 = vunpack.c.l.b16 %v1934
    %v2312 = vunpack.c.h.b16 %v1934
    %v2313 = vunpack.c.l.b16 %v1935
    %v2314 = vunpack.c.h.b16 %v1935
    %v2315 = vunpack.c.l.b16 %v1936
    %v2316 = vunpack.c.h.b16 %v1936
    %v2317 = vunpack.c.l.b16 %v1937
    %v2318 = vunpack.c.h.b16 %v1937
    %v2319 = vunpack.c.l.b16 %v1938
    %v2320 = vunpack.c.h.b16 %v1938
    %v2321 = vunpack.c.l.b16 %v1939
    %v2322 = vunpack.c.h.b16 %v1939
    %v2323 = vunpack.c.l.b16 %v1940
    %v2324 = vunpack.c.h.b16 %v1940
    %v2325 = vunpack.c.l.b16 %v1941
    %v2326 = vunpack.c.h.b16 %v1941
    %v2327 = vunpack.c.l.b16 %v1942
    %v2328 = vunpack.c.h.b16 %v1942
    %v2329 = vunpack.c.l.b16 %v1943
    %v2330 = vunpack.c.h.b16 %v1943
    %v2331 = vunpack.c.l.b16 %v1944
    %v2332 = vunpack.c.h.b16 %v1944
    %v2333 = vpack.c.b16 %v2081, %v2077
    %v2334 = vpack.c.b16 %v2082, %v2078
    %v2335 = vpack.c.b16 %v2083, %v2079
    %v2336 = vpack.c.b16 %v2084, %v2080
    %v2337 = vpack.c.b16 %v2089, %v2085
    %v2338 = vpack.c.b16 %v2090, %v2086
    %v2339 = vpack.c.b16 %v2091, %v2087
    %v2340 = vpack.c.b16 %v2092, %v2088
    %v2341 = vpack.c.b16 %v2097, %v2093
    %v2342 = vpack.c.b16 %v2098, %v2094
    %v2343 = vpack.c.b16 %v2099, %v2095
    %v2344 = vpack.c.b16 %v2100, %v2096
    %v2345 = vpack.c.b16 %v2105, %v2101
    %v2346 = vpack.c.b16 %v2106, %v2102
    %v2347 = vpack.c.b16 %v2107, %v2103
    %v2348 = vpack.c.b16 %v2108, %v2104
    %v2349 = vpack.c.b16 %v2113, %v2109
    %v2350 = vpack.c.b16 %v2114, %v2110
    %v2351 = vpack.c.b16 %v2115, %v2111
    %v2352 = vpack.c.b16 %v2116, %v2112
    %v2353 = vpack.c.b16 %v2121, %v2117
    %v2354 = vpack.c.b16 %v2122, %v2118
    %v2355 = vpack.c.b16 %v2123, %v2119
    %v2356 = vpack.c.b16 %v2124, %v2120
    %v2357 = vpack.c.b16 %v2129, %v2125
    %v2358 = vpack.c.b16 %v2130, %v2126
    %v2359 = vpack.c.b16 %v2131, %v2127
    %v2360 = vpack.c.b16 %v2132, %v2128
    %v2361 = vpack.c.b16 %v2137, %v2133
    %v2362 = vpack.c.b16 %v2138, %v2134
    %v2363 = vpack.c.b16 %v2139, %v2135
    %v2364 = vpack.c.b16 %v2140, %v2136
    %v2365 = vpack.c.b16 %v2145, %v2141
    %v2366 = vpack.c.b16 %v2146, %v2142
    %v2367 = vpack.c.b16 %v2147, %v2143
    %v2368 = vpack.c.b16 %v2148, %v2144
    %v2369 = vpack.c.b16 %v2153, %v2149
    %v2370 = vpack.c.b16 %v2154, %v2150
    %v2371 = vpack.c.b16 %v2155, %v2151
    %v2372 = vpack.c.b16 %v2156, %v2152
    %v2373 = vpack.c.b16 %v2161, %v2157
    %v2374 = vpack.c.b16 %v2162, %v2158
    %v2375 = vpack.c.b16 %v2163, %v2159
    %v2376 = vpack.c.b16 %v2164, %v2160
    %v2377 = vpack.c.b16 %v2169, %v2165
    %v2378 = vpack.c.b16 %v2170, %v2166
    %v2379 = vpack.c.b16 %v2171, %v2167
    %v2380 = vpack.c.b16 %v2172, %v2168
    %v2381 = vpack.c.b16 %v2177, %v2173
    %v2382 = vpack.c.b16 %v2178, %v2174
    %v2383 = vpack.c.b16 %v2179, %v2175
    %v2384 = vpack.c.b16 %v2180, %v2176
    %v2385 = vpack.c.b16 %v2185, %v2181
    %v2386 = vpack.c.b16 %v2186, %v2182
    %v2387 = vpack.c.b16 %v2187, %v2183
    %v2388 = vpack.c.b16 %v2188, %v2184
    %v2389 = vpack.c.b16 %v2193, %v2189
    %v2390 = vpack.c.b16 %v2194, %v2190
    %v2391 = vpack.c.b16 %v2195, %v2191
    %v2392 = vpack.c.b16 %v2196, %v2192
    %v2393 = vpack.c.b16 %v2201, %v2197
    %v2394 = vpack.c.b16 %v2202, %v2198
    %v2395 = vpack.c.b16 %v2203, %v2199
    %v2396 = vpack.c.b16 %v2204, %v2200
    %v2397 = vpack.c.b16 %v2209, %v2205
    %v2398 = vpack.c.b16 %v2210, %v2206
    %v2399 = vpack.c.b16 %v2211, %v2207
    %v2400 = vpack.c.b16 %v2212, %v2208
    %v2401 = vpack.c.b16 %v2217, %v2213
    %v2402 = vpack.c.b16 %v2218, %v2214
    %v2403 = vpack.c.b16 %v2219, %v2215
    %v2404 = vpack.c.b16 %v2220, %v2216
    %v2405 = vpack.c.b16 %v2225, %v2221
    %v2406 = vpack.c.b16 %v2226, %v2222
    %v2407 = vpack.c.b16 %v2227, %v2223
    %v2408 = vpack.c.b16 %v2228, %v2224
    %v2409 = vpack.c.b16 %v2233, %v2229
    %v2410 = vpack.c.b16 %v2234, %v2230
    %v2411 = vpack.c.b16 %v2235, %v2231
    %v2412 = vpack.c.b16 %v2236, %v2232
    %v2413 = vpack.c.b16 %v2241, %v2237
    %v2414 = vpack.c.b16 %v2242, %v2238
    %v2415 = vpack.c.b16 %v2243, %v2239
    %v2416 = vpack.c.b16 %v2244, %v2240
    %v2417 = vpack.c.b16 %v2249, %v2245
    %v2418 = vpack.c.b16 %v2250, %v2246
    %v2419 = vpack.c.b16 %v2251, %v2247
    %v2420 = vpack.c.b16 %v2252, %v2248
    %v2421 = vpack.c.b16 %v2257, %v2253
    %v2422 = vpack.c.b16 %v2258, %v2254
    %v2423 = vpack.c.b16 %v2259, %v2255
    %v2424 = vpack.c.b16 %v2260, %v2256
    %v2425 = vpack.c.b16 %v2265, %v2261
    %v2426 = vpack.c.b16 %v2266, %v2262
    %v2427 = vpack.c.b16 %v2267, %v2263
    %v2428 = vpack.c.b16 %v2268, %v2264
    %v2429 = vpack.c.b16 %v2273, %v2269
    %v2430 = vpack.c.b16 %v2274, %v2270
    %v2431 = vpack.c.b16 %v2275, %v2271
    %v2432 = vpack.c.b16 %v2276, %v2272
    %v2433 = vpack.c.b16 %v2281, %v2277
    %v2434 = vpack.c.b16 %v2282, %v2278
    %v2435 = vpack.c.b16 %v2283, %v2279
    %v2436 = vpack.c.b16 %v2284, %v2280
    %v2437 = vpack.c.b16 %v2289, %v2285
    %v2438 = vpack.c.b16 %v2290, %v2286
    %v2439 = vpack.c.b16 %v2291, %v2287
    %v2440 = vpack.c.b16 %v2292, %v2288
    %v2441 = vpack.c.b16 %v2297, %v2293
    %v2442 = vpack.c.b16 %v2298, %v2294
    %v2443 = vpack.c.b16 %v2299, %v2295
    %v2444 = vpack.c.b16 %v2300, %v2296
    %v2445 = vpack.c.b16 %v2305, %v2301
    %v2446 = vpack.c.b16 %v2306, %v2302
    %v2447 = vpack.c.b16 %v2307, %v2303
    %v2448 = vpack.c.b16 %v2308, %v2304
    %v2449 = vpack.c.b16 %v2313, %v2309
    %v2450 = vpack.c.b16 %v2314, %v2310
    %v2451 = vpack.c.b16 %v2315, %v2311
    %v2452 = vpack.c.b16 %v2316, %v2312
    %v2453 = vpack.c.b16 %v2321, %v2317
    %v2454 = vpack.c.b16 %v2322, %v2318
    %v2455 = vpack.c.b16 %v2323, %v2319
    %v2456 = vpack.c.b16 %v2324, %v2320
    %v2457 = vpack.c.b16 %v2329, %v2325
    %v2458 = vpack.c.b16 %v2330, %v2326
    %v2459 = vpack.c.b16 %v2331, %v2327
    %v2460 = vpack.c.b16 %v2332, %v2328
    %2589 = vmatpush.bf16.msra.mxu0 %v2361
    %2590 = vmatpush.bf16.msra.mxu0 %v2357
    %2591 = vmatpush.bf16.msra.mxu0 %v2353
    %2592 = vmatpush.bf16.msra.mxu0 %v2349
    %2593 = vmatpush.bf16.msra.mxu0 %v2345
    %2594 = vmatpush.bf16.msra.mxu0 %v2341
    %2595 = vmatpush.bf16.msra.mxu0 %v2337
    %2596 = vmatpush.bf16.msra.mxu0 %v2333
    %2597 = vmatmul.bf16.gmra.mxu0 %v1813
    %v2598 = vpop.f32.mrf.mxu0
    %v2599 = vadd.f32 %v1945, %v2598
    %v2600 = vpop.f32.mrf.mxu0
    %v2601 = vadd.f32 %v1945, %v2600
    %2602 = vdwg.mxu0
    %2603 = vmatpush.bf16.msra.mxu0 %v2393
    %2604 = vmatpush.bf16.msra.mxu0 %v2389
    %2605 = vmatpush.bf16.msra.mxu0 %v2385
    %2606 = vmatpush.bf16.msra.mxu0 %v2381
    %2607 = vmatpush.bf16.msra.mxu0 %v2377
    %2608 = vmatpush.bf16.msra.mxu0 %v2373
    %2609 = vmatpush.bf16.msra.mxu0 %v2369
    %2610 = vmatpush.bf16.msra.mxu0 %v2365
    %2611 = vmatmul.bf16.gmra.mxu0 %v1814
    %v2612 = vpop.f32.mrf.mxu0
    %v2613 = vadd.f32 %v2599, %v2612
    %v2614 = vpop.f32.mrf.mxu0
    %v2615 = vadd.f32 %v2601, %v2614
    %2616 = vdwg.mxu0
    %2617 = vmatpush.bf16.msra.mxu0 %v2425
    %2618 = vmatpush.bf16.msra.mxu0 %v2421
    %2619 = vmatpush.bf16.msra.mxu0 %v2417
    %2620 = vmatpush.bf16.msra.mxu0 %v2413
    %2621 = vmatpush.bf16.msra.mxu0 %v2409
    %2622 = vmatpush.bf16.msra.mxu0 %v2405
    %2623 = vmatpush.bf16.msra.mxu0 %v2401
    %2624 = vmatpush.bf16.msra.mxu0 %v2397
    %2625 = vmatmul.bf16.gmra.mxu0 %v1815
    %v2626 = vpop.f32.mrf.mxu0
    %v2627 = vadd.f32 %v2613, %v2626
    %v2628 = vpop.f32.mrf.mxu0
    %v2629 = vadd.f32 %v2615, %v2628
    %2630 = vdwg.mxu0
    %2631 = vmatpush.bf16.msra.mxu0 %v2457
    %2632 = vmatpush.bf16.msra.mxu0 %v2453
    %2633 = vmatpush.bf16.msra.mxu0 %v2449
    %2634 = vmatpush.bf16.msra.mxu0 %v2445
    %2635 = vmatpush.bf16.msra.mxu0 %v2441
    %2636 = vmatpush.bf16.msra.mxu0 %v2437
    %2637 = vmatpush.bf16.msra.mxu0 %v2433
    %2638 = vmatpush.bf16.msra.mxu0 %v2429
    %2639 = vmatmul.bf16.gmra.mxu0 %v1816
    %v2640 = vpop.f32.mrf.mxu0
    %v2641 = vadd.f32 %v2627, %v2640
    %v2642 = vpop.f32.mrf.mxu0
    %v2643 = vadd.f32 %v2629, %v2642
    %2644 = vdwg.mxu0
    %2645 = vmatpush.bf16.msra.mxu0 %v2362
    %2646 = vmatpush.bf16.msra.mxu0 %v2358
    %2647 = vmatpush.bf16.msra.mxu0 %v2354
    %2648 = vmatpush.bf16.msra.mxu0 %v2350
    %2649 = vmatpush.bf16.msra.mxu0 %v2346
    %2650 = vmatpush.bf16.msra.mxu0 %v2342
    %2651 = vmatpush.bf16.msra.mxu0 %v2338
    %2652 = vmatpush.bf16.msra.mxu0 %v2334
    %2653 = vmatmul.bf16.gmra.mxu0 %v1813
    %v2654 = vpop.f32.mrf.mxu0
    %v2655 = vadd.f32 %v1946, %v2654
    %v2656 = vpop.f32.mrf.mxu0
    %v2657 = vadd.f32 %v1946, %v2656
    %2658 = vdwg.mxu0
    %2659 = vmatpush.bf16.msra.mxu0 %v2394
    %2660 = vmatpush.bf16.msra.mxu0 %v2390
    %2661 = vmatpush.bf16.msra.mxu0 %v2386
    %2662 = vmatpush.bf16.msra.mxu0 %v2382
    %2663 = vmatpush.bf16.msra.mxu0 %v2378
    %2664 = vmatpush.bf16.msra.mxu0 %v2374
    %2665 = vmatpush.bf16.msra.mxu0 %v2370
    %2666 = vmatpush.bf16.msra.mxu0 %v2366
    %2667 = vmatmul.bf16.gmra.mxu0 %v1814
    %v2668 = vpop.f32.mrf.mxu0
    %v2669 = vadd.f32 %v2655, %v2668
    %v2670 = vpop.f32.mrf.mxu0
    %v2671 = vadd.f32 %v2657, %v2670
    %2672 = vdwg.mxu0
    %2673 = vmatpush.bf16.msra.mxu0 %v2426
    %2674 = vmatpush.bf16.msra.mxu0 %v2422
    %2675 = vmatpush.bf16.msra.mxu0 %v2418
    %2676 = vmatpush.bf16.msra.mxu0 %v2414
    %2677 = vmatpush.bf16.msra.mxu0 %v2410
    %2678 = vmatpush.bf16.msra.mxu0 %v2406
    %2679 = vmatpush.bf16.msra.mxu0 %v2402
    %2680 = vmatpush.bf16.msra.mxu0 %v2398
    %2681 = vmatmul.bf16.gmra.mxu0 %v1815
    %v2682 = vpop.f32.mrf.mxu0
    %v2683 = vadd.f32 %v2669, %v2682
    %v2684 = vpop.f32.mrf.mxu0
    %v2685 = vadd.f32 %v2671, %v2684
    %2686 = vdwg.mxu0
    %2687 = vmatpush.bf16.msra.mxu0 %v2458
    %2688 = vmatpush.bf16.msra.mxu0 %v2454
    %2689 = vmatpush.bf16.msra.mxu0 %v2450
    %2690 = vmatpush.bf16.msra.mxu0 %v2446
    %2691 = vmatpush.bf16.msra.mxu0 %v2442
    %2692 = vmatpush.bf16.msra.mxu0 %v2438
    %2693 = vmatpush.bf16.msra.mxu0 %v2434
    %2694 = vmatpush.bf16.msra.mxu0 %v2430
    %2695 = vmatmul.bf16.gmra.mxu0 %v1816
    %v2696 = vpop.f32.mrf.mxu0
    %v2697 = vadd.f32 %v2683, %v2696
    %v2698 = vpop.f32.mrf.mxu0
    %v2699 = vadd.f32 %v2685, %v2698
    %2700 = vdwg.mxu0
    %2701 = vmatpush.bf16.msra.mxu0 %v2363
    %2702 = vmatpush.bf16.msra.mxu0 %v2359
    %2703 = vmatpush.bf16.msra.mxu0 %v2355
    %2704 = vmatpush.bf16.msra.mxu0 %v2351
    %2705 = vmatpush.bf16.msra.mxu0 %v2347
    %2706 = vmatpush.bf16.msra.mxu0 %v2343
    %2707 = vmatpush.bf16.msra.mxu0 %v2339
    %2708 = vmatpush.bf16.msra.mxu0 %v2335
    %2709 = vmatmul.bf16.gmra.mxu0 %v1813
    %v2710 = vpop.f32.mrf.mxu0
    %v2711 = vadd.f32 %v1947, %v2710
    %v2712 = vpop.f32.mrf.mxu0
    %v2713 = vadd.f32 %v1947, %v2712
    %2714 = vdwg.mxu0
    %2715 = vmatpush.bf16.msra.mxu0 %v2395
    %2716 = vmatpush.bf16.msra.mxu0 %v2391
    %2717 = vmatpush.bf16.msra.mxu0 %v2387
    %2718 = vmatpush.bf16.msra.mxu0 %v2383
    %2719 = vmatpush.bf16.msra.mxu0 %v2379
    %2720 = vmatpush.bf16.msra.mxu0 %v2375
    %2721 = vmatpush.bf16.msra.mxu0 %v2371
    %2722 = vmatpush.bf16.msra.mxu0 %v2367
    %2723 = vmatmul.bf16.gmra.mxu0 %v1814
    %v2724 = vpop.f32.mrf.mxu0
    %v2725 = vadd.f32 %v2711, %v2724
    %v2726 = vpop.f32.mrf.mxu0
    %v2727 = vadd.f32 %v2713, %v2726
    %2728 = vdwg.mxu0
    %2729 = vmatpush.bf16.msra.mxu0 %v2427
    %2730 = vmatpush.bf16.msra.mxu0 %v2423
    %2731 = vmatpush.bf16.msra.mxu0 %v2419
    %2732 = vmatpush.bf16.msra.mxu0 %v2415
    %2733 = vmatpush.bf16.msra.mxu0 %v2411
    %2734 = vmatpush.bf16.msra.mxu0 %v2407
    %2735 = vmatpush.bf16.msra.mxu0 %v2403
    %2736 = vmatpush.bf16.msra.mxu0 %v2399
    %2737 = vmatmul.bf16.gmra.mxu0 %v1815
    %v2738 = vpop.f32.mrf.mxu0
    %v2739 = vadd.f32 %v2725, %v2738
    %v2740 = vpop.f32.mrf.mxu0
    %v2741 = vadd.f32 %v2727, %v2740
    %2742 = vdwg.mxu0
    %2743 = vmatpush.bf16.msra.mxu0 %v2459
    %2744 = vmatpush.bf16.msra.mxu0 %v2455
    %2745 = vmatpush.bf16.msra.mxu0 %v2451
    %2746 = vmatpush.bf16.msra.mxu0 %v2447
    %2747 = vmatpush.bf16.msra.mxu0 %v2443
    %2748 = vmatpush.bf16.msra.mxu0 %v2439
    %2749 = vmatpush.bf16.msra.mxu0 %v2435
    %2750 = vmatpush.bf16.msra.mxu0 %v2431
    %2751 = vmatmul.bf16.gmra.mxu0 %v1816
    %v2752 = vpop.f32.mrf.mxu0
    %v2753 = vadd.f32 %v2739, %v2752
    %v2754 = vpop.f32.mrf.mxu0
    %v2755 = vadd.f32 %v2741, %v2754
    %2756 = vdwg.mxu0
    %2757 = vmatpush.bf16.msra.mxu0 %v2364
    %2758 = vmatpush.bf16.msra.mxu0 %v2360
    %2759 = vmatpush.bf16.msra.mxu0 %v2356
    %2760 = vmatpush.bf16.msra.mxu0 %v2352
    %2761 = vmatpush.bf16.msra.mxu0 %v2348
    %2762 = vmatpush.bf16.msra.mxu0 %v2344
    %2763 = vmatpush.bf16.msra.mxu0 %v2340
    %2764 = vmatpush.bf16.msra.mxu0 %v2336
    %2765 = vmatmul.bf16.gmra.mxu0 %v1813
    %v2766 = vpop.f32.mrf.mxu0
    %v2767 = vadd.f32 %v1948, %v2766
    %v2768 = vpop.f32.mrf.mxu0
    %v2769 = vadd.f32 %v1948, %v2768
    %2770 = vdwg.mxu0
    %2771 = vmatpush.bf16.msra.mxu0 %v2396
    %2772 = vmatpush.bf16.msra.mxu0 %v2392
    %2773 = vmatpush.bf16.msra.mxu0 %v2388
    %2774 = vmatpush.bf16.msra.mxu0 %v2384
    %2775 = vmatpush.bf16.msra.mxu0 %v2380
    %2776 = vmatpush.bf16.msra.mxu0 %v2376
    %2777 = vmatpush.bf16.msra.mxu0 %v2372
    %2778 = vmatpush.bf16.msra.mxu0 %v2368
    %2779 = vmatmul.bf16.gmra.mxu0 %v1814
    %v2780 = vpop.f32.mrf.mxu0
    %v2781 = vadd.f32 %v2767, %v2780
    %v2782 = vpop.f32.mrf.mxu0
    %v2783 = vadd.f32 %v2769, %v2782
    %2784 = vdwg.mxu0
    %2785 = vmatpush.bf16.msra.mxu0 %v2428
    %2786 = vmatpush.bf16.msra.mxu0 %v2424
    %2787 = vmatpush.bf16.msra.mxu0 %v2420
    %2788 = vmatpush.bf16.msra.mxu0 %v2416
    %2789 = vmatpush.bf16.msra.mxu0 %v2412
    %2790 = vmatpush.bf16.msra.mxu0 %v2408
    %2791 = vmatpush.bf16.msra.mxu0 %v2404
    %2792 = vmatpush.bf16.msra.mxu0 %v2400
    %2793 = vmatmul.bf16.gmra.mxu0 %v1815
    %v2794 = vpop.f32.mrf.mxu0
    %v2795 = vadd.f32 %v2781, %v2794
    %v2796 = vpop.f32.mrf.mxu0
    %v2797 = vadd.f32 %v2783, %v2796
    %2798 = vdwg.mxu0
    %2799 = vmatpush.bf16.msra.mxu0 %v2460
    %2800 = vmatpush.bf16.msra.mxu0 %v2456
    %2801 = vmatpush.bf16.msra.mxu0 %v2452
    %2802 = vmatpush.bf16.msra.mxu0 %v2448
    %2803 = vmatpush.bf16.msra.mxu0 %v2444
    %2804 = vmatpush.bf16.msra.mxu0 %v2440
    %2805 = vmatpush.bf16.msra.mxu0 %v2436
    %2806 = vmatpush.bf16.msra.mxu0 %v2432
    %2807 = vmatmul.bf16.gmra.mxu0 %v1816
    %v2808 = vpop.f32.mrf.mxu0
    %v2809 = vadd.f32 %v2795, %v2808
    %v2810 = vpop.f32.mrf.mxu0
    %v2811 = vadd.f32 %v2797, %v2810
    %2812 = vdwg.mxu0
    %v2813 = vmax.f32 %v2641, 0.0
    %v2814 = vmax.f32 %v2697, 0.0
    %v2815 = vmax.f32 %v2753, 0.0
    %v2816 = vmax.f32 %v2809, 0.0
    %v2817 = vmax.f32 %v2643, 0.0
    %v2818 = vmax.f32 %v2699, 0.0
    %v2819 = vmax.f32 %v2755, 0.0
    %v2820 = vmax.f32 %v2811, 0.0
    %2821 = vst [vmem:[#allocation14] sm:$0xff] %v2813
    %2822 = vst [vmem:[#allocation14 + $0x8] sm:$0xff] %v2814
    %2823 = vst [vmem:[#allocation14 + $0x10] sm:$0xff] %v2815
    %2824 = vst [vmem:[#allocation14 + $0x18] sm:$0xff] %v2816
    %2825 = vst [vmem:[#allocation14 + $0x60] sm:$0xff] %v2817
    %2826 = vst [vmem:[#allocation14 + $0x68] sm:$0xff] %v2818
    %2827 = vst [vmem:[#allocation14 + $0x70] sm:$0xff] %v2819
    %2828 = vst [vmem:[#allocation14 + $0x78] sm:$0xff] %v2820
    %v2829 = vld [vmem:[%s1] sm:$0xff]
    %v2830 = vld [vmem:[%s1 + $0x8] sm:$0xff]
    %v2831 = vpack.c.bf16 %v2830, %v2829
    %v2832 = vld [vmem:[%s5] sm:$0xff]
    %v2833 = vperm.slane %v144, 2
    %v2834 = vperm.slane %v145, 2
    %v2835 = vperm.slane %v146, 2
    %v2836 = vperm.slane %v147, 2
    %2838 = vst [vmem:[#allocation1] ss:$4 sm:$0xff] %v2832
    %v2839 = vld.sshfl [vmem:[#allocation1] sm:$0xff pattern:$0x73625140]
    %v2840 = vld.sshfl [vmem:[#allocation1 + $0x8] sm:$0xff pattern:$0x73625140]
    %v2841 = vld.sshfl [vmem:[#allocation1 + $0x10] sm:$0xff pattern:$0x73625140]
    %v2842 = vld.sshfl [vmem:[#allocation1 + $0x18] sm:$0xff pattern:$0x73625140]
    %vm2843 = vcmask 31744
    %v2845 = vsel %vm2843, %v2831, 0
    %vm2847 = vcmask 1041408
    %v2848 = vsel %vm2847, %v2839, 0
    %v2850 = vsel %vm2847, %v2840, 0
    %v2852 = vsel %vm2847, %v2841, 0
    %v2854 = vsel %vm2847, %v2842, 0
    %2856 = vmatpush.bf16.msra.mxu0 0
    %2857 = vmatpush.bf16.msra.mxu0 0
    %2858 = vmatpush.bf16.msra.mxu0 0
    %2859 = vmatpush.bf16.msra.mxu0 0
    %2860 = vmatpush.bf16.msra.mxu0 0
    %2861 = vmatpush.bf16.msra.mxu0 0
    %2862 = vmatpush.bf16.msra.mxu0 0
    %2863 = vmatpush.bf16.msra.mxu0 %v2848
    %2864 = vmatmul.bf16.gmra.mxu0 %v2845
    %v2865 = vpop.f32.mrf.mxu0
    %v2866 = vadd.f32 %v2833, %v2865
    %v2867 = vpop.f32.mrf.mxu0
    %v2868 = vadd.f32 %v2833, %v2867
    %2869 = vdwg.mxu0
    %2870 = vmatpush.bf16.msra.mxu0 0
    %2871 = vmatpush.bf16.msra.mxu0 0
    %2872 = vmatpush.bf16.msra.mxu0 0
    %2873 = vmatpush.bf16.msra.mxu0 0
    %2874 = vmatpush.bf16.msra.mxu0 0
    %2875 = vmatpush.bf16.msra.mxu0 0
    %2876 = vmatpush.bf16.msra.mxu0 0
    %2877 = vmatpush.bf16.msra.mxu0 %v2850
    %2878 = vmatmul.bf16.gmra.mxu0 %v2845
    %v2879 = vpop.f32.mrf.mxu0
    %v2880 = vadd.f32 %v2834, %v2879
    %v2881 = vpop.f32.mrf.mxu0
    %v2882 = vadd.f32 %v2834, %v2881
    %2883 = vdwg.mxu0
    %2884 = vmatpush.bf16.msra.mxu0 0
    %2885 = vmatpush.bf16.msra.mxu0 0
    %2886 = vmatpush.bf16.msra.mxu0 0
    %2887 = vmatpush.bf16.msra.mxu0 0
    %2888 = vmatpush.bf16.msra.mxu0 0
    %2889 = vmatpush.bf16.msra.mxu0 0
    %2890 = vmatpush.bf16.msra.mxu0 0
    %2891 = vmatpush.bf16.msra.mxu0 %v2852
    %2892 = vmatmul.bf16.gmra.mxu0 %v2845
    %v2893 = vpop.f32.mrf.mxu0
    %v2894 = vadd.f32 %v2835, %v2893
    %v2895 = vpop.f32.mrf.mxu0
    %v2896 = vadd.f32 %v2835, %v2895
    %2897 = vdwg.mxu0
    %2898 = vmatpush.bf16.msra.mxu0 0
    %2899 = vmatpush.bf16.msra.mxu0 0
    %2900 = vmatpush.bf16.msra.mxu0 0
    %2901 = vmatpush.bf16.msra.mxu0 0
    %2902 = vmatpush.bf16.msra.mxu0 0
    %2903 = vmatpush.bf16.msra.mxu0 0
    %2904 = vmatpush.bf16.msra.mxu0 0
    %2905 = vmatpush.bf16.msra.mxu0 %v2854
    %2906 = vmatmul.bf16.gmra.mxu0 %v2845
    %v2907 = vpop.f32.mrf.mxu0
    %v2908 = vadd.f32 %v2836, %v2907
    %v2909 = vpop.f32.mrf.mxu0
    %v2910 = vadd.f32 %v2836, %v2909
    %2911 = vdwg.mxu0
    %v2912 = vmax.f32 %v2866, 0.0
    %v2913 = vmax.f32 %v2880, 0.0
    %v2914 = vmax.f32 %v2894, 0.0
    %v2915 = vmax.f32 %v2908, 0.0
    %v2916 = vmax.f32 %v2868, 0.0
    %v2917 = vmax.f32 %v2882, 0.0
    %v2918 = vmax.f32 %v2896, 0.0
    %v2919 = vmax.f32 %v2910, 0.0
    %v2920 = vpack.c.bf16 %v2916, %v2912
    %v2921 = vpack.c.bf16 %v2917, %v2913
    %v2922 = vpack.c.bf16 %v2918, %v2914
    %v2923 = vpack.c.bf16 %v2919, %v2915
    %v2924 = vld [vmem:[#allocation8] sm:$0xff]
    %v2925 = vld [vmem:[#allocation8 + $0x8] sm:$0xff]
    %v2926 = vld [vmem:[#allocation8 + $0x10] sm:$0xff]
    %v2927 = vld [vmem:[#allocation8 + $0x18] sm:$0xff]
    %v2928 = vld [vmem:[#allocation8 + $0x20] sm:$0xff]
    %v2929 = vld [vmem:[#allocation8 + $0x28] sm:$0xff]
    %v2930 = vld [vmem:[#allocation8 + $0x30] sm:$0xff]
    %v2931 = vld [vmem:[#allocation8 + $0x38] sm:$0xff]
    %v2932 = vld [vmem:[#allocation8 + $0x40] sm:$0xff]
    %v2933 = vld [vmem:[#allocation8 + $0x48] sm:$0xff]
    %v2934 = vld [vmem:[#allocation8 + $0x50] sm:$0xff]
    %v2935 = vld [vmem:[#allocation8 + $0x58] sm:$0xff]
    %v2936 = vld [vmem:[#allocation8 + $0x60] sm:$0xff]
    %v2937 = vld [vmem:[#allocation8 + $0x68] sm:$0xff]
    %v2938 = vld [vmem:[#allocation8 + $0x70] sm:$0xff]
    %v2939 = vld [vmem:[#allocation8 + $0x78] sm:$0xff]
    %v2940 = vld [vmem:[#allocation8 + $0x80] sm:$0xff]
    %v2941 = vld [vmem:[#allocation8 + $0x88] sm:$0xff]
    %v2942 = vld [vmem:[#allocation8 + $0x90] sm:$0xff]
    %v2943 = vld [vmem:[#allocation8 + $0x98] sm:$0xff]
    %v2944 = vld [vmem:[#allocation8 + $0xa0] sm:$0xff]
    %v2945 = vld [vmem:[#allocation8 + $0xa8] sm:$0xff]
    %v2946 = vld [vmem:[#allocation8 + $0xb0] sm:$0xff]
    %v2947 = vld [vmem:[#allocation8 + $0xb8] sm:$0xff]
    %v2948 = vld [vmem:[#allocation8 + $0xc0] sm:$0xff]
    %v2949 = vld [vmem:[#allocation8 + $0xc8] sm:$0xff]
    %v2950 = vld [vmem:[#allocation8 + $0xd0] sm:$0xff]
    %v2951 = vld [vmem:[#allocation8 + $0xd8] sm:$0xff]
    %v2952 = vld [vmem:[#allocation8 + $0xe0] sm:$0xff]
    %v2953 = vld [vmem:[#allocation8 + $0xe8] sm:$0xff]
    %v2954 = vld [vmem:[#allocation8 + $0xf0] sm:$0xff]
    %v2955 = vld [vmem:[#allocation8 + $0xf8] sm:$0xff]
    %v2956 = vld [vmem:[#allocation8 + $0x100] sm:$0xff]
    %v2957 = vld [vmem:[#allocation8 + $0x108] sm:$0xff]
    %v2958 = vld [vmem:[#allocation8 + $0x110] sm:$0xff]
    %v2959 = vld [vmem:[#allocation8 + $0x118] sm:$0xff]
    %v2960 = vld [vmem:[#allocation8 + $0x120] sm:$0xff]
    %v2961 = vld [vmem:[#allocation8 + $0x128] sm:$0xff]
    %v2962 = vld [vmem:[#allocation8 + $0x130] sm:$0xff]
    %v2963 = vld [vmem:[#allocation8 + $0x138] sm:$0xff]
    %v2964 = vld [vmem:[#allocation8 + $0x140] sm:$0xff]
    %v2965 = vld [vmem:[#allocation8 + $0x148] sm:$0xff]
    %v2966 = vld [vmem:[#allocation8 + $0x150] sm:$0xff]
    %v2967 = vld [vmem:[#allocation8 + $0x158] sm:$0xff]
    %v2968 = vld [vmem:[#allocation8 + $0x160] sm:$0xff]
    %v2969 = vld [vmem:[#allocation8 + $0x168] sm:$0xff]
    %v2970 = vld [vmem:[#allocation8 + $0x170] sm:$0xff]
    %v2971 = vld [vmem:[#allocation8 + $0x178] sm:$0xff]
    %v2972 = vld [vmem:[#allocation8 + $0x180] sm:$0xff]
    %v2973 = vld [vmem:[#allocation8 + $0x188] sm:$0xff]
    %v2974 = vld [vmem:[#allocation8 + $0x190] sm:$0xff]
    %v2975 = vld [vmem:[#allocation8 + $0x198] sm:$0xff]
    %v2976 = vld [vmem:[#allocation8 + $0x1a0] sm:$0xff]
    %v2977 = vld [vmem:[#allocation8 + $0x1a8] sm:$0xff]
    %v2978 = vld [vmem:[#allocation8 + $0x1b0] sm:$0xff]
    %v2979 = vld [vmem:[#allocation8 + $0x1b8] sm:$0xff]
    %v2980 = vld [vmem:[#allocation8 + $0x1c0] sm:$0xff]
    %v2981 = vld [vmem:[#allocation8 + $0x1c8] sm:$0xff]
    %v2982 = vld [vmem:[#allocation8 + $0x1d0] sm:$0xff]
    %v2983 = vld [vmem:[#allocation8 + $0x1d8] sm:$0xff]
    %v2984 = vld [vmem:[#allocation8 + $0x1e0] sm:$0xff]
    %v2985 = vld [vmem:[#allocation8 + $0x1e8] sm:$0xff]
    %v2986 = vld [vmem:[#allocation8 + $0x1f0] sm:$0xff]
    %v2987 = vld [vmem:[#allocation8 + $0x1f8] sm:$0xff]
    %v2988 = vld [vmem:[#allocation8 + $0x200] sm:$0xff]
    %v2989 = vld [vmem:[#allocation8 + $0x208] sm:$0xff]
    %v2990 = vld [vmem:[#allocation8 + $0x210] sm:$0xff]
    %v2991 = vld [vmem:[#allocation8 + $0x218] sm:$0xff]
    %v2992 = vld [vmem:[#allocation8 + $0x220] sm:$0xff]
    %v2993 = vld [vmem:[#allocation8 + $0x228] sm:$0xff]
    %v2994 = vld [vmem:[#allocation8 + $0x230] sm:$0xff]
    %v2995 = vld [vmem:[#allocation8 + $0x238] sm:$0xff]
    %v2996 = vld [vmem:[#allocation8 + $0x240] sm:$0xff]
    %v2997 = vld [vmem:[#allocation8 + $0x248] sm:$0xff]
    %v2998 = vld [vmem:[#allocation8 + $0x250] sm:$0xff]
    %v2999 = vld [vmem:[#allocation8 + $0x258] sm:$0xff]
    %v3000 = vld [vmem:[#allocation8 + $0x260] sm:$0xff]
    %v3001 = vld [vmem:[#allocation8 + $0x268] sm:$0xff]
    %v3002 = vld [vmem:[#allocation8 + $0x270] sm:$0xff]
    %v3003 = vld [vmem:[#allocation8 + $0x278] sm:$0xff]
    %v3004 = vld [vmem:[#allocation8 + $0x280] sm:$0xff]
    %v3005 = vld [vmem:[#allocation8 + $0x288] sm:$0xff]
    %v3006 = vld [vmem:[#allocation8 + $0x290] sm:$0xff]
    %v3007 = vld [vmem:[#allocation8 + $0x298] sm:$0xff]
    %v3008 = vld [vmem:[#allocation8 + $0x2a0] sm:$0xff]
    %v3009 = vld [vmem:[#allocation8 + $0x2a8] sm:$0xff]
    %v3010 = vld [vmem:[#allocation8 + $0x2b0] sm:$0xff]
    %v3011 = vld [vmem:[#allocation8 + $0x2b8] sm:$0xff]
    %v3012 = vld [vmem:[#allocation8 + $0x2c0] sm:$0xff]
    %v3013 = vld [vmem:[#allocation8 + $0x2c8] sm:$0xff]
    %v3014 = vld [vmem:[#allocation8 + $0x2d0] sm:$0xff]
    %v3015 = vld [vmem:[#allocation8 + $0x2d8] sm:$0xff]
    %v3016 = vld [vmem:[#allocation8 + $0x2e0] sm:$0xff]
    %v3017 = vld [vmem:[#allocation8 + $0x2e8] sm:$0xff]
    %v3018 = vld [vmem:[#allocation8 + $0x2f0] sm:$0xff]
    %v3019 = vld [vmem:[#allocation8 + $0x2f8] sm:$0xff]
    %v3020 = vld [vmem:[#allocation8 + $0x300] sm:$0xff]
    %v3021 = vld [vmem:[#allocation8 + $0x308] sm:$0xff]
    %v3022 = vld [vmem:[#allocation8 + $0x310] sm:$0xff]
    %v3023 = vld [vmem:[#allocation8 + $0x318] sm:$0xff]
    %v3024 = vld [vmem:[#allocation8 + $0x320] sm:$0xff]
    %v3025 = vld [vmem:[#allocation8 + $0x328] sm:$0xff]
    %v3026 = vld [vmem:[#allocation8 + $0x330] sm:$0xff]
    %v3027 = vld [vmem:[#allocation8 + $0x338] sm:$0xff]
    %v3028 = vld [vmem:[#allocation8 + $0x340] sm:$0xff]
    %v3029 = vld [vmem:[#allocation8 + $0x348] sm:$0xff]
    %v3030 = vld [vmem:[#allocation8 + $0x350] sm:$0xff]
    %v3031 = vld [vmem:[#allocation8 + $0x358] sm:$0xff]
    %v3032 = vld [vmem:[#allocation8 + $0x360] sm:$0xff]
    %v3033 = vld [vmem:[#allocation8 + $0x368] sm:$0xff]
    %v3034 = vld [vmem:[#allocation8 + $0x370] sm:$0xff]
    %v3035 = vld [vmem:[#allocation8 + $0x378] sm:$0xff]
    %v3036 = vld [vmem:[#allocation8 + $0x380] sm:$0xff]
    %v3037 = vld [vmem:[#allocation8 + $0x388] sm:$0xff]
    %v3038 = vld [vmem:[#allocation8 + $0x390] sm:$0xff]
    %v3039 = vld [vmem:[#allocation8 + $0x398] sm:$0xff]
    %v3040 = vld [vmem:[#allocation8 + $0x3a0] sm:$0xff]
    %v3041 = vld [vmem:[#allocation8 + $0x3a8] sm:$0xff]
    %v3042 = vld [vmem:[#allocation8 + $0x3b0] sm:$0xff]
    %v3043 = vld [vmem:[#allocation8 + $0x3b8] sm:$0xff]
    %v3044 = vld [vmem:[#allocation8 + $0x3c0] sm:$0xff]
    %v3045 = vld [vmem:[#allocation8 + $0x3c8] sm:$0xff]
    %v3046 = vld [vmem:[#allocation8 + $0x3d0] sm:$0xff]
    %v3047 = vld [vmem:[#allocation8 + $0x3d8] sm:$0xff]
    %v3048 = vld [vmem:[#allocation8 + $0x3e0] sm:$0xff]
    %v3049 = vld [vmem:[#allocation8 + $0x3e8] sm:$0xff]
    %v3050 = vld [vmem:[#allocation8 + $0x3f0] sm:$0xff]
    %v3051 = vld [vmem:[#allocation8 + $0x3f8] sm:$0xff]
    %v3052 = vperm.slane %v144, 3
    %v3053 = vperm.slane %v145, 3
    %v3054 = vperm.slane %v146, 3
    %v3055 = vperm.slane %v147, 3
    %v3184 = vunpack.c.l.b16 %v2924
    %v3185 = vunpack.c.h.b16 %v2924
    %v3186 = vunpack.c.l.b16 %v2925
    %v3187 = vunpack.c.h.b16 %v2925
    %v3188 = vunpack.c.l.b16 %v2926
    %v3189 = vunpack.c.h.b16 %v2926
    %v3190 = vunpack.c.l.b16 %v2927
    %v3191 = vunpack.c.h.b16 %v2927
    %v3192 = vunpack.c.l.b16 %v2928
    %v3193 = vunpack.c.h.b16 %v2928
    %v3194 = vunpack.c.l.b16 %v2929
    %v3195 = vunpack.c.h.b16 %v2929
    %v3196 = vunpack.c.l.b16 %v2930
    %v3197 = vunpack.c.h.b16 %v2930
    %v3198 = vunpack.c.l.b16 %v2931
    %v3199 = vunpack.c.h.b16 %v2931
    %v3200 = vunpack.c.l.b16 %v2932
    %v3201 = vunpack.c.h.b16 %v2932
    %v3202 = vunpack.c.l.b16 %v2933
    %v3203 = vunpack.c.h.b16 %v2933
    %v3204 = vunpack.c.l.b16 %v2934
    %v3205 = vunpack.c.h.b16 %v2934
    %v3206 = vunpack.c.l.b16 %v2935
    %v3207 = vunpack.c.h.b16 %v2935
    %v3208 = vunpack.c.l.b16 %v2936
    %v3209 = vunpack.c.h.b16 %v2936
    %v3210 = vunpack.c.l.b16 %v2937
    %v3211 = vunpack.c.h.b16 %v2937
    %v3212 = vunpack.c.l.b16 %v2938
    %v3213 = vunpack.c.h.b16 %v2938
    %v3214 = vunpack.c.l.b16 %v2939
    %v3215 = vunpack.c.h.b16 %v2939
    %v3216 = vunpack.c.l.b16 %v2940
    %v3217 = vunpack.c.h.b16 %v2940
    %v3218 = vunpack.c.l.b16 %v2941
    %v3219 = vunpack.c.h.b16 %v2941
    %v3220 = vunpack.c.l.b16 %v2942
    %v3221 = vunpack.c.h.b16 %v2942
    %v3222 = vunpack.c.l.b16 %v2943
    %v3223 = vunpack.c.h.b16 %v2943
    %v3224 = vunpack.c.l.b16 %v2944
    %v3225 = vunpack.c.h.b16 %v2944
    %v3226 = vunpack.c.l.b16 %v2945
    %v3227 = vunpack.c.h.b16 %v2945
    %v3228 = vunpack.c.l.b16 %v2946
    %v3229 = vunpack.c.h.b16 %v2946
    %v3230 = vunpack.c.l.b16 %v2947
    %v3231 = vunpack.c.h.b16 %v2947
    %v3232 = vunpack.c.l.b16 %v2948
    %v3233 = vunpack.c.h.b16 %v2948
    %v3234 = vunpack.c.l.b16 %v2949
    %v3235 = vunpack.c.h.b16 %v2949
    %v3236 = vunpack.c.l.b16 %v2950
    %v3237 = vunpack.c.h.b16 %v2950
    %v3238 = vunpack.c.l.b16 %v2951
    %v3239 = vunpack.c.h.b16 %v2951
    %v3240 = vunpack.c.l.b16 %v2952
    %v3241 = vunpack.c.h.b16 %v2952
    %v3242 = vunpack.c.l.b16 %v2953
    %v3243 = vunpack.c.h.b16 %v2953
    %v3244 = vunpack.c.l.b16 %v2954
    %v3245 = vunpack.c.h.b16 %v2954
    %v3246 = vunpack.c.l.b16 %v2955
    %v3247 = vunpack.c.h.b16 %v2955
    %v3248 = vunpack.c.l.b16 %v2956
    %v3249 = vunpack.c.h.b16 %v2956
    %v3250 = vunpack.c.l.b16 %v2957
    %v3251 = vunpack.c.h.b16 %v2957
    %v3252 = vunpack.c.l.b16 %v2958
    %v3253 = vunpack.c.h.b16 %v2958
    %v3254 = vunpack.c.l.b16 %v2959
    %v3255 = vunpack.c.h.b16 %v2959
    %v3256 = vunpack.c.l.b16 %v2960
    %v3257 = vunpack.c.h.b16 %v2960
    %v3258 = vunpack.c.l.b16 %v2961
    %v3259 = vunpack.c.h.b16 %v2961
    %v3260 = vunpack.c.l.b16 %v2962
    %v3261 = vunpack.c.h.b16 %v2962
    %v3262 = vunpack.c.l.b16 %v2963
    %v3263 = vunpack.c.h.b16 %v2963
    %v3264 = vunpack.c.l.b16 %v2964
    %v3265 = vunpack.c.h.b16 %v2964
    %v3266 = vunpack.c.l.b16 %v2965
    %v3267 = vunpack.c.h.b16 %v2965
    %v3268 = vunpack.c.l.b16 %v2966
    %v3269 = vunpack.c.h.b16 %v2966
    %v3270 = vunpack.c.l.b16 %v2967
    %v3271 = vunpack.c.h.b16 %v2967
    %v3272 = vunpack.c.l.b16 %v2968
    %v3273 = vunpack.c.h.b16 %v2968
    %v3274 = vunpack.c.l.b16 %v2969
    %v3275 = vunpack.c.h.b16 %v2969
    %v3276 = vunpack.c.l.b16 %v2970
    %v3277 = vunpack.c.h.b16 %v2970
    %v3278 = vunpack.c.l.b16 %v2971
    %v3279 = vunpack.c.h.b16 %v2971
    %v3280 = vunpack.c.l.b16 %v2972
    %v3281 = vunpack.c.h.b16 %v2972
    %v3282 = vunpack.c.l.b16 %v2973
    %v3283 = vunpack.c.h.b16 %v2973
    %v3284 = vunpack.c.l.b16 %v2974
    %v3285 = vunpack.c.h.b16 %v2974
    %v3286 = vunpack.c.l.b16 %v2975
    %v3287 = vunpack.c.h.b16 %v2975
    %v3288 = vunpack.c.l.b16 %v2976
    %v3289 = vunpack.c.h.b16 %v2976
    %v3290 = vunpack.c.l.b16 %v2977
    %v3291 = vunpack.c.h.b16 %v2977
    %v3292 = vunpack.c.l.b16 %v2978
    %v3293 = vunpack.c.h.b16 %v2978
    %v3294 = vunpack.c.l.b16 %v2979
    %v3295 = vunpack.c.h.b16 %v2979
    %v3296 = vunpack.c.l.b16 %v2980
    %v3297 = vunpack.c.h.b16 %v2980
    %v3298 = vunpack.c.l.b16 %v2981
    %v3299 = vunpack.c.h.b16 %v2981
    %v3300 = vunpack.c.l.b16 %v2982
    %v3301 = vunpack.c.h.b16 %v2982
    %v3302 = vunpack.c.l.b16 %v2983
    %v3303 = vunpack.c.h.b16 %v2983
    %v3304 = vunpack.c.l.b16 %v2984
    %v3305 = vunpack.c.h.b16 %v2984
    %v3306 = vunpack.c.l.b16 %v2985
    %v3307 = vunpack.c.h.b16 %v2985
    %v3308 = vunpack.c.l.b16 %v2986
    %v3309 = vunpack.c.h.b16 %v2986
    %v3310 = vunpack.c.l.b16 %v2987
    %v3311 = vunpack.c.h.b16 %v2987
    %v3312 = vunpack.c.l.b16 %v2988
    %v3313 = vunpack.c.h.b16 %v2988
    %v3314 = vunpack.c.l.b16 %v2989
    %v3315 = vunpack.c.h.b16 %v2989
    %v3316 = vunpack.c.l.b16 %v2990
    %v3317 = vunpack.c.h.b16 %v2990
    %v3318 = vunpack.c.l.b16 %v2991
    %v3319 = vunpack.c.h.b16 %v2991
    %v3320 = vunpack.c.l.b16 %v2992
    %v3321 = vunpack.c.h.b16 %v2992
    %v3322 = vunpack.c.l.b16 %v2993
    %v3323 = vunpack.c.h.b16 %v2993
    %v3324 = vunpack.c.l.b16 %v2994
    %v3325 = vunpack.c.h.b16 %v2994
    %v3326 = vunpack.c.l.b16 %v2995
    %v3327 = vunpack.c.h.b16 %v2995
    %v3328 = vunpack.c.l.b16 %v2996
    %v3329 = vunpack.c.h.b16 %v2996
    %v3330 = vunpack.c.l.b16 %v2997
    %v3331 = vunpack.c.h.b16 %v2997
    %v3332 = vunpack.c.l.b16 %v2998
    %v3333 = vunpack.c.h.b16 %v2998
    %v3334 = vunpack.c.l.b16 %v2999
    %v3335 = vunpack.c.h.b16 %v2999
    %v3336 = vunpack.c.l.b16 %v3000
    %v3337 = vunpack.c.h.b16 %v3000
    %v3338 = vunpack.c.l.b16 %v3001
    %v3339 = vunpack.c.h.b16 %v3001
    %v3340 = vunpack.c.l.b16 %v3002
    %v3341 = vunpack.c.h.b16 %v3002
    %v3342 = vunpack.c.l.b16 %v3003
    %v3343 = vunpack.c.h.b16 %v3003
    %v3344 = vunpack.c.l.b16 %v3004
    %v3345 = vunpack.c.h.b16 %v3004
    %v3346 = vunpack.c.l.b16 %v3005
    %v3347 = vunpack.c.h.b16 %v3005
    %v3348 = vunpack.c.l.b16 %v3006
    %v3349 = vunpack.c.h.b16 %v3006
    %v3350 = vunpack.c.l.b16 %v3007
    %v3351 = vunpack.c.h.b16 %v3007
    %v3352 = vunpack.c.l.b16 %v3008
    %v3353 = vunpack.c.h.b16 %v3008
    %v3354 = vunpack.c.l.b16 %v3009
    %v3355 = vunpack.c.h.b16 %v3009
    %v3356 = vunpack.c.l.b16 %v3010
    %v3357 = vunpack.c.h.b16 %v3010
    %v3358 = vunpack.c.l.b16 %v3011
    %v3359 = vunpack.c.h.b16 %v3011
    %v3360 = vunpack.c.l.b16 %v3012
    %v3361 = vunpack.c.h.b16 %v3012
    %v3362 = vunpack.c.l.b16 %v3013
    %v3363 = vunpack.c.h.b16 %v3013
    %v3364 = vunpack.c.l.b16 %v3014
    %v3365 = vunpack.c.h.b16 %v3014
    %v3366 = vunpack.c.l.b16 %v3015
    %v3367 = vunpack.c.h.b16 %v3015
    %v3368 = vunpack.c.l.b16 %v3016
    %v3369 = vunpack.c.h.b16 %v3016
    %v3370 = vunpack.c.l.b16 %v3017
    %v3371 = vunpack.c.h.b16 %v3017
    %v3372 = vunpack.c.l.b16 %v3018
    %v3373 = vunpack.c.h.b16 %v3018
    %v3374 = vunpack.c.l.b16 %v3019
    %v3375 = vunpack.c.h.b16 %v3019
    %v3376 = vunpack.c.l.b16 %v3020
    %v3377 = vunpack.c.h.b16 %v3020
    %v3378 = vunpack.c.l.b16 %v3021
    %v3379 = vunpack.c.h.b16 %v3021
    %v3380 = vunpack.c.l.b16 %v3022
    %v3381 = vunpack.c.h.b16 %v3022
    %v3382 = vunpack.c.l.b16 %v3023
    %v3383 = vunpack.c.h.b16 %v3023
    %v3384 = vunpack.c.l.b16 %v3024
    %v3385 = vunpack.c.h.b16 %v3024
    %v3386 = vunpack.c.l.b16 %v3025
    %v3387 = vunpack.c.h.b16 %v3025
    %v3388 = vunpack.c.l.b16 %v3026
    %v3389 = vunpack.c.h.b16 %v3026
    %v3390 = vunpack.c.l.b16 %v3027
    %v3391 = vunpack.c.h.b16 %v3027
    %v3392 = vunpack.c.l.b16 %v3028
    %v3393 = vunpack.c.h.b16 %v3028
    %v3394 = vunpack.c.l.b16 %v3029
    %v3395 = vunpack.c.h.b16 %v3029
    %v3396 = vunpack.c.l.b16 %v3030
    %v3397 = vunpack.c.h.b16 %v3030
    %v3398 = vunpack.c.l.b16 %v3031
    %v3399 = vunpack.c.h.b16 %v3031
    %v3400 = vunpack.c.l.b16 %v3032
    %v3401 = vunpack.c.h.b16 %v3032
    %v3402 = vunpack.c.l.b16 %v3033
    %v3403 = vunpack.c.h.b16 %v3033
    %v3404 = vunpack.c.l.b16 %v3034
    %v3405 = vunpack.c.h.b16 %v3034
    %v3406 = vunpack.c.l.b16 %v3035
    %v3407 = vunpack.c.h.b16 %v3035
    %v3408 = vunpack.c.l.b16 %v3036
    %v3409 = vunpack.c.h.b16 %v3036
    %v3410 = vunpack.c.l.b16 %v3037
    %v3411 = vunpack.c.h.b16 %v3037
    %v3412 = vunpack.c.l.b16 %v3038
    %v3413 = vunpack.c.h.b16 %v3038
    %v3414 = vunpack.c.l.b16 %v3039
    %v3415 = vunpack.c.h.b16 %v3039
    %v3416 = vunpack.c.l.b16 %v3040
    %v3417 = vunpack.c.h.b16 %v3040
    %v3418 = vunpack.c.l.b16 %v3041
    %v3419 = vunpack.c.h.b16 %v3041
    %v3420 = vunpack.c.l.b16 %v3042
    %v3421 = vunpack.c.h.b16 %v3042
    %v3422 = vunpack.c.l.b16 %v3043
    %v3423 = vunpack.c.h.b16 %v3043
    %v3424 = vunpack.c.l.b16 %v3044
    %v3425 = vunpack.c.h.b16 %v3044
    %v3426 = vunpack.c.l.b16 %v3045
    %v3427 = vunpack.c.h.b16 %v3045
    %v3428 = vunpack.c.l.b16 %v3046
    %v3429 = vunpack.c.h.b16 %v3046
    %v3430 = vunpack.c.l.b16 %v3047
    %v3431 = vunpack.c.h.b16 %v3047
    %v3432 = vunpack.c.l.b16 %v3048
    %v3433 = vunpack.c.h.b16 %v3048
    %v3434 = vunpack.c.l.b16 %v3049
    %v3435 = vunpack.c.h.b16 %v3049
    %v3436 = vunpack.c.l.b16 %v3050
    %v3437 = vunpack.c.h.b16 %v3050
    %v3438 = vunpack.c.l.b16 %v3051
    %v3439 = vunpack.c.h.b16 %v3051
    %v3440 = vpack.c.b16 %v3188, %v3184
    %v3441 = vpack.c.b16 %v3189, %v3185
    %v3442 = vpack.c.b16 %v3190, %v3186
    %v3443 = vpack.c.b16 %v3191, %v3187
    %v3444 = vpack.c.b16 %v3196, %v3192
    %v3445 = vpack.c.b16 %v3197, %v3193
    %v3446 = vpack.c.b16 %v3198, %v3194
    %v3447 = vpack.c.b16 %v3199, %v3195
    %v3448 = vpack.c.b16 %v3204, %v3200
    %v3449 = vpack.c.b16 %v3205, %v3201
    %v3450 = vpack.c.b16 %v3206, %v3202
    %v3451 = vpack.c.b16 %v3207, %v3203
    %v3452 = vpack.c.b16 %v3212, %v3208
    %v3453 = vpack.c.b16 %v3213, %v3209
    %v3454 = vpack.c.b16 %v3214, %v3210
    %v3455 = vpack.c.b16 %v3215, %v3211
    %v3456 = vpack.c.b16 %v3220, %v3216
    %v3457 = vpack.c.b16 %v3221, %v3217
    %v3458 = vpack.c.b16 %v3222, %v3218
    %v3459 = vpack.c.b16 %v3223, %v3219
    %v3460 = vpack.c.b16 %v3228, %v3224
    %v3461 = vpack.c.b16 %v3229, %v3225
    %v3462 = vpack.c.b16 %v3230, %v3226
    %v3463 = vpack.c.b16 %v3231, %v3227
    %v3464 = vpack.c.b16 %v3236, %v3232
    %v3465 = vpack.c.b16 %v3237, %v3233
    %v3466 = vpack.c.b16 %v3238, %v3234
    %v3467 = vpack.c.b16 %v3239, %v3235
    %v3468 = vpack.c.b16 %v3244, %v3240
    %v3469 = vpack.c.b16 %v3245, %v3241
    %v3470 = vpack.c.b16 %v3246, %v3242
    %v3471 = vpack.c.b16 %v3247, %v3243
    %v3472 = vpack.c.b16 %v3252, %v3248
    %v3473 = vpack.c.b16 %v3253, %v3249
    %v3474 = vpack.c.b16 %v3254, %v3250
    %v3475 = vpack.c.b16 %v3255, %v3251
    %v3476 = vpack.c.b16 %v3260, %v3256
    %v3477 = vpack.c.b16 %v3261, %v3257
    %v3478 = vpack.c.b16 %v3262, %v3258
    %v3479 = vpack.c.b16 %v3263, %v3259
    %v3480 = vpack.c.b16 %v3268, %v3264
    %v3481 = vpack.c.b16 %v3269, %v3265
    %v3482 = vpack.c.b16 %v3270, %v3266
    %v3483 = vpack.c.b16 %v3271, %v3267
    %v3484 = vpack.c.b16 %v3276, %v3272
    %v3485 = vpack.c.b16 %v3277, %v3273
    %v3486 = vpack.c.b16 %v3278, %v3274
    %v3487 = vpack.c.b16 %v3279, %v3275
    %v3488 = vpack.c.b16 %v3284, %v3280
    %v3489 = vpack.c.b16 %v3285, %v3281
    %v3490 = vpack.c.b16 %v3286, %v3282
    %v3491 = vpack.c.b16 %v3287, %v3283
    %v3492 = vpack.c.b16 %v3292, %v3288
    %v3493 = vpack.c.b16 %v3293, %v3289
    %v3494 = vpack.c.b16 %v3294, %v3290
    %v3495 = vpack.c.b16 %v3295, %v3291
    %v3496 = vpack.c.b16 %v3300, %v3296
    %v3497 = vpack.c.b16 %v3301, %v3297
    %v3498 = vpack.c.b16 %v3302, %v3298
    %v3499 = vpack.c.b16 %v3303, %v3299
    %v3500 = vpack.c.b16 %v3308, %v3304
    %v3501 = vpack.c.b16 %v3309, %v3305
    %v3502 = vpack.c.b16 %v3310, %v3306
    %v3503 = vpack.c.b16 %v3311, %v3307
    %v3504 = vpack.c.b16 %v3316, %v3312
    %v3505 = vpack.c.b16 %v3317, %v3313
    %v3506 = vpack.c.b16 %v3318, %v3314
    %v3507 = vpack.c.b16 %v3319, %v3315
    %v3508 = vpack.c.b16 %v3324, %v3320
    %v3509 = vpack.c.b16 %v3325, %v3321
    %v3510 = vpack.c.b16 %v3326, %v3322
    %v3511 = vpack.c.b16 %v3327, %v3323
    %v3512 = vpack.c.b16 %v3332, %v3328
    %v3513 = vpack.c.b16 %v3333, %v3329
    %v3514 = vpack.c.b16 %v3334, %v3330
    %v3515 = vpack.c.b16 %v3335, %v3331
    %v3516 = vpack.c.b16 %v3340, %v3336
    %v3517 = vpack.c.b16 %v3341, %v3337
    %v3518 = vpack.c.b16 %v3342, %v3338
    %v3519 = vpack.c.b16 %v3343, %v3339
    %v3520 = vpack.c.b16 %v3348, %v3344
    %v3521 = vpack.c.b16 %v3349, %v3345
    %v3522 = vpack.c.b16 %v3350, %v3346
    %v3523 = vpack.c.b16 %v3351, %v3347
    %v3524 = vpack.c.b16 %v3356, %v3352
    %v3525 = vpack.c.b16 %v3357, %v3353
    %v3526 = vpack.c.b16 %v3358, %v3354
    %v3527 = vpack.c.b16 %v3359, %v3355
    %v3528 = vpack.c.b16 %v3364, %v3360
    %v3529 = vpack.c.b16 %v3365, %v3361
    %v3530 = vpack.c.b16 %v3366, %v3362
    %v3531 = vpack.c.b16 %v3367, %v3363
    %v3532 = vpack.c.b16 %v3372, %v3368
    %v3533 = vpack.c.b16 %v3373, %v3369
    %v3534 = vpack.c.b16 %v3374, %v3370
    %v3535 = vpack.c.b16 %v3375, %v3371
    %v3536 = vpack.c.b16 %v3380, %v3376
    %v3537 = vpack.c.b16 %v3381, %v3377
    %v3538 = vpack.c.b16 %v3382, %v3378
    %v3539 = vpack.c.b16 %v3383, %v3379
    %v3540 = vpack.c.b16 %v3388, %v3384
    %v3541 = vpack.c.b16 %v3389, %v3385
    %v3542 = vpack.c.b16 %v3390, %v3386
    %v3543 = vpack.c.b16 %v3391, %v3387
    %v3544 = vpack.c.b16 %v3396, %v3392
    %v3545 = vpack.c.b16 %v3397, %v3393
    %v3546 = vpack.c.b16 %v3398, %v3394
    %v3547 = vpack.c.b16 %v3399, %v3395
    %v3548 = vpack.c.b16 %v3404, %v3400
    %v3549 = vpack.c.b16 %v3405, %v3401
    %v3550 = vpack.c.b16 %v3406, %v3402
    %v3551 = vpack.c.b16 %v3407, %v3403
    %v3552 = vpack.c.b16 %v3412, %v3408
    %v3553 = vpack.c.b16 %v3413, %v3409
    %v3554 = vpack.c.b16 %v3414, %v3410
    %v3555 = vpack.c.b16 %v3415, %v3411
    %v3556 = vpack.c.b16 %v3420, %v3416
    %v3557 = vpack.c.b16 %v3421, %v3417
    %v3558 = vpack.c.b16 %v3422, %v3418
    %v3559 = vpack.c.b16 %v3423, %v3419
    %v3560 = vpack.c.b16 %v3428, %v3424
    %v3561 = vpack.c.b16 %v3429, %v3425
    %v3562 = vpack.c.b16 %v3430, %v3426
    %v3563 = vpack.c.b16 %v3431, %v3427
    %v3564 = vpack.c.b16 %v3436, %v3432
    %v3565 = vpack.c.b16 %v3437, %v3433
    %v3566 = vpack.c.b16 %v3438, %v3434
    %v3567 = vpack.c.b16 %v3439, %v3435
    %3696 = vmatpush.bf16.msra.mxu0 %v3468
    %3697 = vmatpush.bf16.msra.mxu0 %v3464
    %3698 = vmatpush.bf16.msra.mxu0 %v3460
    %3699 = vmatpush.bf16.msra.mxu0 %v3456
    %3700 = vmatpush.bf16.msra.mxu0 %v3452
    %3701 = vmatpush.bf16.msra.mxu0 %v3448
    %3702 = vmatpush.bf16.msra.mxu0 %v3444
    %3703 = vmatpush.bf16.msra.mxu0 %v3440
    %3704 = vmatmul.bf16.gmra.mxu0 %v2920
    %v3705 = vpop.f32.mrf.mxu0
    %v3706 = vadd.f32 %v3052, %v3705
    %v3707 = vpop.f32.mrf.mxu0
    %v3708 = vadd.f32 %v3052, %v3707
    %3709 = vdwg.mxu0
    %3710 = vmatpush.bf16.msra.mxu0 %v3500
    %3711 = vmatpush.bf16.msra.mxu0 %v3496
    %3712 = vmatpush.bf16.msra.mxu0 %v3492
    %3713 = vmatpush.bf16.msra.mxu0 %v3488
    %3714 = vmatpush.bf16.msra.mxu0 %v3484
    %3715 = vmatpush.bf16.msra.mxu0 %v3480
    %3716 = vmatpush.bf16.msra.mxu0 %v3476
    %3717 = vmatpush.bf16.msra.mxu0 %v3472
    %3718 = vmatmul.bf16.gmra.mxu0 %v2921
    %v3719 = vpop.f32.mrf.mxu0
    %v3720 = vadd.f32 %v3706, %v3719
    %v3721 = vpop.f32.mrf.mxu0
    %v3722 = vadd.f32 %v3708, %v3721
    %3723 = vdwg.mxu0
    %3724 = vmatpush.bf16.msra.mxu0 %v3532
    %3725 = vmatpush.bf16.msra.mxu0 %v3528
    %3726 = vmatpush.bf16.msra.mxu0 %v3524
    %3727 = vmatpush.bf16.msra.mxu0 %v3520
    %3728 = vmatpush.bf16.msra.mxu0 %v3516
    %3729 = vmatpush.bf16.msra.mxu0 %v3512
    %3730 = vmatpush.bf16.msra.mxu0 %v3508
    %3731 = vmatpush.bf16.msra.mxu0 %v3504
    %3732 = vmatmul.bf16.gmra.mxu0 %v2922
    %v3733 = vpop.f32.mrf.mxu0
    %v3734 = vadd.f32 %v3720, %v3733
    %v3735 = vpop.f32.mrf.mxu0
    %v3736 = vadd.f32 %v3722, %v3735
    %3737 = vdwg.mxu0
    %3738 = vmatpush.bf16.msra.mxu0 %v3564
    %3739 = vmatpush.bf16.msra.mxu0 %v3560
    %3740 = vmatpush.bf16.msra.mxu0 %v3556
    %3741 = vmatpush.bf16.msra.mxu0 %v3552
    %3742 = vmatpush.bf16.msra.mxu0 %v3548
    %3743 = vmatpush.bf16.msra.mxu0 %v3544
    %3744 = vmatpush.bf16.msra.mxu0 %v3540
    %3745 = vmatpush.bf16.msra.mxu0 %v3536
    %3746 = vmatmul.bf16.gmra.mxu0 %v2923
    %v3747 = vpop.f32.mrf.mxu0
    %v3748 = vadd.f32 %v3734, %v3747
    %v3749 = vpop.f32.mrf.mxu0
    %v3750 = vadd.f32 %v3736, %v3749
    %3751 = vdwg.mxu0
    %3752 = vmatpush.bf16.msra.mxu0 %v3469
    %3753 = vmatpush.bf16.msra.mxu0 %v3465
    %3754 = vmatpush.bf16.msra.mxu0 %v3461
    %3755 = vmatpush.bf16.msra.mxu0 %v3457
    %3756 = vmatpush.bf16.msra.mxu0 %v3453
    %3757 = vmatpush.bf16.msra.mxu0 %v3449
    %3758 = vmatpush.bf16.msra.mxu0 %v3445
    %3759 = vmatpush.bf16.msra.mxu0 %v3441
    %3760 = vmatmul.bf16.gmra.mxu0 %v2920
    %v3761 = vpop.f32.mrf.mxu0
    %v3762 = vadd.f32 %v3053, %v3761
    %v3763 = vpop.f32.mrf.mxu0
    %v3764 = vadd.f32 %v3053, %v3763
    %3765 = vdwg.mxu0
    %3766 = vmatpush.bf16.msra.mxu0 %v3501
    %3767 = vmatpush.bf16.msra.mxu0 %v3497
    %3768 = vmatpush.bf16.msra.mxu0 %v3493
    %3769 = vmatpush.bf16.msra.mxu0 %v3489
    %3770 = vmatpush.bf16.msra.mxu0 %v3485
    %3771 = vmatpush.bf16.msra.mxu0 %v3481
    %3772 = vmatpush.bf16.msra.mxu0 %v3477
    %3773 = vmatpush.bf16.msra.mxu0 %v3473
    %3774 = vmatmul.bf16.gmra.mxu0 %v2921
    %v3775 = vpop.f32.mrf.mxu0
    %v3776 = vadd.f32 %v3762, %v3775
    %v3777 = vpop.f32.mrf.mxu0
    %v3778 = vadd.f32 %v3764, %v3777
    %3779 = vdwg.mxu0
    %3780 = vmatpush.bf16.msra.mxu0 %v3533
    %3781 = vmatpush.bf16.msra.mxu0 %v3529
    %3782 = vmatpush.bf16.msra.mxu0 %v3525
    %3783 = vmatpush.bf16.msra.mxu0 %v3521
    %3784 = vmatpush.bf16.msra.mxu0 %v3517
    %3785 = vmatpush.bf16.msra.mxu0 %v3513
    %3786 = vmatpush.bf16.msra.mxu0 %v3509
    %3787 = vmatpush.bf16.msra.mxu0 %v3505
    %3788 = vmatmul.bf16.gmra.mxu0 %v2922
    %v3789 = vpop.f32.mrf.mxu0
    %v3790 = vadd.f32 %v3776, %v3789
    %v3791 = vpop.f32.mrf.mxu0
    %v3792 = vadd.f32 %v3778, %v3791
    %3793 = vdwg.mxu0
    %3794 = vmatpush.bf16.msra.mxu0 %v3565
    %3795 = vmatpush.bf16.msra.mxu0 %v3561
    %3796 = vmatpush.bf16.msra.mxu0 %v3557
    %3797 = vmatpush.bf16.msra.mxu0 %v3553
    %3798 = vmatpush.bf16.msra.mxu0 %v3549
    %3799 = vmatpush.bf16.msra.mxu0 %v3545
    %3800 = vmatpush.bf16.msra.mxu0 %v3541
    %3801 = vmatpush.bf16.msra.mxu0 %v3537
    %3802 = vmatmul.bf16.gmra.mxu0 %v2923
    %v3803 = vpop.f32.mrf.mxu0
    %v3804 = vadd.f32 %v3790, %v3803
    %v3805 = vpop.f32.mrf.mxu0
    %v3806 = vadd.f32 %v3792, %v3805
    %3807 = vdwg.mxu0
    %3808 = vmatpush.bf16.msra.mxu0 %v3470
    %3809 = vmatpush.bf16.msra.mxu0 %v3466
    %3810 = vmatpush.bf16.msra.mxu0 %v3462
    %3811 = vmatpush.bf16.msra.mxu0 %v3458
    %3812 = vmatpush.bf16.msra.mxu0 %v3454
    %3813 = vmatpush.bf16.msra.mxu0 %v3450
    %3814 = vmatpush.bf16.msra.mxu0 %v3446
    %3815 = vmatpush.bf16.msra.mxu0 %v3442
    %3816 = vmatmul.bf16.gmra.mxu0 %v2920
    %v3817 = vpop.f32.mrf.mxu0
    %v3818 = vadd.f32 %v3054, %v3817
    %v3819 = vpop.f32.mrf.mxu0
    %v3820 = vadd.f32 %v3054, %v3819
    %3821 = vdwg.mxu0
    %3822 = vmatpush.bf16.msra.mxu0 %v3502
    %3823 = vmatpush.bf16.msra.mxu0 %v3498
    %3824 = vmatpush.bf16.msra.mxu0 %v3494
    %3825 = vmatpush.bf16.msra.mxu0 %v3490
    %3826 = vmatpush.bf16.msra.mxu0 %v3486
    %3827 = vmatpush.bf16.msra.mxu0 %v3482
    %3828 = vmatpush.bf16.msra.mxu0 %v3478
    %3829 = vmatpush.bf16.msra.mxu0 %v3474
    %3830 = vmatmul.bf16.gmra.mxu0 %v2921
    %v3831 = vpop.f32.mrf.mxu0
    %v3832 = vadd.f32 %v3818, %v3831
    %v3833 = vpop.f32.mrf.mxu0
    %v3834 = vadd.f32 %v3820, %v3833
    %3835 = vdwg.mxu0
    %3836 = vmatpush.bf16.msra.mxu0 %v3534
    %3837 = vmatpush.bf16.msra.mxu0 %v3530
    %3838 = vmatpush.bf16.msra.mxu0 %v3526
    %3839 = vmatpush.bf16.msra.mxu0 %v3522
    %3840 = vmatpush.bf16.msra.mxu0 %v3518
    %3841 = vmatpush.bf16.msra.mxu0 %v3514
    %3842 = vmatpush.bf16.msra.mxu0 %v3510
    %3843 = vmatpush.bf16.msra.mxu0 %v3506
    %3844 = vmatmul.bf16.gmra.mxu0 %v2922
    %v3845 = vpop.f32.mrf.mxu0
    %v3846 = vadd.f32 %v3832, %v3845
    %v3847 = vpop.f32.mrf.mxu0
    %v3848 = vadd.f32 %v3834, %v3847
    %3849 = vdwg.mxu0
    %3850 = vmatpush.bf16.msra.mxu0 %v3566
    %3851 = vmatpush.bf16.msra.mxu0 %v3562
    %3852 = vmatpush.bf16.msra.mxu0 %v3558
    %3853 = vmatpush.bf16.msra.mxu0 %v3554
    %3854 = vmatpush.bf16.msra.mxu0 %v3550
    %3855 = vmatpush.bf16.msra.mxu0 %v3546
    %3856 = vmatpush.bf16.msra.mxu0 %v3542
    %3857 = vmatpush.bf16.msra.mxu0 %v3538
    %3858 = vmatmul.bf16.gmra.mxu0 %v2923
    %v3859 = vpop.f32.mrf.mxu0
    %v3860 = vadd.f32 %v3846, %v3859
    %v3861 = vpop.f32.mrf.mxu0
    %v3862 = vadd.f32 %v3848, %v3861
    %3863 = vdwg.mxu0
    %3864 = vmatpush.bf16.msra.mxu0 %v3471
    %3865 = vmatpush.bf16.msra.mxu0 %v3467
    %3866 = vmatpush.bf16.msra.mxu0 %v3463
    %3867 = vmatpush.bf16.msra.mxu0 %v3459
    %3868 = vmatpush.bf16.msra.mxu0 %v3455
    %3869 = vmatpush.bf16.msra.mxu0 %v3451
    %3870 = vmatpush.bf16.msra.mxu0 %v3447
    %3871 = vmatpush.bf16.msra.mxu0 %v3443
    %3872 = vmatmul.bf16.gmra.mxu0 %v2920
    %v3873 = vpop.f32.mrf.mxu0
    %v3874 = vadd.f32 %v3055, %v3873
    %v3875 = vpop.f32.mrf.mxu0
    %v3876 = vadd.f32 %v3055, %v3875
    %3877 = vdwg.mxu0
    %3878 = vmatpush.bf16.msra.mxu0 %v3503
    %3879 = vmatpush.bf16.msra.mxu0 %v3499
    %3880 = vmatpush.bf16.msra.mxu0 %v3495
    %3881 = vmatpush.bf16.msra.mxu0 %v3491
    %3882 = vmatpush.bf16.msra.mxu0 %v3487
    %3883 = vmatpush.bf16.msra.mxu0 %v3483
    %3884 = vmatpush.bf16.msra.mxu0 %v3479
    %3885 = vmatpush.bf16.msra.mxu0 %v3475
    %3886 = vmatmul.bf16.gmra.mxu0 %v2921
    %v3887 = vpop.f32.mrf.mxu0
    %v3888 = vadd.f32 %v3874, %v3887
    %v3889 = vpop.f32.mrf.mxu0
    %v3890 = vadd.f32 %v3876, %v3889
    %3891 = vdwg.mxu0
    %3892 = vmatpush.bf16.msra.mxu0 %v3535
    %3893 = vmatpush.bf16.msra.mxu0 %v3531
    %3894 = vmatpush.bf16.msra.mxu0 %v3527
    %3895 = vmatpush.bf16.msra.mxu0 %v3523
    %3896 = vmatpush.bf16.msra.mxu0 %v3519
    %3897 = vmatpush.bf16.msra.mxu0 %v3515
    %3898 = vmatpush.bf16.msra.mxu0 %v3511
    %3899 = vmatpush.bf16.msra.mxu0 %v3507
    %3900 = vmatmul.bf16.gmra.mxu0 %v2922
    %v3901 = vpop.f32.mrf.mxu0
    %v3902 = vadd.f32 %v3888, %v3901
    %v3903 = vpop.f32.mrf.mxu0
    %v3904 = vadd.f32 %v3890, %v3903
    %3905 = vdwg.mxu0
    %3906 = vmatpush.bf16.msra.mxu0 %v3567
    %3907 = vmatpush.bf16.msra.mxu0 %v3563
    %3908 = vmatpush.bf16.msra.mxu0 %v3559
    %3909 = vmatpush.bf16.msra.mxu0 %v3555
    %3910 = vmatpush.bf16.msra.mxu0 %v3551
    %3911 = vmatpush.bf16.msra.mxu0 %v3547
    %3912 = vmatpush.bf16.msra.mxu0 %v3543
    %3913 = vmatpush.bf16.msra.mxu0 %v3539
    %3914 = vmatmul.bf16.gmra.mxu0 %v2923
    %v3915 = vpop.f32.mrf.mxu0
    %v3916 = vadd.f32 %v3902, %v3915
    %v3917 = vpop.f32.mrf.mxu0
    %v3918 = vadd.f32 %v3904, %v3917
    %3919 = vdwg.mxu0
    %v3920 = vmax.f32 %v3748, 0.0
    %v3921 = vmax.f32 %v3804, 0.0
    %v3922 = vmax.f32 %v3860, 0.0
    %v3923 = vmax.f32 %v3916, 0.0
    %v3924 = vmax.f32 %v3750, 0.0
    %v3925 = vmax.f32 %v3806, 0.0
    %v3926 = vmax.f32 %v3862, 0.0
    %v3927 = vmax.f32 %v3918, 0.0
    %3928 = vst [vmem:[#allocation14 + $0x20] sm:$0xff] %v3920
    %3929 = vst [vmem:[#allocation14 + $0x28] sm:$0xff] %v3921
    %3930 = vst [vmem:[#allocation14 + $0x30] sm:$0xff] %v3922
    %3931 = vst [vmem:[#allocation14 + $0x38] sm:$0xff] %v3923
    %3932 = vst [vmem:[#allocation14 + $0x80] sm:$0xff] %v3924
    %3933 = vst [vmem:[#allocation14 + $0x88] sm:$0xff] %v3925
    %3934 = vst [vmem:[#allocation14 + $0x90] sm:$0xff] %v3926
    %3935 = vst [vmem:[#allocation14 + $0x98] sm:$0xff] %v3927
    %v3936 = vld [vmem:[%s2] sm:$0xff]
    %v3937 = vld [vmem:[%s2 + $0x8] sm:$0xff]
    %v3938 = vpack.c.bf16 %v3937, %v3936
    %v3939 = vld [vmem:[#allocation10] sm:$0xff]
    %v3940 = vld [vmem:[#allocation10 + $0x8] sm:$0xff]
    %v3941 = vld [vmem:[#allocation10 + $0x10] sm:$0x33]
    %v3942 = vld [vmem:[#allocation10 + $0x18] sm:$0x33]
    %v3943 = vperm.slane %v144, 4
    %v3944 = vperm.slane %v145, 4
    %v3945 = vperm.slane %v146, 4
    %v3946 = vperm.slane %v147, 4
    %v3951 = vunpack.c.l.b16 %v3939
    %v3952 = vunpack.c.h.b16 %v3939
    %v3953 = vunpack.c.l.b16 %v3940
    %v3954 = vunpack.c.h.b16 %v3940
    %v3955 = vunpack.c.l.b16 %v3941
    %v3956 = vunpack.c.h.b16 %v3941
    %v3957 = vunpack.c.l.b16 %v3942
    %v3958 = vunpack.c.h.b16 %v3942
    %v3959 = vpack.c.b16 %v3955, %v3951
    %v3960 = vpack.c.b16 %v3956, %v3952
    %v3961 = vpack.c.b16 %v3957, %v3953
    %v3962 = vpack.c.b16 %v3958, %v3954
    %vm3963 = vcmask 97280
    %v3965 = vsel %vm3963, %v3938, 0
    %vm3967 = vcmask 1045504
    %v3969 = vsel %vm3967, %v3959, 0
    %v3972 = vsel %vm3967, %v3960, 0
    %v3975 = vsel %vm3967, %v3961, 0
    %v3978 = vsel %vm3967, %v3962, 0
    %3980 = vmatpush.bf16.msra.mxu0 0
    %3981 = vmatpush.bf16.msra.mxu0 0
    %3982 = vmatpush.bf16.msra.mxu0 0
    %3983 = vmatpush.bf16.msra.mxu0 0
    %3984 = vmatpush.bf16.msra.mxu0 0
    %3985 = vmatpush.bf16.msra.mxu0 0
    %3986 = vmatpush.bf16.msra.mxu0 0
    %3987 = vmatpush.bf16.msra.mxu0 %v3969
    %3988 = vmatmul.bf16.gmra.mxu0 %v3965
    %v3989 = vpop.f32.mrf.mxu0
    %v3990 = vadd.f32 %v3943, %v3989
    %v3991 = vpop.f32.mrf.mxu0
    %v3992 = vadd.f32 %v3943, %v3991
    %3993 = vdwg.mxu0
    %3994 = vmatpush.bf16.msra.mxu0 0
    %3995 = vmatpush.bf16.msra.mxu0 0
    %3996 = vmatpush.bf16.msra.mxu0 0
    %3997 = vmatpush.bf16.msra.mxu0 0
    %3998 = vmatpush.bf16.msra.mxu0 0
    %3999 = vmatpush.bf16.msra.mxu0 0
    %4000 = vmatpush.bf16.msra.mxu0 0
    %4001 = vmatpush.bf16.msra.mxu0 %v3972
    %4002 = vmatmul.bf16.gmra.mxu0 %v3965
    %v4003 = vpop.f32.mrf.mxu0
    %v4004 = vadd.f32 %v3944, %v4003
    %v4005 = vpop.f32.mrf.mxu0
    %v4006 = vadd.f32 %v3944, %v4005
    %4007 = vdwg.mxu0
    %4008 = vmatpush.bf16.msra.mxu0 0
    %4009 = vmatpush.bf16.msra.mxu0 0
    %4010 = vmatpush.bf16.msra.mxu0 0
    %4011 = vmatpush.bf16.msra.mxu0 0
    %4012 = vmatpush.bf16.msra.mxu0 0
    %4013 = vmatpush.bf16.msra.mxu0 0
    %4014 = vmatpush.bf16.msra.mxu0 0
    %4015 = vmatpush.bf16.msra.mxu0 %v3975
    %4016 = vmatmul.bf16.gmra.mxu0 %v3965
    %v4017 = vpop.f32.mrf.mxu0
    %v4018 = vadd.f32 %v3945, %v4017
    %v4019 = vpop.f32.mrf.mxu0
    %v4020 = vadd.f32 %v3945, %v4019
    %4021 = vdwg.mxu0
    %4022 = vmatpush.bf16.msra.mxu0 0
    %4023 = vmatpush.bf16.msra.mxu0 0
    %4024 = vmatpush.bf16.msra.mxu0 0
    %4025 = vmatpush.bf16.msra.mxu0 0
    %4026 = vmatpush.bf16.msra.mxu0 0
    %4027 = vmatpush.bf16.msra.mxu0 0
    %4028 = vmatpush.bf16.msra.mxu0 0
    %4029 = vmatpush.bf16.msra.mxu0 %v3978
    %4030 = vmatmul.bf16.gmra.mxu0 %v3965
    %v4031 = vpop.f32.mrf.mxu0
    %v4032 = vadd.f32 %v3946, %v4031
    %v4033 = vpop.f32.mrf.mxu0
    %v4034 = vadd.f32 %v3946, %v4033
    %4035 = vdwg.mxu0
    %v4036 = vmax.f32 %v3990, 0.0
    %v4037 = vmax.f32 %v4004, 0.0
    %v4038 = vmax.f32 %v4018, 0.0
    %v4039 = vmax.f32 %v4032, 0.0
    %v4040 = vmax.f32 %v3992, 0.0
    %v4041 = vmax.f32 %v4006, 0.0
    %v4042 = vmax.f32 %v4020, 0.0
    %v4043 = vmax.f32 %v4034, 0.0
    %v4044 = vpack.c.bf16 %v4040, %v4036
    %v4045 = vpack.c.bf16 %v4041, %v4037
    %v4046 = vpack.c.bf16 %v4042, %v4038
    %v4047 = vpack.c.bf16 %v4043, %v4039
    %v4048 = vld [vmem:[#allocation11] sm:$0xff]
    %v4049 = vld [vmem:[#allocation11 + $0x8] sm:$0xff]
    %v4050 = vld [vmem:[#allocation11 + $0x10] sm:$0xff]
    %v4051 = vld [vmem:[#allocation11 + $0x18] sm:$0xff]
    %v4052 = vld [vmem:[#allocation11 + $0x20] sm:$0xff]
    %v4053 = vld [vmem:[#allocation11 + $0x28] sm:$0xff]
    %v4054 = vld [vmem:[#allocation11 + $0x30] sm:$0xff]
    %v4055 = vld [vmem:[#allocation11 + $0x38] sm:$0xff]
    %v4056 = vld [vmem:[#allocation11 + $0x40] sm:$0xff]
    %v4057 = vld [vmem:[#allocation11 + $0x48] sm:$0xff]
    %v4058 = vld [vmem:[#allocation11 + $0x50] sm:$0xff]
    %v4059 = vld [vmem:[#allocation11 + $0x58] sm:$0xff]
    %v4060 = vld [vmem:[#allocation11 + $0x60] sm:$0xff]
    %v4061 = vld [vmem:[#allocation11 + $0x68] sm:$0xff]
    %v4062 = vld [vmem:[#allocation11 + $0x70] sm:$0xff]
    %v4063 = vld [vmem:[#allocation11 + $0x78] sm:$0xff]
    %v4064 = vld [vmem:[#allocation11 + $0x80] sm:$0xff]
    %v4065 = vld [vmem:[#allocation11 + $0x88] sm:$0xff]
    %v4066 = vld [vmem:[#allocation11 + $0x90] sm:$0xff]
    %v4067 = vld [vmem:[#allocation11 + $0x98] sm:$0xff]
    %v4068 = vld [vmem:[#allocation11 + $0xa0] sm:$0xff]
    %v4069 = vld [vmem:[#allocation11 + $0xa8] sm:$0xff]
    %v4070 = vld [vmem:[#allocation11 + $0xb0] sm:$0xff]
    %v4071 = vld [vmem:[#allocation11 + $0xb8] sm:$0xff]
    %v4072 = vld [vmem:[#allocation11 + $0xc0] sm:$0xff]
    %v4073 = vld [vmem:[#allocation11 + $0xc8] sm:$0xff]
    %v4074 = vld [vmem:[#allocation11 + $0xd0] sm:$0xff]
    %v4075 = vld [vmem:[#allocation11 + $0xd8] sm:$0xff]
    %v4076 = vld [vmem:[#allocation11 + $0xe0] sm:$0xff]
    %v4077 = vld [vmem:[#allocation11 + $0xe8] sm:$0xff]
    %v4078 = vld [vmem:[#allocation11 + $0xf0] sm:$0xff]
    %v4079 = vld [vmem:[#allocation11 + $0xf8] sm:$0xff]
    %v4080 = vld [vmem:[#allocation11 + $0x100] sm:$0xff]
    %v4081 = vld [vmem:[#allocation11 + $0x108] sm:$0xff]
    %v4082 = vld [vmem:[#allocation11 + $0x110] sm:$0xff]
    %v4083 = vld [vmem:[#allocation11 + $0x118] sm:$0xff]
    %v4084 = vld [vmem:[#allocation11 + $0x120] sm:$0xff]
    %v4085 = vld [vmem:[#allocation11 + $0x128] sm:$0xff]
    %v4086 = vld [vmem:[#allocation11 + $0x130] sm:$0xff]
    %v4087 = vld [vmem:[#allocation11 + $0x138] sm:$0xff]
    %v4088 = vld [vmem:[#allocation11 + $0x140] sm:$0xff]
    %v4089 = vld [vmem:[#allocation11 + $0x148] sm:$0xff]
    %v4090 = vld [vmem:[#allocation11 + $0x150] sm:$0xff]
    %v4091 = vld [vmem:[#allocation11 + $0x158] sm:$0xff]
    %v4092 = vld [vmem:[#allocation11 + $0x160] sm:$0xff]
    %v4093 = vld [vmem:[#allocation11 + $0x168] sm:$0xff]
    %v4094 = vld [vmem:[#allocation11 + $0x170] sm:$0xff]
    %v4095 = vld [vmem:[#allocation11 + $0x178] sm:$0xff]
    %v4096 = vld [vmem:[#allocation11 + $0x180] sm:$0xff]
    %v4097 = vld [vmem:[#allocation11 + $0x188] sm:$0xff]
    %v4098 = vld [vmem:[#allocation11 + $0x190] sm:$0xff]
    %v4099 = vld [vmem:[#allocation11 + $0x198] sm:$0xff]
    %v4100 = vld [vmem:[#allocation11 + $0x1a0] sm:$0xff]
    %v4101 = vld [vmem:[#allocation11 + $0x1a8] sm:$0xff]
    %v4102 = vld [vmem:[#allocation11 + $0x1b0] sm:$0xff]
    %v4103 = vld [vmem:[#allocation11 + $0x1b8] sm:$0xff]
    %v4104 = vld [vmem:[#allocation11 + $0x1c0] sm:$0xff]
    %v4105 = vld [vmem:[#allocation11 + $0x1c8] sm:$0xff]
    %v4106 = vld [vmem:[#allocation11 + $0x1d0] sm:$0xff]
    %v4107 = vld [vmem:[#allocation11 + $0x1d8] sm:$0xff]
    %v4108 = vld [vmem:[#allocation11 + $0x1e0] sm:$0xff]
    %v4109 = vld [vmem:[#allocation11 + $0x1e8] sm:$0xff]
    %v4110 = vld [vmem:[#allocation11 + $0x1f0] sm:$0xff]
    %v4111 = vld [vmem:[#allocation11 + $0x1f8] sm:$0xff]
    %v4112 = vld [vmem:[#allocation11 + $0x200] sm:$0xff]
    %v4113 = vld [vmem:[#allocation11 + $0x208] sm:$0xff]
    %v4114 = vld [vmem:[#allocation11 + $0x210] sm:$0xff]
    %v4115 = vld [vmem:[#allocation11 + $0x218] sm:$0xff]
    %v4116 = vld [vmem:[#allocation11 + $0x220] sm:$0xff]
    %v4117 = vld [vmem:[#allocation11 + $0x228] sm:$0xff]
    %v4118 = vld [vmem:[#allocation11 + $0x230] sm:$0xff]
    %v4119 = vld [vmem:[#allocation11 + $0x238] sm:$0xff]
    %v4120 = vld [vmem:[#allocation11 + $0x240] sm:$0xff]
    %v4121 = vld [vmem:[#allocation11 + $0x248] sm:$0xff]
    %v4122 = vld [vmem:[#allocation11 + $0x250] sm:$0xff]
    %v4123 = vld [vmem:[#allocation11 + $0x258] sm:$0xff]
    %v4124 = vld [vmem:[#allocation11 + $0x260] sm:$0xff]
    %v4125 = vld [vmem:[#allocation11 + $0x268] sm:$0xff]
    %v4126 = vld [vmem:[#allocation11 + $0x270] sm:$0xff]
    %v4127 = vld [vmem:[#allocation11 + $0x278] sm:$0xff]
    %v4128 = vld [vmem:[#allocation11 + $0x280] sm:$0xff]
    %v4129 = vld [vmem:[#allocation11 + $0x288] sm:$0xff]
    %v4130 = vld [vmem:[#allocation11 + $0x290] sm:$0xff]
    %v4131 = vld [vmem:[#allocation11 + $0x298] sm:$0xff]
    %v4132 = vld [vmem:[#allocation11 + $0x2a0] sm:$0xff]
    %v4133 = vld [vmem:[#allocation11 + $0x2a8] sm:$0xff]
    %v4134 = vld [vmem:[#allocation11 + $0x2b0] sm:$0xff]
    %v4135 = vld [vmem:[#allocation11 + $0x2b8] sm:$0xff]
    %v4136 = vld [vmem:[#allocation11 + $0x2c0] sm:$0xff]
    %v4137 = vld [vmem:[#allocation11 + $0x2c8] sm:$0xff]
    %v4138 = vld [vmem:[#allocation11 + $0x2d0] sm:$0xff]
    %v4139 = vld [vmem:[#allocation11 + $0x2d8] sm:$0xff]
    %v4140 = vld [vmem:[#allocation11 + $0x2e0] sm:$0xff]
    %v4141 = vld [vmem:[#allocation11 + $0x2e8] sm:$0xff]
    %v4142 = vld [vmem:[#allocation11 + $0x2f0] sm:$0xff]
    %v4143 = vld [vmem:[#allocation11 + $0x2f8] sm:$0xff]
    %v4144 = vld [vmem:[#allocation11 + $0x300] sm:$0xff]
    %v4145 = vld [vmem:[#allocation11 + $0x308] sm:$0xff]
    %v4146 = vld [vmem:[#allocation11 + $0x310] sm:$0xff]
    %v4147 = vld [vmem:[#allocation11 + $0x318] sm:$0xff]
    %v4148 = vld [vmem:[#allocation11 + $0x320] sm:$0xff]
    %v4149 = vld [vmem:[#allocation11 + $0x328] sm:$0xff]
    %v4150 = vld [vmem:[#allocation11 + $0x330] sm:$0xff]
    %v4151 = vld [vmem:[#allocation11 + $0x338] sm:$0xff]
    %v4152 = vld [vmem:[#allocation11 + $0x340] sm:$0xff]
    %v4153 = vld [vmem:[#allocation11 + $0x348] sm:$0xff]
    %v4154 = vld [vmem:[#allocation11 + $0x350] sm:$0xff]
    %v4155 = vld [vmem:[#allocation11 + $0x358] sm:$0xff]
    %v4156 = vld [vmem:[#allocation11 + $0x360] sm:$0xff]
    %v4157 = vld [vmem:[#allocation11 + $0x368] sm:$0xff]
    %v4158 = vld [vmem:[#allocation11 + $0x370] sm:$0xff]
    %v4159 = vld [vmem:[#allocation11 + $0x378] sm:$0xff]
    %v4160 = vld [vmem:[#allocation11 + $0x380] sm:$0xff]
    %v4161 = vld [vmem:[#allocation11 + $0x388] sm:$0xff]
    %v4162 = vld [vmem:[#allocation11 + $0x390] sm:$0xff]
    %v4163 = vld [vmem:[#allocation11 + $0x398] sm:$0xff]
    %v4164 = vld [vmem:[#allocation11 + $0x3a0] sm:$0xff]
    %v4165 = vld [vmem:[#allocation11 + $0x3a8] sm:$0xff]
    %v4166 = vld [vmem:[#allocation11 + $0x3b0] sm:$0xff]
    %v4167 = vld [vmem:[#allocation11 + $0x3b8] sm:$0xff]
    %v4168 = vld [vmem:[#allocation11 + $0x3c0] sm:$0xff]
    %v4169 = vld [vmem:[#allocation11 + $0x3c8] sm:$0xff]
    %v4170 = vld [vmem:[#allocation11 + $0x3d0] sm:$0xff]
    %v4171 = vld [vmem:[#allocation11 + $0x3d8] sm:$0xff]
    %v4172 = vld [vmem:[#allocation11 + $0x3e0] sm:$0xff]
    %v4173 = vld [vmem:[#allocation11 + $0x3e8] sm:$0xff]
    %v4174 = vld [vmem:[#allocation11 + $0x3f0] sm:$0xff]
    %v4175 = vld [vmem:[#allocation11 + $0x3f8] sm:$0xff]
    %v4176 = vperm.slane %v144, 5
    %v4177 = vperm.slane %v145, 5
    %v4178 = vperm.slane %v146, 5
    %v4179 = vperm.slane %v147, 5
    %v4308 = vunpack.c.l.b16 %v4048
    %v4309 = vunpack.c.h.b16 %v4048
    %v4310 = vunpack.c.l.b16 %v4049
    %v4311 = vunpack.c.h.b16 %v4049
    %v4312 = vunpack.c.l.b16 %v4050
    %v4313 = vunpack.c.h.b16 %v4050
    %v4314 = vunpack.c.l.b16 %v4051
    %v4315 = vunpack.c.h.b16 %v4051
    %v4316 = vunpack.c.l.b16 %v4052
    %v4317 = vunpack.c.h.b16 %v4052
    %v4318 = vunpack.c.l.b16 %v4053
    %v4319 = vunpack.c.h.b16 %v4053
    %v4320 = vunpack.c.l.b16 %v4054
    %v4321 = vunpack.c.h.b16 %v4054
    %v4322 = vunpack.c.l.b16 %v4055
    %v4323 = vunpack.c.h.b16 %v4055
    %v4324 = vunpack.c.l.b16 %v4056
    %v4325 = vunpack.c.h.b16 %v4056
    %v4326 = vunpack.c.l.b16 %v4057
    %v4327 = vunpack.c.h.b16 %v4057
    %v4328 = vunpack.c.l.b16 %v4058
    %v4329 = vunpack.c.h.b16 %v4058
    %v4330 = vunpack.c.l.b16 %v4059
    %v4331 = vunpack.c.h.b16 %v4059
    %v4332 = vunpack.c.l.b16 %v4060
    %v4333 = vunpack.c.h.b16 %v4060
    %v4334 = vunpack.c.l.b16 %v4061
    %v4335 = vunpack.c.h.b16 %v4061
    %v4336 = vunpack.c.l.b16 %v4062
    %v4337 = vunpack.c.h.b16 %v4062
    %v4338 = vunpack.c.l.b16 %v4063
    %v4339 = vunpack.c.h.b16 %v4063
    %v4340 = vunpack.c.l.b16 %v4064
    %v4341 = vunpack.c.h.b16 %v4064
    %v4342 = vunpack.c.l.b16 %v4065
    %v4343 = vunpack.c.h.b16 %v4065
    %v4344 = vunpack.c.l.b16 %v4066
    %v4345 = vunpack.c.h.b16 %v4066
    %v4346 = vunpack.c.l.b16 %v4067
    %v4347 = vunpack.c.h.b16 %v4067
    %v4348 = vunpack.c.l.b16 %v4068
    %v4349 = vunpack.c.h.b16 %v4068
    %v4350 = vunpack.c.l.b16 %v4069
    %v4351 = vunpack.c.h.b16 %v4069
    %v4352 = vunpack.c.l.b16 %v4070
    %v4353 = vunpack.c.h.b16 %v4070
    %v4354 = vunpack.c.l.b16 %v4071
    %v4355 = vunpack.c.h.b16 %v4071
    %v4356 = vunpack.c.l.b16 %v4072
    %v4357 = vunpack.c.h.b16 %v4072
    %v4358 = vunpack.c.l.b16 %v4073
    %v4359 = vunpack.c.h.b16 %v4073
    %v4360 = vunpack.c.l.b16 %v4074
    %v4361 = vunpack.c.h.b16 %v4074
    %v4362 = vunpack.c.l.b16 %v4075
    %v4363 = vunpack.c.h.b16 %v4075
    %v4364 = vunpack.c.l.b16 %v4076
    %v4365 = vunpack.c.h.b16 %v4076
    %v4366 = vunpack.c.l.b16 %v4077
    %v4367 = vunpack.c.h.b16 %v4077
    %v4368 = vunpack.c.l.b16 %v4078
    %v4369 = vunpack.c.h.b16 %v4078
    %v4370 = vunpack.c.l.b16 %v4079
    %v4371 = vunpack.c.h.b16 %v4079
    %v4372 = vunpack.c.l.b16 %v4080
    %v4373 = vunpack.c.h.b16 %v4080
    %v4374 = vunpack.c.l.b16 %v4081
    %v4375 = vunpack.c.h.b16 %v4081
    %v4376 = vunpack.c.l.b16 %v4082
    %v4377 = vunpack.c.h.b16 %v4082
    %v4378 = vunpack.c.l.b16 %v4083
    %v4379 = vunpack.c.h.b16 %v4083
    %v4380 = vunpack.c.l.b16 %v4084
    %v4381 = vunpack.c.h.b16 %v4084
    %v4382 = vunpack.c.l.b16 %v4085
    %v4383 = vunpack.c.h.b16 %v4085
    %v4384 = vunpack.c.l.b16 %v4086
    %v4385 = vunpack.c.h.b16 %v4086
    %v4386 = vunpack.c.l.b16 %v4087
    %v4387 = vunpack.c.h.b16 %v4087
    %v4388 = vunpack.c.l.b16 %v4088
    %v4389 = vunpack.c.h.b16 %v4088
    %v4390 = vunpack.c.l.b16 %v4089
    %v4391 = vunpack.c.h.b16 %v4089
    %v4392 = vunpack.c.l.b16 %v4090
    %v4393 = vunpack.c.h.b16 %v4090
    %v4394 = vunpack.c.l.b16 %v4091
    %v4395 = vunpack.c.h.b16 %v4091
    %v4396 = vunpack.c.l.b16 %v4092
    %v4397 = vunpack.c.h.b16 %v4092
    %v4398 = vunpack.c.l.b16 %v4093
    %v4399 = vunpack.c.h.b16 %v4093
    %v4400 = vunpack.c.l.b16 %v4094
    %v4401 = vunpack.c.h.b16 %v4094
    %v4402 = vunpack.c.l.b16 %v4095
    %v4403 = vunpack.c.h.b16 %v4095
    %v4404 = vunpack.c.l.b16 %v4096
    %v4405 = vunpack.c.h.b16 %v4096
    %v4406 = vunpack.c.l.b16 %v4097
    %v4407 = vunpack.c.h.b16 %v4097
    %v4408 = vunpack.c.l.b16 %v4098
    %v4409 = vunpack.c.h.b16 %v4098
    %v4410 = vunpack.c.l.b16 %v4099
    %v4411 = vunpack.c.h.b16 %v4099
    %v4412 = vunpack.c.l.b16 %v4100
    %v4413 = vunpack.c.h.b16 %v4100
    %v4414 = vunpack.c.l.b16 %v4101
    %v4415 = vunpack.c.h.b16 %v4101
    %v4416 = vunpack.c.l.b16 %v4102
    %v4417 = vunpack.c.h.b16 %v4102
    %v4418 = vunpack.c.l.b16 %v4103
    %v4419 = vunpack.c.h.b16 %v4103
    %v4420 = vunpack.c.l.b16 %v4104
    %v4421 = vunpack.c.h.b16 %v4104
    %v4422 = vunpack.c.l.b16 %v4105
    %v4423 = vunpack.c.h.b16 %v4105
    %v4424 = vunpack.c.l.b16 %v4106
    %v4425 = vunpack.c.h.b16 %v4106
    %v4426 = vunpack.c.l.b16 %v4107
    %v4427 = vunpack.c.h.b16 %v4107
    %v4428 = vunpack.c.l.b16 %v4108
    %v4429 = vunpack.c.h.b16 %v4108
    %v4430 = vunpack.c.l.b16 %v4109
    %v4431 = vunpack.c.h.b16 %v4109
    %v4432 = vunpack.c.l.b16 %v4110
    %v4433 = vunpack.c.h.b16 %v4110
    %v4434 = vunpack.c.l.b16 %v4111
    %v4435 = vunpack.c.h.b16 %v4111
    %v4436 = vunpack.c.l.b16 %v4112
    %v4437 = vunpack.c.h.b16 %v4112
    %v4438 = vunpack.c.l.b16 %v4113
    %v4439 = vunpack.c.h.b16 %v4113
    %v4440 = vunpack.c.l.b16 %v4114
    %v4441 = vunpack.c.h.b16 %v4114
    %v4442 = vunpack.c.l.b16 %v4115
    %v4443 = vunpack.c.h.b16 %v4115
    %v4444 = vunpack.c.l.b16 %v4116
    %v4445 = vunpack.c.h.b16 %v4116
    %v4446 = vunpack.c.l.b16 %v4117
    %v4447 = vunpack.c.h.b16 %v4117
    %v4448 = vunpack.c.l.b16 %v4118
    %v4449 = vunpack.c.h.b16 %v4118
    %v4450 = vunpack.c.l.b16 %v4119
    %v4451 = vunpack.c.h.b16 %v4119
    %v4452 = vunpack.c.l.b16 %v4120
    %v4453 = vunpack.c.h.b16 %v4120
    %v4454 = vunpack.c.l.b16 %v4121
    %v4455 = vunpack.c.h.b16 %v4121
    %v4456 = vunpack.c.l.b16 %v4122
    %v4457 = vunpack.c.h.b16 %v4122
    %v4458 = vunpack.c.l.b16 %v4123
    %v4459 = vunpack.c.h.b16 %v4123
    %v4460 = vunpack.c.l.b16 %v4124
    %v4461 = vunpack.c.h.b16 %v4124
    %v4462 = vunpack.c.l.b16 %v4125
    %v4463 = vunpack.c.h.b16 %v4125
    %v4464 = vunpack.c.l.b16 %v4126
    %v4465 = vunpack.c.h.b16 %v4126
    %v4466 = vunpack.c.l.b16 %v4127
    %v4467 = vunpack.c.h.b16 %v4127
    %v4468 = vunpack.c.l.b16 %v4128
    %v4469 = vunpack.c.h.b16 %v4128
    %v4470 = vunpack.c.l.b16 %v4129
    %v4471 = vunpack.c.h.b16 %v4129
    %v4472 = vunpack.c.l.b16 %v4130
    %v4473 = vunpack.c.h.b16 %v4130
    %v4474 = vunpack.c.l.b16 %v4131
    %v4475 = vunpack.c.h.b16 %v4131
    %v4476 = vunpack.c.l.b16 %v4132
    %v4477 = vunpack.c.h.b16 %v4132
    %v4478 = vunpack.c.l.b16 %v4133
    %v4479 = vunpack.c.h.b16 %v4133
    %v4480 = vunpack.c.l.b16 %v4134
    %v4481 = vunpack.c.h.b16 %v4134
    %v4482 = vunpack.c.l.b16 %v4135
    %v4483 = vunpack.c.h.b16 %v4135
    %v4484 = vunpack.c.l.b16 %v4136
    %v4485 = vunpack.c.h.b16 %v4136
    %v4486 = vunpack.c.l.b16 %v4137
    %v4487 = vunpack.c.h.b16 %v4137
    %v4488 = vunpack.c.l.b16 %v4138
    %v4489 = vunpack.c.h.b16 %v4138
    %v4490 = vunpack.c.l.b16 %v4139
    %v4491 = vunpack.c.h.b16 %v4139
    %v4492 = vunpack.c.l.b16 %v4140
    %v4493 = vunpack.c.h.b16 %v4140
    %v4494 = vunpack.c.l.b16 %v4141
    %v4495 = vunpack.c.h.b16 %v4141
    %v4496 = vunpack.c.l.b16 %v4142
    %v4497 = vunpack.c.h.b16 %v4142
    %v4498 = vunpack.c.l.b16 %v4143
    %v4499 = vunpack.c.h.b16 %v4143
    %v4500 = vunpack.c.l.b16 %v4144
    %v4501 = vunpack.c.h.b16 %v4144
    %v4502 = vunpack.c.l.b16 %v4145
    %v4503 = vunpack.c.h.b16 %v4145
    %v4504 = vunpack.c.l.b16 %v4146
    %v4505 = vunpack.c.h.b16 %v4146
    %v4506 = vunpack.c.l.b16 %v4147
    %v4507 = vunpack.c.h.b16 %v4147
    %v4508 = vunpack.c.l.b16 %v4148
    %v4509 = vunpack.c.h.b16 %v4148
    %v4510 = vunpack.c.l.b16 %v4149
    %v4511 = vunpack.c.h.b16 %v4149
    %v4512 = vunpack.c.l.b16 %v4150
    %v4513 = vunpack.c.h.b16 %v4150
    %v4514 = vunpack.c.l.b16 %v4151
    %v4515 = vunpack.c.h.b16 %v4151
    %v4516 = vunpack.c.l.b16 %v4152
    %v4517 = vunpack.c.h.b16 %v4152
    %v4518 = vunpack.c.l.b16 %v4153
    %v4519 = vunpack.c.h.b16 %v4153
    %v4520 = vunpack.c.l.b16 %v4154
    %v4521 = vunpack.c.h.b16 %v4154
    %v4522 = vunpack.c.l.b16 %v4155
    %v4523 = vunpack.c.h.b16 %v4155
    %v4524 = vunpack.c.l.b16 %v4156
    %v4525 = vunpack.c.h.b16 %v4156
    %v4526 = vunpack.c.l.b16 %v4157
    %v4527 = vunpack.c.h.b16 %v4157
    %v4528 = vunpack.c.l.b16 %v4158
    %v4529 = vunpack.c.h.b16 %v4158
    %v4530 = vunpack.c.l.b16 %v4159
    %v4531 = vunpack.c.h.b16 %v4159
    %v4532 = vunpack.c.l.b16 %v4160
    %v4533 = vunpack.c.h.b16 %v4160
    %v4534 = vunpack.c.l.b16 %v4161
    %v4535 = vunpack.c.h.b16 %v4161
    %v4536 = vunpack.c.l.b16 %v4162
    %v4537 = vunpack.c.h.b16 %v4162
    %v4538 = vunpack.c.l.b16 %v4163
    %v4539 = vunpack.c.h.b16 %v4163
    %v4540 = vunpack.c.l.b16 %v4164
    %v4541 = vunpack.c.h.b16 %v4164
    %v4542 = vunpack.c.l.b16 %v4165
    %v4543 = vunpack.c.h.b16 %v4165
    %v4544 = vunpack.c.l.b16 %v4166
    %v4545 = vunpack.c.h.b16 %v4166
    %v4546 = vunpack.c.l.b16 %v4167
    %v4547 = vunpack.c.h.b16 %v4167
    %v4548 = vunpack.c.l.b16 %v4168
    %v4549 = vunpack.c.h.b16 %v4168
    %v4550 = vunpack.c.l.b16 %v4169
    %v4551 = vunpack.c.h.b16 %v4169
    %v4552 = vunpack.c.l.b16 %v4170
    %v4553 = vunpack.c.h.b16 %v4170
    %v4554 = vunpack.c.l.b16 %v4171
    %v4555 = vunpack.c.h.b16 %v4171
    %v4556 = vunpack.c.l.b16 %v4172
    %v4557 = vunpack.c.h.b16 %v4172
    %v4558 = vunpack.c.l.b16 %v4173
    %v4559 = vunpack.c.h.b16 %v4173
    %v4560 = vunpack.c.l.b16 %v4174
    %v4561 = vunpack.c.h.b16 %v4174
    %v4562 = vunpack.c.l.b16 %v4175
    %v4563 = vunpack.c.h.b16 %v4175
    %v4564 = vpack.c.b16 %v4312, %v4308
    %v4565 = vpack.c.b16 %v4313, %v4309
    %v4566 = vpack.c.b16 %v4314, %v4310
    %v4567 = vpack.c.b16 %v4315, %v4311
    %v4568 = vpack.c.b16 %v4320, %v4316
    %v4569 = vpack.c.b16 %v4321, %v4317
    %v4570 = vpack.c.b16 %v4322, %v4318
    %v4571 = vpack.c.b16 %v4323, %v4319
    %v4572 = vpack.c.b16 %v4328, %v4324
    %v4573 = vpack.c.b16 %v4329, %v4325
    %v4574 = vpack.c.b16 %v4330, %v4326
    %v4575 = vpack.c.b16 %v4331, %v4327
    %v4576 = vpack.c.b16 %v4336, %v4332
    %v4577 = vpack.c.b16 %v4337, %v4333
    %v4578 = vpack.c.b16 %v4338, %v4334
    %v4579 = vpack.c.b16 %v4339, %v4335
    %v4580 = vpack.c.b16 %v4344, %v4340
    %v4581 = vpack.c.b16 %v4345, %v4341
    %v4582 = vpack.c.b16 %v4346, %v4342
    %v4583 = vpack.c.b16 %v4347, %v4343
    %v4584 = vpack.c.b16 %v4352, %v4348
    %v4585 = vpack.c.b16 %v4353, %v4349
    %v4586 = vpack.c.b16 %v4354, %v4350
    %v4587 = vpack.c.b16 %v4355, %v4351
    %v4588 = vpack.c.b16 %v4360, %v4356
    %v4589 = vpack.c.b16 %v4361, %v4357
    %v4590 = vpack.c.b16 %v4362, %v4358
    %v4591 = vpack.c.b16 %v4363, %v4359
    %v4592 = vpack.c.b16 %v4368, %v4364
    %v4593 = vpack.c.b16 %v4369, %v4365
    %v4594 = vpack.c.b16 %v4370, %v4366
    %v4595 = vpack.c.b16 %v4371, %v4367
    %v4596 = vpack.c.b16 %v4376, %v4372
    %v4597 = vpack.c.b16 %v4377, %v4373
    %v4598 = vpack.c.b16 %v4378, %v4374
    %v4599 = vpack.c.b16 %v4379, %v4375
    %v4600 = vpack.c.b16 %v4384, %v4380
    %v4601 = vpack.c.b16 %v4385, %v4381
    %v4602 = vpack.c.b16 %v4386, %v4382
    %v4603 = vpack.c.b16 %v4387, %v4383
    %v4604 = vpack.c.b16 %v4392, %v4388
    %v4605 = vpack.c.b16 %v4393, %v4389
    %v4606 = vpack.c.b16 %v4394, %v4390
    %v4607 = vpack.c.b16 %v4395, %v4391
    %v4608 = vpack.c.b16 %v4400, %v4396
    %v4609 = vpack.c.b16 %v4401, %v4397
    %v4610 = vpack.c.b16 %v4402, %v4398
    %v4611 = vpack.c.b16 %v4403, %v4399
    %v4612 = vpack.c.b16 %v4408, %v4404
    %v4613 = vpack.c.b16 %v4409, %v4405
    %v4614 = vpack.c.b16 %v4410, %v4406
    %v4615 = vpack.c.b16 %v4411, %v4407
    %v4616 = vpack.c.b16 %v4416, %v4412
    %v4617 = vpack.c.b16 %v4417, %v4413
    %v4618 = vpack.c.b16 %v4418, %v4414
    %v4619 = vpack.c.b16 %v4419, %v4415
    %v4620 = vpack.c.b16 %v4424, %v4420
    %v4621 = vpack.c.b16 %v4425, %v4421
    %v4622 = vpack.c.b16 %v4426, %v4422
    %v4623 = vpack.c.b16 %v4427, %v4423
    %v4624 = vpack.c.b16 %v4432, %v4428
    %v4625 = vpack.c.b16 %v4433, %v4429
    %v4626 = vpack.c.b16 %v4434, %v4430
    %v4627 = vpack.c.b16 %v4435, %v4431
    %v4628 = vpack.c.b16 %v4440, %v4436
    %v4629 = vpack.c.b16 %v4441, %v4437
    %v4630 = vpack.c.b16 %v4442, %v4438
    %v4631 = vpack.c.b16 %v4443, %v4439
    %v4632 = vpack.c.b16 %v4448, %v4444
    %v4633 = vpack.c.b16 %v4449, %v4445
    %v4634 = vpack.c.b16 %v4450, %v4446
    %v4635 = vpack.c.b16 %v4451, %v4447
    %v4636 = vpack.c.b16 %v4456, %v4452
    %v4637 = vpack.c.b16 %v4457, %v4453
    %v4638 = vpack.c.b16 %v4458, %v4454
    %v4639 = vpack.c.b16 %v4459, %v4455
    %v4640 = vpack.c.b16 %v4464, %v4460
    %v4641 = vpack.c.b16 %v4465, %v4461
    %v4642 = vpack.c.b16 %v4466, %v4462
    %v4643 = vpack.c.b16 %v4467, %v4463
    %v4644 = vpack.c.b16 %v4472, %v4468
    %v4645 = vpack.c.b16 %v4473, %v4469
    %v4646 = vpack.c.b16 %v4474, %v4470
    %v4647 = vpack.c.b16 %v4475, %v4471
    %v4648 = vpack.c.b16 %v4480, %v4476
    %v4649 = vpack.c.b16 %v4481, %v4477
    %v4650 = vpack.c.b16 %v4482, %v4478
    %v4651 = vpack.c.b16 %v4483, %v4479
    %v4652 = vpack.c.b16 %v4488, %v4484
    %v4653 = vpack.c.b16 %v4489, %v4485
    %v4654 = vpack.c.b16 %v4490, %v4486
    %v4655 = vpack.c.b16 %v4491, %v4487
    %v4656 = vpack.c.b16 %v4496, %v4492
    %v4657 = vpack.c.b16 %v4497, %v4493
    %v4658 = vpack.c.b16 %v4498, %v4494
    %v4659 = vpack.c.b16 %v4499, %v4495
    %v4660 = vpack.c.b16 %v4504, %v4500
    %v4661 = vpack.c.b16 %v4505, %v4501
    %v4662 = vpack.c.b16 %v4506, %v4502
    %v4663 = vpack.c.b16 %v4507, %v4503
    %v4664 = vpack.c.b16 %v4512, %v4508
    %v4665 = vpack.c.b16 %v4513, %v4509
    %v4666 = vpack.c.b16 %v4514, %v4510
    %v4667 = vpack.c.b16 %v4515, %v4511
    %v4668 = vpack.c.b16 %v4520, %v4516
    %v4669 = vpack.c.b16 %v4521, %v4517
    %v4670 = vpack.c.b16 %v4522, %v4518
    %v4671 = vpack.c.b16 %v4523, %v4519
    %v4672 = vpack.c.b16 %v4528, %v4524
    %v4673 = vpack.c.b16 %v4529, %v4525
    %v4674 = vpack.c.b16 %v4530, %v4526
    %v4675 = vpack.c.b16 %v4531, %v4527
    %v4676 = vpack.c.b16 %v4536, %v4532
    %v4677 = vpack.c.b16 %v4537, %v4533
    %v4678 = vpack.c.b16 %v4538, %v4534
    %v4679 = vpack.c.b16 %v4539, %v4535
    %v4680 = vpack.c.b16 %v4544, %v4540
    %v4681 = vpack.c.b16 %v4545, %v4541
    %v4682 = vpack.c.b16 %v4546, %v4542
    %v4683 = vpack.c.b16 %v4547, %v4543
    %v4684 = vpack.c.b16 %v4552, %v4548
    %v4685 = vpack.c.b16 %v4553, %v4549
    %v4686 = vpack.c.b16 %v4554, %v4550
    %v4687 = vpack.c.b16 %v4555, %v4551
    %v4688 = vpack.c.b16 %v4560, %v4556
    %v4689 = vpack.c.b16 %v4561, %v4557
    %v4690 = vpack.c.b16 %v4562, %v4558
    %v4691 = vpack.c.b16 %v4563, %v4559
    %4820 = vmatpush.bf16.msra.mxu0 %v4592
    %4821 = vmatpush.bf16.msra.mxu0 %v4588
    %4822 = vmatpush.bf16.msra.mxu0 %v4584
    %4823 = vmatpush.bf16.msra.mxu0 %v4580
    %4824 = vmatpush.bf16.msra.mxu0 %v4576
    %4825 = vmatpush.bf16.msra.mxu0 %v4572
    %4826 = vmatpush.bf16.msra.mxu0 %v4568
    %4827 = vmatpush.bf16.msra.mxu0 %v4564
    %4828 = vmatmul.bf16.gmra.mxu0 %v4044
    %v4829 = vpop.f32.mrf.mxu0
    %v4830 = vadd.f32 %v4176, %v4829
    %v4831 = vpop.f32.mrf.mxu0
    %v4832 = vadd.f32 %v4176, %v4831
    %4833 = vdwg.mxu0
    %4834 = vmatpush.bf16.msra.mxu0 %v4624
    %4835 = vmatpush.bf16.msra.mxu0 %v4620
    %4836 = vmatpush.bf16.msra.mxu0 %v4616
    %4837 = vmatpush.bf16.msra.mxu0 %v4612
    %4838 = vmatpush.bf16.msra.mxu0 %v4608
    %4839 = vmatpush.bf16.msra.mxu0 %v4604
    %4840 = vmatpush.bf16.msra.mxu0 %v4600
    %4841 = vmatpush.bf16.msra.mxu0 %v4596
    %4842 = vmatmul.bf16.gmra.mxu0 %v4045
    %v4843 = vpop.f32.mrf.mxu0
    %v4844 = vadd.f32 %v4830, %v4843
    %v4845 = vpop.f32.mrf.mxu0
    %v4846 = vadd.f32 %v4832, %v4845
    %4847 = vdwg.mxu0
    %4848 = vmatpush.bf16.msra.mxu0 %v4656
    %4849 = vmatpush.bf16.msra.mxu0 %v4652
    %4850 = vmatpush.bf16.msra.mxu0 %v4648
    %4851 = vmatpush.bf16.msra.mxu0 %v4644
    %4852 = vmatpush.bf16.msra.mxu0 %v4640
    %4853 = vmatpush.bf16.msra.mxu0 %v4636
    %4854 = vmatpush.bf16.msra.mxu0 %v4632
    %4855 = vmatpush.bf16.msra.mxu0 %v4628
    %4856 = vmatmul.bf16.gmra.mxu0 %v4046
    %v4857 = vpop.f32.mrf.mxu0
    %v4858 = vadd.f32 %v4844, %v4857
    %v4859 = vpop.f32.mrf.mxu0
    %v4860 = vadd.f32 %v4846, %v4859
    %4861 = vdwg.mxu0
    %4862 = vmatpush.bf16.msra.mxu0 %v4688
    %4863 = vmatpush.bf16.msra.mxu0 %v4684
    %4864 = vmatpush.bf16.msra.mxu0 %v4680
    %4865 = vmatpush.bf16.msra.mxu0 %v4676
    %4866 = vmatpush.bf16.msra.mxu0 %v4672
    %4867 = vmatpush.bf16.msra.mxu0 %v4668
    %4868 = vmatpush.bf16.msra.mxu0 %v4664
    %4869 = vmatpush.bf16.msra.mxu0 %v4660
    %4870 = vmatmul.bf16.gmra.mxu0 %v4047
    %v4871 = vpop.f32.mrf.mxu0
    %v4872 = vadd.f32 %v4858, %v4871
    %v4873 = vpop.f32.mrf.mxu0
    %v4874 = vadd.f32 %v4860, %v4873
    %4875 = vdwg.mxu0
    %4876 = vmatpush.bf16.msra.mxu0 %v4593
    %4877 = vmatpush.bf16.msra.mxu0 %v4589
    %4878 = vmatpush.bf16.msra.mxu0 %v4585
    %4879 = vmatpush.bf16.msra.mxu0 %v4581
    %4880 = vmatpush.bf16.msra.mxu0 %v4577
    %4881 = vmatpush.bf16.msra.mxu0 %v4573
    %4882 = vmatpush.bf16.msra.mxu0 %v4569
    %4883 = vmatpush.bf16.msra.mxu0 %v4565
    %4884 = vmatmul.bf16.gmra.mxu0 %v4044
    %v4885 = vpop.f32.mrf.mxu0
    %v4886 = vadd.f32 %v4177, %v4885
    %v4887 = vpop.f32.mrf.mxu0
    %v4888 = vadd.f32 %v4177, %v4887
    %4889 = vdwg.mxu0
    %4890 = vmatpush.bf16.msra.mxu0 %v4625
    %4891 = vmatpush.bf16.msra.mxu0 %v4621
    %4892 = vmatpush.bf16.msra.mxu0 %v4617
    %4893 = vmatpush.bf16.msra.mxu0 %v4613
    %4894 = vmatpush.bf16.msra.mxu0 %v4609
    %4895 = vmatpush.bf16.msra.mxu0 %v4605
    %4896 = vmatpush.bf16.msra.mxu0 %v4601
    %4897 = vmatpush.bf16.msra.mxu0 %v4597
    %4898 = vmatmul.bf16.gmra.mxu0 %v4045
    %v4899 = vpop.f32.mrf.mxu0
    %v4900 = vadd.f32 %v4886, %v4899
    %v4901 = vpop.f32.mrf.mxu0
    %v4902 = vadd.f32 %v4888, %v4901
    %4903 = vdwg.mxu0
    %4904 = vmatpush.bf16.msra.mxu0 %v4657
    %4905 = vmatpush.bf16.msra.mxu0 %v4653
    %4906 = vmatpush.bf16.msra.mxu0 %v4649
    %4907 = vmatpush.bf16.msra.mxu0 %v4645
    %4908 = vmatpush.bf16.msra.mxu0 %v4641
    %4909 = vmatpush.bf16.msra.mxu0 %v4637
    %4910 = vmatpush.bf16.msra.mxu0 %v4633
    %4911 = vmatpush.bf16.msra.mxu0 %v4629
    %4912 = vmatmul.bf16.gmra.mxu0 %v4046
    %v4913 = vpop.f32.mrf.mxu0
    %v4914 = vadd.f32 %v4900, %v4913
    %v4915 = vpop.f32.mrf.mxu0
    %v4916 = vadd.f32 %v4902, %v4915
    %4917 = vdwg.mxu0
    %4918 = vmatpush.bf16.msra.mxu0 %v4689
    %4919 = vmatpush.bf16.msra.mxu0 %v4685
    %4920 = vmatpush.bf16.msra.mxu0 %v4681
    %4921 = vmatpush.bf16.msra.mxu0 %v4677
    %4922 = vmatpush.bf16.msra.mxu0 %v4673
    %4923 = vmatpush.bf16.msra.mxu0 %v4669
    %4924 = vmatpush.bf16.msra.mxu0 %v4665
    %4925 = vmatpush.bf16.msra.mxu0 %v4661
    %4926 = vmatmul.bf16.gmra.mxu0 %v4047
    %v4927 = vpop.f32.mrf.mxu0
    %v4928 = vadd.f32 %v4914, %v4927
    %v4929 = vpop.f32.mrf.mxu0
    %v4930 = vadd.f32 %v4916, %v4929
    %4931 = vdwg.mxu0
    %4932 = vmatpush.bf16.msra.mxu0 %v4594
    %4933 = vmatpush.bf16.msra.mxu0 %v4590
    %4934 = vmatpush.bf16.msra.mxu0 %v4586
    %4935 = vmatpush.bf16.msra.mxu0 %v4582
    %4936 = vmatpush.bf16.msra.mxu0 %v4578
    %4937 = vmatpush.bf16.msra.mxu0 %v4574
    %4938 = vmatpush.bf16.msra.mxu0 %v4570
    %4939 = vmatpush.bf16.msra.mxu0 %v4566
    %4940 = vmatmul.bf16.gmra.mxu0 %v4044
    %v4941 = vpop.f32.mrf.mxu0
    %v4942 = vadd.f32 %v4178, %v4941
    %v4943 = vpop.f32.mrf.mxu0
    %v4944 = vadd.f32 %v4178, %v4943
    %4945 = vdwg.mxu0
    %4946 = vmatpush.bf16.msra.mxu0 %v4626
    %4947 = vmatpush.bf16.msra.mxu0 %v4622
    %4948 = vmatpush.bf16.msra.mxu0 %v4618
    %4949 = vmatpush.bf16.msra.mxu0 %v4614
    %4950 = vmatpush.bf16.msra.mxu0 %v4610
    %4951 = vmatpush.bf16.msra.mxu0 %v4606
    %4952 = vmatpush.bf16.msra.mxu0 %v4602
    %4953 = vmatpush.bf16.msra.mxu0 %v4598
    %4954 = vmatmul.bf16.gmra.mxu0 %v4045
    %v4955 = vpop.f32.mrf.mxu0
    %v4956 = vadd.f32 %v4942, %v4955
    %v4957 = vpop.f32.mrf.mxu0
    %v4958 = vadd.f32 %v4944, %v4957
    %4959 = vdwg.mxu0
    %4960 = vmatpush.bf16.msra.mxu0 %v4658
    %4961 = vmatpush.bf16.msra.mxu0 %v4654
    %4962 = vmatpush.bf16.msra.mxu0 %v4650
    %4963 = vmatpush.bf16.msra.mxu0 %v4646
    %4964 = vmatpush.bf16.msra.mxu0 %v4642
    %4965 = vmatpush.bf16.msra.mxu0 %v4638
    %4966 = vmatpush.bf16.msra.mxu0 %v4634
    %4967 = vmatpush.bf16.msra.mxu0 %v4630
    %4968 = vmatmul.bf16.gmra.mxu0 %v4046
    %v4969 = vpop.f32.mrf.mxu0
    %v4970 = vadd.f32 %v4956, %v4969
    %v4971 = vpop.f32.mrf.mxu0
    %v4972 = vadd.f32 %v4958, %v4971
    %4973 = vdwg.mxu0
    %4974 = vmatpush.bf16.msra.mxu0 %v4690
    %4975 = vmatpush.bf16.msra.mxu0 %v4686
    %4976 = vmatpush.bf16.msra.mxu0 %v4682
    %4977 = vmatpush.bf16.msra.mxu0 %v4678
    %4978 = vmatpush.bf16.msra.mxu0 %v4674
    %4979 = vmatpush.bf16.msra.mxu0 %v4670
    %4980 = vmatpush.bf16.msra.mxu0 %v4666
    %4981 = vmatpush.bf16.msra.mxu0 %v4662
    %4982 = vmatmul.bf16.gmra.mxu0 %v4047
    %v4983 = vpop.f32.mrf.mxu0
    %v4984 = vadd.f32 %v4970, %v4983
    %v4985 = vpop.f32.mrf.mxu0
    %v4986 = vadd.f32 %v4972, %v4985
    %4987 = vdwg.mxu0
    %4988 = vmatpush.bf16.msra.mxu0 %v4595
    %4989 = vmatpush.bf16.msra.mxu0 %v4591
    %4990 = vmatpush.bf16.msra.mxu0 %v4587
    %4991 = vmatpush.bf16.msra.mxu0 %v4583
    %4992 = vmatpush.bf16.msra.mxu0 %v4579
    %4993 = vmatpush.bf16.msra.mxu0 %v4575
    %4994 = vmatpush.bf16.msra.mxu0 %v4571
    %4995 = vmatpush.bf16.msra.mxu0 %v4567
    %4996 = vmatmul.bf16.gmra.mxu0 %v4044
    %v4997 = vpop.f32.mrf.mxu0
    %v4998 = vadd.f32 %v4179, %v4997
    %v4999 = vpop.f32.mrf.mxu0
    %v5000 = vadd.f32 %v4179, %v4999
    %5001 = vdwg.mxu0
    %5002 = vmatpush.bf16.msra.mxu0 %v4627
    %5003 = vmatpush.bf16.msra.mxu0 %v4623
    %5004 = vmatpush.bf16.msra.mxu0 %v4619
    %5005 = vmatpush.bf16.msra.mxu0 %v4615
    %5006 = vmatpush.bf16.msra.mxu0 %v4611
    %5007 = vmatpush.bf16.msra.mxu0 %v4607
    %5008 = vmatpush.bf16.msra.mxu0 %v4603
    %5009 = vmatpush.bf16.msra.mxu0 %v4599
    %5010 = vmatmul.bf16.gmra.mxu0 %v4045
    %v5011 = vpop.f32.mrf.mxu0
    %v5012 = vadd.f32 %v4998, %v5011
    %v5013 = vpop.f32.mrf.mxu0
    %v5014 = vadd.f32 %v5000, %v5013
    %5015 = vdwg.mxu0
    %5016 = vmatpush.bf16.msra.mxu0 %v4659
    %5017 = vmatpush.bf16.msra.mxu0 %v4655
    %5018 = vmatpush.bf16.msra.mxu0 %v4651
    %5019 = vmatpush.bf16.msra.mxu0 %v4647
    %5020 = vmatpush.bf16.msra.mxu0 %v4643
    %5021 = vmatpush.bf16.msra.mxu0 %v4639
    %5022 = vmatpush.bf16.msra.mxu0 %v4635
    %5023 = vmatpush.bf16.msra.mxu0 %v4631
    %5024 = vmatmul.bf16.gmra.mxu0 %v4046
    %v5025 = vpop.f32.mrf.mxu0
    %v5026 = vadd.f32 %v5012, %v5025
    %v5027 = vpop.f32.mrf.mxu0
    %v5028 = vadd.f32 %v5014, %v5027
    %5029 = vdwg.mxu0
    %5030 = vmatpush.bf16.msra.mxu0 %v4691
    %5031 = vmatpush.bf16.msra.mxu0 %v4687
    %5032 = vmatpush.bf16.msra.mxu0 %v4683
    %5033 = vmatpush.bf16.msra.mxu0 %v4679
    %5034 = vmatpush.bf16.msra.mxu0 %v4675
    %5035 = vmatpush.bf16.msra.mxu0 %v4671
    %5036 = vmatpush.bf16.msra.mxu0 %v4667
    %5037 = vmatpush.bf16.msra.mxu0 %v4663
    %5038 = vmatmul.bf16.gmra.mxu0 %v4047
    %v5039 = vpop.f32.mrf.mxu0
    %v5040 = vadd.f32 %v5026, %v5039
    %v5041 = vpop.f32.mrf.mxu0
    %v5042 = vadd.f32 %v5028, %v5041
    %5043 = vdwg.mxu0
    %v5044 = vmax.f32 %v4872, 0.0
    %v5045 = vmax.f32 %v4928, 0.0
    %v5046 = vmax.f32 %v4984, 0.0
    %v5047 = vmax.f32 %v5040, 0.0
    %v5048 = vmax.f32 %v4874, 0.0
    %v5049 = vmax.f32 %v4930, 0.0
    %v5050 = vmax.f32 %v4986, 0.0
    %v5051 = vmax.f32 %v5042, 0.0
    %5052 = vst [vmem:[#allocation14 + $0x40] sm:$0xff] %v5044
    %5053 = vst [vmem:[#allocation14 + $0x48] sm:$0xff] %v5045
    %5054 = vst [vmem:[#allocation14 + $0x50] sm:$0xff] %v5046
    %5055 = vst [vmem:[#allocation14 + $0x58] sm:$0xff] %v5047
    %5056 = vst [vmem:[#allocation14 + $0xa0] sm:$0xff] %v5048
    %5057 = vst [vmem:[#allocation14 + $0xa8] sm:$0xff] %v5049
    %5058 = vst [vmem:[#allocation14 + $0xb0] sm:$0xff] %v5050
    %5059 = vst [vmem:[#allocation14 + $0xb8] sm:$0xff] %v5051
    // Predicated region
    $region70: #{first_layer.1} parent=1 // pred_check
      _
    $region71: #{first_layer.1} parent=1 // pred_check_branch
      %5061 = sbr.rel (0) target = $region73
    $region72: #{first_layer.1} parent=1 // pred_region
      %5063 = vsyncadd [#allocation4], 1536
      %s5064 = sshll.u32 [#allocation14], 4
      %s5065 = int_to_ptr.vmem [resolvable:$true] %s5064
      %s5066 = sshll.u32 %s10, 4
      %s5067 = int_to_ptr.hbm [resolvable:$true] %s5066
      %5072 = dma.vmem_to_hbm [thread:$0]  %s5065, 1536, %s5067, [#allocation4], 1536, 1536, 96
    $region73: #{first_layer.1} parent=1 // pred_fallthru
      _
    // Predicated region
    $region74: #{first_layer.1} parent=1 // pred_check
      _
    $region75: #{first_layer.1} parent=1 // pred_check_branch
      %5074 = sbr.rel (0) target = $region77
    $region76: #{first_layer.1} parent=1 // pred_region
      %5076 = dma.done [#allocation4], 3072
    $region77: #{first_layer.1} parent=1 // pred_fallthru
      _
    %5077 = vsyncpa [#allocation3], 1
    %5078 = vsyncpa [#allocation6], 1
    %5079 = vsyncpa [#allocation9], 1
    %5080 = vsyncpa [#allocation12], 1
    %5081 = vsyncpa [#allocation4], 1

</llo_original>
